<compile_context>
chip_gen: v7x
topology: tpu7x:2x2x1
jax: 0.10.0
libtpu: 0.0.40
codegen_flags: <defaults>
</compile_context>

<pallas_src>
import functools

import jax
import jax.numpy as jnp
from jax.experimental import pallas as pl
from jax.experimental.pallas import tpu as pltpu

_LANES = 128
_DEF_VMEM_CAP = 64 * 1024 * 1024          # conservative fallback (v7x per-TC VMEM)


# ----------------------------- Pallas kernels -----------------------------

def _conv_bn_stats_kernel(x_ref, w_ref, y_ref, stats_ref, acc_ref, *, kh, kw, th, wo):
    """Fused conv (kh*kw shifted tap matmuls) + BN partial statistics.

    x_ref:     (1, Hp, Wp, Cin_p)      bf16 whole padded image of one batch item
                                       (block index constant over the row-tile
                                       axis -> DMA'd to VMEM once per batch item)
    w_ref:     (kh*kw, Cin_p, Cout_p)  bf16 weights, tap-major
    y_ref:     (1, th, Wo, Cout_p)     bf16 conv output row-tile
    stats_ref: (1, 1, 2, Cout_p)       f32 [sum, sum(y^2)] partials of this tile
    acc_ref:   (th*Wo, Cout_p)         f32 VMEM scratch accumulator
    """
    j = pl.program_id(1)
    r0 = j * th
    cin = x_ref.shape[-1]
    cout = w_ref.shape[-1]

    acc_ref[...] = jnp.zeros_like(acc_ref)
    for di in range(kh):
        # Leading-dim (non-sublane) slice: no relayout.  The dj shifts below are
        # applied to the loaded band, so only 3 band loads per tile instead of 9
        # shifted tile loads.
        band = x_ref[0, pl.ds(r0 + di, th), :, :]             # (th, Wp, Cin_p)
        for dj in range(kw):
            tap = band[:, dj:dj + wo, :].reshape(th * wo, cin)
            # TODO(synk): for Cin_p == 128 on v6e/v7x, fuse 2 taps along the
            # contraction dim (K >= 256) to fill the 256-deep MXU.
            acc_ref[...] += jnp.dot(tap, w_ref[di * kw + dj],
                                    preferred_element_type=jnp.float32)

    acc = acc_ref[...]
    y_ref[...] = acc.reshape(1, th, wo, cout).astype(y_ref.dtype)
    s1 = jnp.sum(acc, axis=0, keepdims=True)
    s2 = jnp.sum(acc * acc, axis=0, keepdims=True)
    stats_ref[...] = jnp.concatenate([s1, s2], axis=0).reshape(1, 1, 2, cout)


def _bn_act_kernel(y_ref, scale_ref, shift_ref, o_ref, *, relu):
    out = y_ref[...].astype(jnp.float32) * scale_ref[...] + shift_ref[...]
    if relu:
        out = jnp.maximum(out, 0.0)
    o_ref[...] = out.astype(o_ref.dtype)


def _bn_add_relu_kernel(y_ref, scale_ref, shift_ref, res_ref, o_ref):
    out = (y_ref[...].astype(jnp.float32) * scale_ref[...] + shift_ref[...]
           + res_ref[...].astype(jnp.float32))
    o_ref[...] = jnp.maximum(out, 0.0).astype(o_ref.dtype)


# ------------------------------ helpers ------------------------------------

def _round_up(v, m):
    return ((v + m - 1) // m) * m


def _vmem_budget():
    """(physical VMEM bytes, working budget bytes) — generation aware."""
    try:
        cap = int(pltpu.get_tpu_info().vmem_capacity_bytes)
    except Exception:                      # interpret mode / older API
        cap = _DEF_VMEM_CAP
    # ~40 MiB on v7x (64 MiB physical), capped at 80 MiB on v5e/v6e (128 MiB).
    return cap, min(cap * 5 // 8, 80 * 1024 * 1024)


def _pick_row_tile(n, ho, wo, coutp, fixed_bytes, budget):
    # Per output row: double-buffered bf16 y tile (2*2 B) + f32 acc scratch (4 B).
    per_row = (2 * 2 + 4) * wo * coutp
    avail = max(budget - fixed_bytes, per_row)
    th = max(1, min(ho, avail // per_row))
    while ho % th:                         # largest divisor of Ho that fits budget
        th -= 1
    if n == 1 and th == ho and ho > 1:
        # Keep >= 2 row tiles so both TensorCores of a v7x chip get work.
        for cand in range(ho // 2, 0, -1):
            if ho % cand == 0:
                th = cand
                break
    # TODO(synk): handle prime/awkward Ho with cdiv + remainder masking instead
    # of falling back towards tiny divisors.
    return th


def _prep_conv_w(w):
    """(KH, KW, Cin, Cout) f32 -> (KH*KW, Cin_p, Cout_p) bf16, lane-dense."""
    kh, kw, ci, co = w.shape
    cip, cop = _round_up(ci, _LANES), _round_up(co, _LANES)
    w = jnp.pad(w, ((0, 0), (0, 0), (0, cip - ci), (0, cop - co)))
    return w.reshape(kh * kw, cip, cop).astype(jnp.bfloat16)


def _pad_vec(v, cp):
    return jnp.pad(v.astype(jnp.float32), (0, cp - v.shape[0]))


def _pad_channels(x, cp):
    return jnp.pad(x, ((0, 0), (0, 0), (0, 0), (0, cp - x.shape[-1])))


def _im2col(x, kh, kw, stride, padding):
    """Wrapper-side patch extraction (only for the strided first conv), in bf16."""
    sh, sw = stride
    x = jnp.pad(x, ((0, 0), (padding, padding), (padding, padding), (0, 0)))
    _, hp, wp, _ = x.shape
    ho = (hp - kh) // sh + 1
    wo = (wp - kw) // sw + 1
    cols = [x[:, i:i + (ho - 1) * sh + 1:sh, j:j + (wo - 1) * sw + 1:sw, :]
            for i in range(kh) for j in range(kw)]
    return jnp.concatenate(cols, axis=-1)          # (N, Ho, Wo, kh*kw*C)


# ------------------------- fused conv + BN stats ----------------------------

def conv_bn_stats(x, w_taps, *, kh, kw, padding):
    """Stride-1 conv fused with BN partial statistics.

    x: (N, H, W, Cin_p) bf16   w_taps: (kh*kw, Cin_p, Cout_p) bf16
    Returns y (N, Ho, Wo, Cout_p) bf16, stats (N, nh, 2, Cout_p) f32, (th, Ho, Wo).
    """
    n, h, w_in, cinp = x.shape
    coutp = w_taps.shape[-1]
    if padding:
        x = jnp.pad(x, ((0, 0), (padding, padding), (padding, padding), (0, 0)))
    hp, wp = h + 2 * padding, w_in + 2 * padding
    ho, wo = hp - kh + 1, wp - kw + 1

    cap, budget = _vmem_budget()
    # VMEM that does not scale with th: double-buffered bf16 image + bf16 weights.
    fixed = 2 * hp * wp * cinp * 2 + 2 * w_taps.size * 2
    th = _pick_row_tile(n, ho, wo, coutp, fixed, budget)
    nh = ho // th
    est = fixed + (2 * 2 + 4) * th * wo * coutp + (1 << 20)
    vmem_limit = int(min(cap * 9 // 10, max(budget, est)))

    kernel = functools.partial(_conv_bn_stats_kernel, kh=kh, kw=kw, th=th, wo=wo)
    y, stats = pl.pallas_call(
        kernel,
        out_shape=(jax.ShapeDtypeStruct((n, ho, wo, coutp), jnp.bfloat16),
                   jax.ShapeDtypeStruct((n, nh, 2, coutp), jnp.float32)),
        grid=(n, nh),
        in_specs=[
            # Whole padded image of batch item b: constant block index over j, so
            # it is DMA'd to VMEM once per batch item (no wrapper-side halo gather)
            # and the kernel slices halo'd row bands from VMEM.
            # TODO(synk): for very large Hp*Wp*Cin_p, switch to a manual
            # double-buffered halo-window DMA (memory_space=pl.ANY, P4 pattern).
            pl.BlockSpec((1, hp, wp, cinp), lambda b, j: (b, 0, 0, 0)),
            # TODO(synk): pipeline_mode=pl.Buffered(1) (or one-shot DMA into a VMEM
            # scratch) would halve weight residency for very wide layers.
            pl.BlockSpec((kh * kw, cinp, coutp), lambda b, j: (0, 0, 0)),
        ],
        out_specs=(pl.BlockSpec((1, th, wo, coutp), lambda b, j: (b, j, 0, 0)),
                   pl.BlockSpec((1, 1, 2, coutp), lambda b, j: (b, j, 0, 0))),
        scratch_shapes=[pltpu.VMEM((th * wo, coutp), jnp.float32)],
        compiler_params=pltpu.CompilerParams(
            dimension_semantics=("parallel", "parallel"),
            vmem_limit_bytes=vmem_limit),
    )(x, w_taps)
    return y, stats, (th, ho, wo)


def bn_apply(y, stats, gamma, beta, count, th, *, relu=True, residual=None,
             out_dtype=jnp.bfloat16, eps=1e-5):
    """Training-mode BN normalize + affine (+ residual add) + ReLU, fused."""
    s = jnp.sum(stats, axis=(0, 1))                       # reduce tile partials
    mean = s[0] / count
    var = jnp.maximum(s[1] / count - mean * mean, 0.0)    # biased variance
    scale = (gamma * jax.lax.rsqrt(var + eps)).astype(jnp.float32)
    shift = (beta - mean * scale).astype(jnp.float32)

    n, ho, wo, c = y.shape
    nh = ho // th
    tile = pl.BlockSpec((1, th, wo, c), lambda b, j: (b, j, 0, 0))
    vec = pl.BlockSpec((1, 1, 1, c), lambda b, j: (0, 0, 0, 0))
    args = [y, scale.reshape(1, 1, 1, c), shift.reshape(1, 1, 1, c)]
    in_specs = [tile, vec, vec]
    if residual is None:
        kernel = functools.partial(_bn_act_kernel, relu=relu)
    else:
        kernel = _bn_add_relu_kernel
        args.append(residual)
        in_specs.append(tile)

    cap, budget = _vmem_budget()
    out_b = jnp.dtype(out_dtype).itemsize
    est = 2 * th * wo * c * (2 + out_b + (2 if residual is not None else 0)) + (1 << 20)
    vmem_limit = int(min(cap * 9 // 10, max(16 * 1024 * 1024, est)))

    return pl.pallas_call(
        kernel,
        out_shape=jax.ShapeDtypeStruct((n, ho, wo, c), out_dtype),
        grid=(n, nh),
        in_specs=in_specs,
        out_specs=tile,
        compiler_params=pltpu.CompilerParams(
            dimension_semantics=("parallel", "parallel"),
            vmem_limit_bytes=vmem_limit),
    )(*args)


# ------------------------------ ResBlock ------------------------------------

def res_block(x_nchw, params, *, downsample, downsample_stride=(2, 2)):
    x = jnp.transpose(x_nchw, (0, 2, 3, 1))                # NCHW -> NHWC
    n, h, w_in, cin = x.shape
    cout = params["w1"].shape[-1]
    cinp, coutp = _round_up(cin, _LANES), _round_up(cout, _LANES)
    # Lane-dense channels; activations live in bf16 between kernels.
    xb = _pad_channels(x, cinp).astype(jnp.bfloat16)

    # Conv biases omitted: with training-mode BatchNorm directly after each conv
    # they cancel exactly in the mean subtraction (forward output unchanged).
    w1 = _prep_conv_w(params["w1"])                 # (9, cinp,  coutp) bf16
    w2 = _prep_conv_w(params["w2"])                 # (9, coutp, coutp) bf16
    w3 = _prep_conv_w(params["w3"])
    g1, b1 = _pad_vec(params["g1"], coutp), _pad_vec(params["be1"], coutp)
    g2, b2 = _pad_vec(params["g2"], coutp), _pad_vec(params["be2"], coutp)
    g3, b3 = _pad_vec(params["g3"], coutp), _pad_vec(params["be3"], coutp)

    # ---- conv1 -> bn1 -> relu -----------------------------------------------
    if downsample:
        # TODO(synk): replace the bf16 wrapper-side im2col with a strided-halo
        # conv kernel (pl.ds(..., stride)) to remove the 9x patch materialization.
        xi = _im2col(xb, 3, 3, downsample_stride, 1)       # (N, Ho, Wo, 9*cinp) bf16
        y1, s1, (th1, ho, wo) = conv_bn_stats(
            xi, w1.reshape(1, 9 * cinp, coutp), kh=1, kw=1, padding=0)
    else:
        y1, s1, (th1, ho, wo) = conv_bn_stats(xb, w1, kh=3, kw=3, padding=1)
    count = n * ho * wo
    a1 = bn_apply(y1, s1, g1, b1, count, th1, relu=True)   # (N, Ho, Wo, coutp) bf16

    # ---- conv2 -> bn2 -> relu -----------------------------------------------
    # TODO(synk): fuse this BN-apply into the conv2 prologue (normalize the halo'd
    # band in VMEM before the tap matmuls) to drop one bf16 activation round-trip.
    y2, s2, (th2, _, _) = conv_bn_stats(a1, w2, kh=3, kw=3, padding=1)
    a2 = bn_apply(y2, s2, g2, b2, count, th2, relu=True)

    # ---- conv3 -> bn3 (+ shortcut add + relu fused into one pass) -----------
    y3, s3, (th3, _, _) = conv_bn_stats(a2, w3, kh=3, kw=3, padding=1)

    if downsample:
        ws = _prep_conv_w(params["ws"])                    # (1, cinp, coutp)
        gs, bs = _pad_vec(params["gs"], coutp), _pad_vec(params["bes"], coutp)
        sh, sw = downsample_stride
        xs = xb[:, ::sh, ::sw, :]                          # 1x1 conv: plain stride
        ysc, ssc, (ths, _, _) = conv_bn_stats(xs, ws, kh=1, kw=1, padding=0)
        shortcut = bn_apply(ysc, ssc, gs, bs, count, ths, relu=False)
    else:
        if cin != cout:
            raise ValueError("identity shortcut requires in_channels == out_channels")
        shortcut = xb                                      # (N, Ho, Wo, coutp) bf16

    out = bn_apply(y3, s3, g3, b3, count, th3, relu=True,
                   residual=shortcut, out_dtype=jnp.float32)
    out = out[..., :cout]
    return jnp.transpose(out, (0, 3, 1, 2))                # NHWC -> NCHW


def init_params(key, cin, cout, downsample):
    keys = jax.random.split(key, 12)
    it = iter(keys)

    def conv_w(k, kh, kw, ci, co):
        return 0.1 * jax.random.normal(k, (kh, kw, ci, co), jnp.float32)

    def bn(k1, k2, co):
        return (1.0 + 0.1 * jax.random.normal(k1, (co,), jnp.float32),
                0.1 * jax.random.normal(k2, (co,), jnp.float32))

    p = {"w1": conv_w(next(it), 3, 3, cin, cout)}
    p["g1"], p["be1"] = bn(next(it), next(it), cout)
    p["w2"] = conv_w(next(it), 3, 3, cout, cout)
    p["g2"], p["be2"] = bn(next(it), next(it), cout)
    p["w3"] = conv_w(next(it), 3, 3, cout, cout)
    p["g3"], p["be3"] = bn(next(it), next(it), cout)
    if downsample:
        p["ws"] = conv_w(next(it), 1, 1, cin, cout)
        p["gs"], p["bes"] = bn(next(it), next(it), cout)
    return p


if __name__ == "__main__":
    key = jax.random.PRNGKey(0)
    kx, kp = jax.random.split(key)

    N, Cin, H, W = 2, 4, 16, 16
    Cout = 8
    downsample = True

    x = jax.random.normal(kx, (N, Cin, H, W), jnp.float32)      # NCHW, like PyTorch
    params = init_params(kp, Cin, Cout, downsample)

    fwd = jax.jit(functools.partial(res_block, downsample=downsample,
                                    downsample_stride=(2, 2)))
    out = jax.block_until_ready(fwd(x, params))

    assert out.shape == (N, Cout, H // 2, W // 2), out.shape
    assert bool(jnp.all(out >= 0.0))                             # final ReLU
    print("KERNEL_OK")
</pallas_src>

<mosaic_0001>
module attributes {stable_mosaic.version = 11 : i64} {
  func.func @_conv_bn_stats_kernel(%arg0: i32, %arg1: i32, %arg2: memref<1x8x8x1152xbf16, #tpu.memory_space<vmem>>, %arg3: memref<1x1152x128xbf16, #tpu.memory_space<vmem>>, %arg4: memref<1x8x8x128xbf16, #tpu.memory_space<vmem>>, %arg5: memref<1x1x2x128xf32, #tpu.memory_space<vmem>>, %arg6: memref<64x128xf32, #tpu.memory_space<vmem>>) attributes {dimension_semantics = [#tpu.dimension_semantics<parallel>, #tpu.dimension_semantics<parallel>], iteration_bounds = array<i64: 2, 1>, scalar_prefetch = 0 : i64, scratch_operands = 1 : i64, tpu.core_type = #tpu.core_type<tc>, window_params = [{transform_indices = @transform_0, window_bounds = array<i64: 1, 8, 8, 1152>}, {pipeline_mode = #tpu.pipeline_mode<synchronous>, transform_indices = @transform_1, window_bounds = array<i64: 1, 1152, 128>}, {transform_indices = @transform_2, window_bounds = array<i64: 1, 8, 8, 128>}, {transform_indices = @transform_3, window_bounds = array<i64: 1, 1, 2, 128>}]} {
    %c8_i32 = arith.constant 8 : i32
    %0 = arith.muli %arg1, %c8_i32 : i32
    %cst = arith.constant 0.000000e+00 : f32
    %1 = vector.broadcast %cst : f32 to vector<64x128xf32>
    %c0 = arith.constant 0 : index
    %c0_0 = arith.constant 0 : index
    %2 = vector.load %arg6[%c0, %c0_0] : memref<64x128xf32, #tpu.memory_space<vmem>>, vector<64x128xf32>
    tpu.vector_store %arg6[%c0, %c0_0], %1 {strides = array<i32>} : memref<64x128xf32, #tpu.memory_space<vmem>>, vector<64x128xf32>,
    %c0_i32 = arith.constant 0 : i32
    %3 = arith.addi %0, %c0_i32 : i32
    %c0_1 = arith.constant 0 : index
    %4 = arith.index_cast %3 : i32 to index
    %c0_2 = arith.constant 0 : index
    %c0_3 = arith.constant 0 : index
    %5 = vector.load %arg2[%c0_1, %4, %c0_2, %c0_3] : memref<1x8x8x1152xbf16, #tpu.memory_space<vmem>>, vector<1x8x8x1152xbf16>
    %6 = vector.shape_cast %5 : vector<1x8x8x1152xbf16> to vector<8x8x1152xbf16>
    %7 = vector.shape_cast %6 : vector<8x8x1152xbf16> to vector<64x1152xbf16>
    %c0_4 = arith.constant 0 : index
    %c0_5 = arith.constant 0 : index
    %8 = vector.load %arg6[%c0_4, %c0_5] : memref<64x128xf32, #tpu.memory_space<vmem>>, vector<64x128xf32>
    %c0_6 = arith.constant 0 : index
    %c0_7 = arith.constant 0 : index
    %c0_8 = arith.constant 0 : index
    %9 = vector.load %arg3[%c0_6, %c0_7, %c0_8] : memref<1x1152x128xbf16, #tpu.memory_space<vmem>>, vector<1x1152x128xbf16>
    %10 = vector.shape_cast %9 : vector<1x1152x128xbf16> to vector<1152x128xbf16>
    %cst_9 = arith.constant dense<0.000000e+00> : vector<64x128xf32>
    %11 = tpu.matmul %7, %10, %cst_9 {dimension_numbers = #tpu.dot_dimension_numbers<[1], [0], [0], [1], [0, 0, 1, 1], [], []>} : vector<64x1152xbf16>, vector<1152x128xbf16>, vector<64x128xf32> -> vector<64x128xf32>
    %12 = arith.addf %8, %11 : vector<64x128xf32>
    %c0_10 = arith.constant 0 : index
    %c0_11 = arith.constant 0 : index
    %13 = vector.load %arg6[%c0_10, %c0_11] : memref<64x128xf32, #tpu.memory_space<vmem>>, vector<64x128xf32>
    tpu.vector_store %arg6[%c0_10, %c0_11], %12 {strides = array<i32>} : memref<64x128xf32, #tpu.memory_space<vmem>>, vector<64x128xf32>,
    %c0_12 = arith.constant 0 : index
    %c0_13 = arith.constant 0 : index
    %14 = vector.load %arg6[%c0_12, %c0_13] : memref<64x128xf32, #tpu.memory_space<vmem>>, vector<64x128xf32>
    %15 = vector.shape_cast %14 : vector<64x128xf32> to vector<1x8x8x128xf32>
    %16 = arith.truncf %15 : vector<1x8x8x128xf32> to vector<1x8x8x128xbf16>
    %c0_14 = arith.constant 0 : index
    %c0_15 = arith.constant 0 : index
    %c0_16 = arith.constant 0 : index
    %c0_17 = arith.constant 0 : index
    %17 = vector.load %arg4[%c0_14, %c0_15, %c0_16, %c0_17] : memref<1x8x8x128xbf16, #tpu.memory_space<vmem>>, vector<1x8x8x128xbf16>
    tpu.vector_store %arg4[%c0_14, %c0_15, %c0_16, %c0_17], %16 {strides = array<i32>} : memref<1x8x8x128xbf16, #tpu.memory_space<vmem>>, vector<1x8x8x128xbf16>,
    %cst_18 = arith.constant dense<0.000000e+00> : vector<128xf32>
    %18 = vector.multi_reduction <add>, %14, %cst_18 [0] : vector<64x128xf32> to vector<128xf32>
    %19 = vector.shape_cast %18 : vector<128xf32> to vector<1x128xf32>
    %20 = arith.mulf %14, %14 : vector<64x128xf32>
    %cst_19 = arith.constant dense<0.000000e+00> : vector<128xf32>
    %21 = vector.multi_reduction <add>, %20, %cst_19 [0] : vector<64x128xf32> to vector<128xf32>
    %22 = vector.shape_cast %21 : vector<128xf32> to vector<1x128xf32>
    %23 = tpu.concatenate %19, %22 in 0 : vector<1x128xf32>, vector<1x128xf32> -> vector<2x128xf32>
    %24 = vector.shape_cast %23 : vector<2x128xf32> to vector<1x1x2x128xf32>
    %c0_20 = arith.constant 0 : index
    %c0_21 = arith.constant 0 : index
    %c0_22 = arith.constant 0 : index
    %c0_23 = arith.constant 0 : index
    %25 = vector.load %arg5[%c0_20, %c0_21, %c0_22, %c0_23] : memref<1x1x2x128xf32, #tpu.memory_space<vmem>>, vector<1x1x2x128xf32>
    tpu.vector_store %arg5[%c0_20, %c0_21, %c0_22, %c0_23], %24 {strides = array<i32>} : memref<1x1x2x128xf32, #tpu.memory_space<vmem>>, vector<1x1x2x128xf32>,
    return
  }
  func.func @transform_0(%arg0: i32, %arg1: i32) -> (i32, i32, i32, i32) {
    %c0_i32 = arith.constant 0 : i32
    %c0_i32_0 = arith.constant 0 : i32
    %c0_i32_1 = arith.constant 0 : i32
    %c0_i32_2 = arith.constant 0 : i32
    return %arg0, %c0_i32, %c0_i32_0, %c0_i32_1 : i32, i32, i32, i32
  }
  func.func @transform_1(%arg0: i32, %arg1: i32) -> (i32, i32, i32) {
    %c0_i32 = arith.constant 0 : i32
    %c0_i32_0 = arith.constant 0 : i32
    %c0_i32_1 = arith.constant 0 : i32
    %c0_i32_2 = arith.constant 0 : i32
    return %c0_i32, %c0_i32_0, %c0_i32_1 : i32, i32, i32
  }
  func.func @transform_2(%arg0: i32, %arg1: i32) -> (i32, i32, i32, i32) {
    %c0_i32 = arith.constant 0 : i32
    %c0_i32_0 = arith.constant 0 : i32
    %c0_i32_1 = arith.constant 0 : i32
    return %arg0, %arg1, %c0_i32, %c0_i32_0 : i32, i32, i32, i32
  }
  func.func @transform_3(%arg0: i32, %arg1: i32) -> (i32, i32, i32, i32) {
    %c0_i32 = arith.constant 0 : i32
    %c0_i32_0 = arith.constant 0 : i32
    %c0_i32_1 = arith.constant 0 : i32
    return %arg0, %arg1, %c0_i32, %c0_i32_0 : i32, i32, i32, i32
  }
}

module attributes {stable_mosaic.version = 11 : i64} {
  func.func @_bn_act_kernel(%arg0: i32, %arg1: i32, %arg2: memref<1x8x8x128xbf16, #tpu.memory_space<vmem>>, %arg3: memref<1x1x1x128xf32, #tpu.memory_space<vmem>>, %arg4: memref<1x1x1x128xf32, #tpu.memory_space<vmem>>, %arg5: memref<1x8x8x128xbf16, #tpu.memory_space<vmem>>) attributes {dimension_semantics = [#tpu.dimension_semantics<parallel>, #tpu.dimension_semantics<parallel>], iteration_bounds = array<i64: 2, 1>, scalar_prefetch = 0 : i64, scratch_operands = 0 : i64, tpu.core_type = #tpu.core_type<tc>, window_params = [{transform_indices = @transform_0, window_bounds = array<i64: 1, 8, 8, 128>}, {pipeline_mode = #tpu.pipeline_mode<synchronous>, transform_indices = @transform_1, window_bounds = array<i64: 1, 1, 1, 128>}, {pipeline_mode = #tpu.pipeline_mode<synchronous>, transform_indices = @transform_2, window_bounds = array<i64: 1, 1, 1, 128>}, {transform_indices = @transform_3, window_bounds = array<i64: 1, 8, 8, 128>}]} {
    %c0 = arith.constant 0 : index
    %c0_0 = arith.constant 0 : index
    %c0_1 = arith.constant 0 : index
    %c0_2 = arith.constant 0 : index
    %0 = vector.load %arg2[%c0, %c0_0, %c0_1, %c0_2] : memref<1x8x8x128xbf16, #tpu.memory_space<vmem>>, vector<1x8x8x128xbf16>
    %1 = arith.extf %0 : vector<1x8x8x128xbf16> to vector<1x8x8x128xf32>
    %c0_3 = arith.constant 0 : index
    %c0_4 = arith.constant 0 : index
    %c0_5 = arith.constant 0 : index
    %c0_6 = arith.constant 0 : index
    %2 = vector.load %arg3[%c0_3, %c0_4, %c0_5, %c0_6] : memref<1x1x1x128xf32, #tpu.memory_space<vmem>>, vector<1x1x1x128xf32>
    %3 = vector.broadcast %2 : vector<1x1x1x128xf32> to vector<1x8x8x128xf32>
    %4 = arith.mulf %1, %3 : vector<1x8x8x128xf32>
    %c0_7 = arith.constant 0 : index
    %c0_8 = arith.constant 0 : index
    %c0_9 = arith.constant 0 : index
    %c0_10 = arith.constant 0 : index
    %5 = vector.load %arg4[%c0_7, %c0_8, %c0_9, %c0_10] : memref<1x1x1x128xf32, #tpu.memory_space<vmem>>, vector<1x1x1x128xf32>
    %6 = vector.broadcast %5 : vector<1x1x1x128xf32> to vector<1x8x8x128xf32>
    %7 = arith.addf %4, %6 : vector<1x8x8x128xf32>
    %cst = arith.constant 0.000000e+00 : f32
    %8 = vector.broadcast %cst : f32 to vector<1x8x8x128xf32>
    %9 = arith.maximumf %7, %8 : vector<1x8x8x128xf32>
    %10 = arith.truncf %9 : vector<1x8x8x128xf32> to vector<1x8x8x128xbf16>
    %c0_11 = arith.constant 0 : index
    %c0_12 = arith.constant 0 : index
    %c0_13 = arith.constant 0 : index
    %c0_14 = arith.constant 0 : index
    %11 = vector.load %arg5[%c0_11, %c0_12, %c0_13, %c0_14] : memref<1x8x8x128xbf16, #tpu.memory_space<vmem>>, vector<1x8x8x128xbf16>
    tpu.vector_store %arg5[%c0_11, %c0_12, %c0_13, %c0_14], %10 {strides = array<i32>} : memref<1x8x8x128xbf16, #tpu.memory_space<vmem>>, vector<1x8x8x128xbf16>,
    return
  }
  func.func @transform_0(%arg0: i32, %arg1: i32) -> (i32, i32, i32, i32) {
    %c0_i32 = arith.constant 0 : i32
    %c0_i32_0 = arith.constant 0 : i32
    %c0_i32_1 = arith.constant 0 : i32
    return %arg0, %arg1, %c0_i32, %c0_i32_0 : i32, i32, i32, i32
  }
  func.func @transform_1(%arg0: i32, %arg1: i32) -> (i32, i32, i32, i32) {
    %c0_i32 = arith.constant 0 : i32
    %c0_i32_0 = arith.constant 0 : i32
    %c0_i32_1 = arith.constant 0 : i32
    %c0_i32_2 = arith.constant 0 : i32
    %c0_i32_3 = arith.constant 0 : i32
    return %c0_i32, %c0_i32_0, %c0_i32_1, %c0_i32_2 : i32, i32, i32, i32
  }
  func.func @transform_2(%arg0: i32, %arg1: i32) -> (i32, i32, i32, i32) {
    %c0_i32 = arith.constant 0 : i32
    %c0_i32_0 = arith.constant 0 : i32
    %c0_i32_1 = arith.constant 0 : i32
    %c0_i32_2 = arith.constant 0 : i32
    %c0_i32_3 = arith.constant 0 : i32
    return %c0_i32, %c0_i32_0, %c0_i32_1, %c0_i32_2 : i32, i32, i32, i32
  }
  func.func @transform_3(%arg0: i32, %arg1: i32) -> (i32, i32, i32, i32) {
    %c0_i32 = arith.constant 0 : i32
    %c0_i32_0 = arith.constant 0 : i32
    %c0_i32_1 = arith.constant 0 : i32
    return %arg0, %arg1, %c0_i32, %c0_i32_0 : i32, i32, i32, i32
  }
}

module attributes {stable_mosaic.version = 11 : i64} {
  func.func @_conv_bn_stats_kernel(%arg0: i32, %arg1: i32, %arg2: memref<1x10x10x128xbf16, #tpu.memory_space<vmem>>, %arg3: memref<9x128x128xbf16, #tpu.memory_space<vmem>>, %arg4: memref<1x8x8x128xbf16, #tpu.memory_space<vmem>>, %arg5: memref<1x1x2x128xf32, #tpu.memory_space<vmem>>, %arg6: memref<64x128xf32, #tpu.memory_space<vmem>>) attributes {dimension_semantics = [#tpu.dimension_semantics<parallel>, #tpu.dimension_semantics<parallel>], iteration_bounds = array<i64: 2, 1>, scalar_prefetch = 0 : i64, scratch_operands = 1 : i64, tpu.core_type = #tpu.core_type<tc>, window_params = [{transform_indices = @transform_0, window_bounds = array<i64: 1, 10, 10, 128>}, {pipeline_mode = #tpu.pipeline_mode<synchronous>, transform_indices = @transform_1, window_bounds = array<i64: 9, 128, 128>}, {transform_indices = @transform_2, window_bounds = array<i64: 1, 8, 8, 128>}, {transform_indices = @transform_3, window_bounds = array<i64: 1, 1, 2, 128>}]} {
    %c8_i32 = arith.constant 8 : i32
    %0 = arith.muli %arg1, %c8_i32 : i32
    %cst = arith.constant 0.000000e+00 : f32
    %1 = vector.broadcast %cst : f32 to vector<64x128xf32>
    %c0 = arith.constant 0 : index
    %c0_0 = arith.constant 0 : index
    %2 = vector.load %arg6[%c0, %c0_0] : memref<64x128xf32, #tpu.memory_space<vmem>>, vector<64x128xf32>
    tpu.vector_store %arg6[%c0, %c0_0], %1 {strides = array<i32>} : memref<64x128xf32, #tpu.memory_space<vmem>>, vector<64x128xf32>,
    %c0_i32 = arith.constant 0 : i32
    %3 = arith.addi %0, %c0_i32 : i32
    %c0_1 = arith.constant 0 : index
    %4 = arith.index_cast %3 : i32 to index
    %c0_2 = arith.constant 0 : index
    %c0_3 = arith.constant 0 : index
    %5 = vector.load %arg2[%c0_1, %4, %c0_2, %c0_3] : memref<1x10x10x128xbf16, #tpu.memory_space<vmem>>, vector<1x8x10x128xbf16>
    %6 = vector.shape_cast %5 : vector<1x8x10x128xbf16> to vector<8x10x128xbf16>
    %7 = vector.extract_strided_slice %6 {offsets = [0, 0, 0], sizes = [8, 8, 128], strides = [1, 1, 1]} : vector<8x10x128xbf16> to vector<8x8x128xbf16>
    %8 = vector.shape_cast %7 : vector<8x8x128xbf16> to vector<64x128xbf16>
    %c0_4 = arith.constant 0 : index
    %c0_5 = arith.constant 0 : index
    %9 = vector.load %arg6[%c0_4, %c0_5] : memref<64x128xf32, #tpu.memory_space<vmem>>, vector<64x128xf32>
    %c0_6 = arith.constant 0 : index
    %c0_7 = arith.constant 0 : index
    %c0_8 = arith.constant 0 : index
    %10 = vector.load %arg3[%c0_6, %c0_7, %c0_8] : memref<9x128x128xbf16, #tpu.memory_space<vmem>>, vector<1x128x128xbf16>
    %11 = vector.shape_cast %10 : vector<1x128x128xbf16> to vector<128x128xbf16>
    %cst_9 = arith.constant dense<0.000000e+00> : vector<64x128xf32>
    %12 = tpu.matmul %8, %11, %cst_9 {dimension_numbers = #tpu.dot_dimension_numbers<[1], [0], [0], [1], [0, 0, 1, 1], [], []>} : vector<64x128xbf16>, vector<128x128xbf16>, vector<64x128xf32> -> vector<64x128xf32>
    %13 = arith.addf %9, %12 : vector<64x128xf32>
    %c0_10 = arith.constant 0 : index
    %c0_11 = arith.constant 0 : index
    %14 = vector.load %arg6[%c0_10, %c0_11] : memref<64x128xf32, #tpu.memory_space<vmem>>, vector<64x128xf32>
    tpu.vector_store %arg6[%c0_10, %c0_11], %13 {strides = array<i32>} : memref<64x128xf32, #tpu.memory_space<vmem>>, vector<64x128xf32>,
    %15 = vector.extract_strided_slice %6 {offsets = [0, 1, 0], sizes = [8, 8, 128], strides = [1, 1, 1]} : vector<8x10x128xbf16> to vector<8x8x128xbf16>
    %16 = vector.shape_cast %15 : vector<8x8x128xbf16> to vector<64x128xbf16>
    %c0_12 = arith.constant 0 : index
    %c0_13 = arith.constant 0 : index
    %17 = vector.load %arg6[%c0_12, %c0_13] : memref<64x128xf32, #tpu.memory_space<vmem>>, vector<64x128xf32>
    %c1 = arith.constant 1 : index
    %c0_14 = arith.constant 0 : index
    %c0_15 = arith.constant 0 : index
    %18 = vector.load %arg3[%c1, %c0_14, %c0_15] : memref<9x128x128xbf16, #tpu.memory_space<vmem>>, vector<1x128x128xbf16>
    %19 = vector.shape_cast %18 : vector<1x128x128xbf16> to vector<128x128xbf16>
    %cst_16 = arith.constant dense<0.000000e+00> : vector<64x128xf32>
    %20 = tpu.matmul %16, %19, %cst_16 {dimension_numbers = #tpu.dot_dimension_numbers<[1], [0], [0], [1], [0, 0, 1, 1], [], []>} : vector<64x128xbf16>, vector<128x128xbf16>, vector<64x128xf32> -> vector<64x128xf32>
    %21 = arith.addf %17, %20 : vector<64x128xf32>
    %c0_17 = arith.constant 0 : index
    %c0_18 = arith.constant 0 : index
    %22 = vector.load %arg6[%c0_17, %c0_18] : memref<64x128xf32, #tpu.memory_space<vmem>>, vector<64x128xf32>
    tpu.vector_store %arg6[%c0_17, %c0_18], %21 {strides = array<i32>} : memref<64x128xf32, #tpu.memory_space<vmem>>, vector<64x128xf32>,
    %23 = vector.extract_strided_slice %6 {offsets = [0, 2, 0], sizes = [8, 8, 128], strides = [1, 1, 1]} : vector<8x10x128xbf16> to vector<8x8x128xbf16>
    %24 = vector.shape_cast %23 : vector<8x8x128xbf16> to vector<64x128xbf16>
    %c0_19 = arith.constant 0 : index
    %c0_20 = arith.constant 0 : index
    %25 = vector.load %arg6[%c0_19, %c0_20] : memref<64x128xf32, #tpu.memory_space<vmem>>, vector<64x128xf32>
    %c2 = arith.constant 2 : index
    %c0_21 = arith.constant 0 : index
    %c0_22 = arith.constant 0 : index
    %26 = vector.load %arg3[%c2, %c0_21, %c0_22] : memref<9x128x128xbf16, #tpu.memory_space<vmem>>, vector<1x128x128xbf16>
    %27 = vector.shape_cast %26 : vector<1x128x128xbf16> to vector<128x128xbf16>
    %cst_23 = arith.constant dense<0.000000e+00> : vector<64x128xf32>
    %28 = tpu.matmul %24, %27, %cst_23 {dimension_numbers = #tpu.dot_dimension_numbers<[1], [0], [0], [1], [0, 0, 1, 1], [], []>} : vector<64x128xbf16>, vector<128x128xbf16>, vector<64x128xf32> -> vector<64x128xf32>
    %29 = arith.addf %25, %28 : vector<64x128xf32>
    %c0_24 = arith.constant 0 : index
    %c0_25 = arith.constant 0 : index
    %30 = vector.load %arg6[%c0_24, %c0_25] : memref<64x128xf32, #tpu.memory_space<vmem>>, vector<64x128xf32>
    tpu.vector_store %arg6[%c0_24, %c0_25], %29 {strides = array<i32>} : memref<64x128xf32, #tpu.memory_space<vmem>>, vector<64x128xf32>,
    %c1_i32 = arith.constant 1 : i32
    %31 = arith.addi %0, %c1_i32 : i32
    %c0_26 = arith.constant 0 : index
    %32 = arith.index_cast %31 : i32 to index
    %c0_27 = arith.constant 0 : index
    %c0_28 = arith.constant 0 : index
    %33 = vector.load %arg2[%c0_26, %32, %c0_27, %c0_28] : memref<1x10x10x128xbf16, #tpu.memory_space<vmem>>, vector<1x8x10x128xbf16>
    %34 = vector.shape_cast %33 : vector<1x8x10x128xbf16> to vector<8x10x128xbf16>
    %35 = vector.extract_strided_slice %34 {offsets = [0, 0, 0], sizes = [8, 8, 128], strides = [1, 1, 1]} : vector<8x10x128xbf16> to vector<8x8x128xbf16>
    %36 = vector.shape_cast %35 : vector<8x8x128xbf16> to vector<64x128xbf16>
    %c0_29 = arith.constant 0 : index
    %c0_30 = arith.constant 0 : index
    %37 = vector.load %arg6[%c0_29, %c0_30] : memref<64x128xf32, #tpu.memory_space<vmem>>, vector<64x128xf32>
    %c3 = arith.constant 3 : index
    %c0_31 = arith.constant 0 : index
    %c0_32 = arith.constant 0 : index
    %38 = vector.load %arg3[%c3, %c0_31, %c0_32] : memref<9x128x128xbf16, #tpu.memory_space<vmem>>, vector<1x128x128xbf16>
    %39 = vector.shape_cast %38 : vector<1x128x128xbf16> to vector<128x128xbf16>
    %cst_33 = arith.constant dense<0.000000e+00> : vector<64x128xf32>
    %40 = tpu.matmul %36, %39, %cst_33 {dimension_numbers = #tpu.dot_dimension_numbers<[1], [0], [0], [1], [0, 0, 1, 1], [], []>} : vector<64x128xbf16>, vector<128x128xbf16>, vector<64x128xf32> -> vector<64x128xf32>
    %41 = arith.addf %37, %40 : vector<64x128xf32>
    %c0_34 = arith.constant 0 : index
    %c0_35 = arith.constant 0 : index
    %42 = vector.load %arg6[%c0_34, %c0_35] : memref<64x128xf32, #tpu.memory_space<vmem>>, vector<64x128xf32>
    tpu.vector_store %arg6[%c0_34, %c0_35], %41 {strides = array<i32>} : memref<64x128xf32, #tpu.memory_space<vmem>>, vector<64x128xf32>,
    %43 = vector.extract_strided_slice %34 {offsets = [0, 1, 0], sizes = [8, 8, 128], strides = [1, 1, 1]} : vector<8x10x128xbf16> to vector<8x8x128xbf16>
    %44 = vector.shape_cast %43 : vector<8x8x128xbf16> to vector<64x128xbf16>
    %c0_36 = arith.constant 0 : index
    %c0_37 = arith.constant 0 : index
    %45 = vector.load %arg6[%c0_36, %c0_37] : memref<64x128xf32, #tpu.memory_space<vmem>>, vector<64x128xf32>
    %c4 = arith.constant 4 : index
    %c0_38 = arith.constant 0 : index
    %c0_39 = arith.constant 0 : index
    %46 = vector.load %arg3[%c4, %c0_38, %c0_39] : memref<9x128x128xbf16, #tpu.memory_space<vmem>>, vector<1x128x128xbf16>
    %47 = vector.shape_cast %46 : vector<1x128x128xbf16> to vector<128x128xbf16>
    %cst_40 = arith.constant dense<0.000000e+00> : vector<64x128xf32>
    %48 = tpu.matmul %44, %47, %cst_40 {dimension_numbers = #tpu.dot_dimension_numbers<[1], [0], [0], [1], [0, 0, 1, 1], [], []>} : vector<64x128xbf16>, vector<128x128xbf16>, vector<64x128xf32> -> vector<64x128xf32>
    %49 = arith.addf %45, %48 : vector<64x128xf32>
    %c0_41 = arith.constant 0 : index
    %c0_42 = arith.constant 0 : index
    %50 = vector.load %arg6[%c0_41, %c0_42] : memref<64x128xf32, #tpu.memory_space<vmem>>, vector<64x128xf32>
    tpu.vector_store %arg6[%c0_41, %c0_42], %49 {strides = array<i32>} : memref<64x128xf32, #tpu.memory_space<vmem>>, vector<64x128xf32>,
    %51 = vector.extract_strided_slice %34 {offsets = [0, 2, 0], sizes = [8, 8, 128], strides = [1, 1, 1]} : vector<8x10x128xbf16> to vector<8x8x128xbf16>
    %52 = vector.shape_cast %51 : vector<8x8x128xbf16> to vector<64x128xbf16>
    %c0_43 = arith.constant 0 : index
    %c0_44 = arith.constant 0 : index
    %53 = vector.load %arg6[%c0_43, %c0_44] : memref<64x128xf32, #tpu.memory_space<vmem>>, vector<64x128xf32>
    %c5 = arith.constant 5 : index
    %c0_45 = arith.constant 0 : index
    %c0_46 = arith.constant 0 : index
    %54 = vector.load %arg3[%c5, %c0_45, %c0_46] : memref<9x128x128xbf16, #tpu.memory_space<vmem>>, vector<1x128x128xbf16>
    %55 = vector.shape_cast %54 : vector<1x128x128xbf16> to vector<128x128xbf16>
    %cst_47 = arith.constant dense<0.000000e+00> : vector<64x128xf32>
    %56 = tpu.matmul %52, %55, %cst_47 {dimension_numbers = #tpu.dot_dimension_numbers<[1], [0], [0], [1], [0, 0, 1, 1], [], []>} : vector<64x128xbf16>, vector<128x128xbf16>, vector<64x128xf32> -> vector<64x128xf32>
    %57 = arith.addf %53, %56 : vector<64x128xf32>
    %c0_48 = arith.constant 0 : index
    %c0_49 = arith.constant 0 : index
    %58 = vector.load %arg6[%c0_48, %c0_49] : memref<64x128xf32, #tpu.memory_space<vmem>>, vector<64x128xf32>
    tpu.vector_store %arg6[%c0_48, %c0_49], %57 {strides = array<i32>} : memref<64x128xf32, #tpu.memory_space<vmem>>, vector<64x128xf32>,
    %c2_i32 = arith.constant 2 : i32
    %59 = arith.addi %0, %c2_i32 : i32
    %c0_50 = arith.constant 0 : index
    %60 = arith.index_cast %59 : i32 to index
    %c0_51 = arith.constant 0 : index
    %c0_52 = arith.constant 0 : index
    %61 = vector.load %arg2[%c0_50, %60, %c0_51, %c0_52] : memref<1x10x10x128xbf16, #tpu.memory_space<vmem>>, vector<1x8x10x128xbf16>
    %62 = vector.shape_cast %61 : vector<1x8x10x128xbf16> to vector<8x10x128xbf16>
    %63 = vector.extract_strided_slice %62 {offsets = [0, 0, 0], sizes = [8, 8, 128], strides = [1, 1, 1]} : vector<8x10x128xbf16> to vector<8x8x128xbf16>
    %64 = vector.shape_cast %63 : vector<8x8x128xbf16> to vector<64x128xbf16>
    %c0_53 = arith.constant 0 : index
    %c0_54 = arith.constant 0 : index
    %65 = vector.load %arg6[%c0_53, %c0_54] : memref<64x128xf32, #tpu.memory_space<vmem>>, vector<64x128xf32>
    %c6 = arith.constant 6 : index
    %c0_55 = arith.constant 0 : index
    %c0_56 = arith.constant 0 : index
    %66 = vector.load %arg3[%c6, %c0_55, %c0_56] : memref<9x128x128xbf16, #tpu.memory_space<vmem>>, vector<1x128x128xbf16>
    %67 = vector.shape_cast %66 : vector<1x128x128xbf16> to vector<128x128xbf16>
    %cst_57 = arith.constant dense<0.000000e+00> : vector<64x128xf32>
    %68 = tpu.matmul %64, %67, %cst_57 {dimension_numbers = #tpu.dot_dimension_numbers<[1], [0], [0], [1], [0, 0, 1, 1], [], []>} : vector<64x128xbf16>, vector<128x128xbf16>, vector<64x128xf32> -> vector<64x128xf32>
    %69 = arith.addf %65, %68 : vector<64x128xf32>
    %c0_58 = arith.constant 0 : index
    %c0_59 = arith.constant 0 : index
    %70 = vector.load %arg6[%c0_58, %c0_59] : memref<64x128xf32, #tpu.memory_space<vmem>>, vector<64x128xf32>
    tpu.vector_store %arg6[%c0_58, %c0_59], %69 {strides = array<i32>} : memref<64x128xf32, #tpu.memory_space<vmem>>, vector<64x128xf32>,
    %71 = vector.extract_strided_slice %62 {offsets = [0, 1, 0], sizes = [8, 8, 128], strides = [1, 1, 1]} : vector<8x10x128xbf16> to vector<8x8x128xbf16>
    %72 = vector.shape_cast %71 : vector<8x8x128xbf16> to vector<64x128xbf16>
    %c0_60 = arith.constant 0 : index
    %c0_61 = arith.constant 0 : index
    %73 = vector.load %arg6[%c0_60, %c0_61] : memref<64x128xf32, #tpu.memory_space<vmem>>, vector<64x128xf32>
    %c7 = arith.constant 7 : index
    %c0_62 = arith.constant 0 : index
    %c0_63 = arith.constant 0 : index
    %74 = vector.load %arg3[%c7, %c0_62, %c0_63] : memref<9x128x128xbf16, #tpu.memory_space<vmem>>, vector<1x128x128xbf16>
    %75 = vector.shape_cast %74 : vector<1x128x128xbf16> to vector<128x128xbf16>
    %cst_64 = arith.constant dense<0.000000e+00> : vector<64x128xf32>
    %76 = tpu.matmul %72, %75, %cst_64 {dimension_numbers = #tpu.dot_dimension_numbers<[1], [0], [0], [1], [0, 0, 1, 1], [], []>} : vector<64x128xbf16>, vector<128x128xbf16>, vector<64x128xf32> -> vector<64x128xf32>
    %77 = arith.addf %73, %76 : vector<64x128xf32>
    %c0_65 = arith.constant 0 : index
    %c0_66 = arith.constant 0 : index
    %78 = vector.load %arg6[%c0_65, %c0_66] : memref<64x128xf32, #tpu.memory_space<vmem>>, vector<64x128xf32>
    tpu.vector_store %arg6[%c0_65, %c0_66], %77 {strides = array<i32>} : memref<64x128xf32, #tpu.memory_space<vmem>>, vector<64x128xf32>,
    %79 = vector.extract_strided_slice %62 {offsets = [0, 2, 0], sizes = [8, 8, 128], strides = [1, 1, 1]} : vector<8x10x128xbf16> to vector<8x8x128xbf16>
    %80 = vector.shape_cast %79 : vector<8x8x128xbf16> to vector<64x128xbf16>
    %c0_67 = arith.constant 0 : index
    %c0_68 = arith.constant 0 : index
    %81 = vector.load %arg6[%c0_67, %c0_68] : memref<64x128xf32, #tpu.memory_space<vmem>>, vector<64x128xf32>
    %c8 = arith.constant 8 : index
    %c0_69 = arith.constant 0 : index
    %c0_70 = arith.constant 0 : index
    %82 = vector.load %arg3[%c8, %c0_69, %c0_70] : memref<9x128x128xbf16, #tpu.memory_space<vmem>>, vector<1x128x128xbf16>
    %83 = vector.shape_cast %82 : vector<1x128x128xbf16> to vector<128x128xbf16>
    %cst_71 = arith.constant dense<0.000000e+00> : vector<64x128xf32>
    %84 = tpu.matmul %80, %83, %cst_71 {dimension_numbers = #tpu.dot_dimension_numbers<[1], [0], [0], [1], [0, 0, 1, 1], [], []>} : vector<64x128xbf16>, vector<128x128xbf16>, vector<64x128xf32> -> vector<64x128xf32>
    %85 = arith.addf %81, %84 : vector<64x128xf32>
    %c0_72 = arith.constant 0 : index
    %c0_73 = arith.constant 0 : index
    %86 = vector.load %arg6[%c0_72, %c0_73] : memref<64x128xf32, #tpu.memory_space<vmem>>, vector<64x128xf32>
    tpu.vector_store %arg6[%c0_72, %c0_73], %85 {strides = array<i32>} : memref<64x128xf32, #tpu.memory_space<vmem>>, vector<64x128xf32>,
    %c0_74 = arith.constant 0 : index
    %c0_75 = arith.constant 0 : index
    %87 = vector.load %arg6[%c0_74, %c0_75] : memref<64x128xf32, #tpu.memory_space<vmem>>, vector<64x128xf32>
    %88 = vector.shape_cast %87 : vector<64x128xf32> to vector<1x8x8x128xf32>
    %89 = arith.truncf %88 : vector<1x8x8x128xf32> to vector<1x8x8x128xbf16>
    %c0_76 = arith.constant 0 : index
    %c0_77 = arith.constant 0 : index
    %c0_78 = arith.constant 0 : index
    %c0_79 = arith.constant 0 : index
    %90 = vector.load %arg4[%c0_76, %c0_77, %c0_78, %c0_79] : memref<1x8x8x128xbf16, #tpu.memory_space<vmem>>, vector<1x8x8x128xbf16>
    tpu.vector_store %arg4[%c0_76, %c0_77, %c0_78, %c0_79], %89 {strides = array<i32>} : memref<1x8x8x128xbf16, #tpu.memory_space<vmem>>, vector<1x8x8x128xbf16>,
    %cst_80 = arith.constant dense<0.000000e+00> : vector<128xf32>
    %91 = vector.multi_reduction <add>, %87, %cst_80 [0] : vector<64x128xf32> to vector<128xf32>
    %92 = vector.shape_cast %91 : vector<128xf32> to vector<1x128xf32>
    %93 = arith.mulf %87, %87 : vector<64x128xf32>
    %cst_81 = arith.constant dense<0.000000e+00> : vector<128xf32>
    %94 = vector.multi_reduction <add>, %93, %cst_81 [0] : vector<64x128xf32> to vector<128xf32>
    %95 = vector.shape_cast %94 : vector<128xf32> to vector<1x128xf32>
    %96 = tpu.concatenate %92, %95 in 0 : vector<1x128xf32>, vector<1x128xf32> -> vector<2x128xf32>
    %97 = vector.shape_cast %96 : vector<2x128xf32> to vector<1x1x2x128xf32>
    %c0_82 = arith.constant 0 : index
    %c0_83 = arith.constant 0 : index
    %c0_84 = arith.constant 0 : index
    %c0_85 = arith.constant 0 : index
    %98 = vector.load %arg5[%c0_82, %c0_83, %c0_84, %c0_85] : memref<1x1x2x128xf32, #tpu.memory_space<vmem>>, vector<1x1x2x128xf32>
    tpu.vector_store %arg5[%c0_82, %c0_83, %c0_84, %c0_85], %97 {strides = array<i32>} : memref<1x1x2x128xf32, #tpu.memory_space<vmem>>, vector<1x1x2x128xf32>,
    return
  }
  func.func @transform_0(%arg0: i32, %arg1: i32) -> (i32, i32, i32, i32) {
    %c0_i32 = arith.constant 0 : i32
    %c0_i32_0 = arith.constant 0 : i32
    %c0_i32_1 = arith.constant 0 : i32
    %c0_i32_2 = arith.constant 0 : i32
    return %arg0, %c0_i32, %c0_i32_0, %c0_i32_1 : i32, i32, i32, i32
  }
  func.func @transform_1(%arg0: i32, %arg1: i32) -> (i32, i32, i32) {
    %c0_i32 = arith.constant 0 : i32
    %c0_i32_0 = arith.constant 0 : i32
    %c0_i32_1 = arith.constant 0 : i32
    %c0_i32_2 = arith.constant 0 : i32
    return %c0_i32, %c0_i32_0, %c0_i32_1 : i32, i32, i32
  }
  func.func @transform_2(%arg0: i32, %arg1: i32) -> (i32, i32, i32, i32) {
    %c0_i32 = arith.constant 0 : i32
    %c0_i32_0 = arith.constant 0 : i32
    %c0_i32_1 = arith.constant 0 : i32
    return %arg0, %arg1, %c0_i32, %c0_i32_0 : i32, i32, i32, i32
  }
  func.func @transform_3(%arg0: i32, %arg1: i32) -> (i32, i32, i32, i32) {
    %c0_i32 = arith.constant 0 : i32
    %c0_i32_0 = arith.constant 0 : i32
    %c0_i32_1 = arith.constant 0 : i32
    return %arg0, %arg1, %c0_i32, %c0_i32_0 : i32, i32, i32, i32
  }
}

module attributes {stable_mosaic.version = 11 : i64} {
  func.func @_conv_bn_stats_kernel(%arg0: i32, %arg1: i32, %arg2: memref<1x8x8x128xbf16, #tpu.memory_space<vmem>>, %arg3: memref<1x128x128xbf16, #tpu.memory_space<vmem>>, %arg4: memref<1x8x8x128xbf16, #tpu.memory_space<vmem>>, %arg5: memref<1x1x2x128xf32, #tpu.memory_space<vmem>>, %arg6: memref<64x128xf32, #tpu.memory_space<vmem>>) attributes {dimension_semantics = [#tpu.dimension_semantics<parallel>, #tpu.dimension_semantics<parallel>], iteration_bounds = array<i64: 2, 1>, scalar_prefetch = 0 : i64, scratch_operands = 1 : i64, tpu.core_type = #tpu.core_type<tc>, window_params = [{transform_indices = @transform_0, window_bounds = array<i64: 1, 8, 8, 128>}, {pipeline_mode = #tpu.pipeline_mode<synchronous>, transform_indices = @transform_1, window_bounds = array<i64: 1, 128, 128>}, {transform_indices = @transform_2, window_bounds = array<i64: 1, 8, 8, 128>}, {transform_indices = @transform_3, window_bounds = array<i64: 1, 1, 2, 128>}]} {
    %c8_i32 = arith.constant 8 : i32
    %0 = arith.muli %arg1, %c8_i32 : i32
    %cst = arith.constant 0.000000e+00 : f32
    %1 = vector.broadcast %cst : f32 to vector<64x128xf32>
    %c0 = arith.constant 0 : index
    %c0_0 = arith.constant 0 : index
    %2 = vector.load %arg6[%c0, %c0_0] : memref<64x128xf32, #tpu.memory_space<vmem>>, vector<64x128xf32>
    tpu.vector_store %arg6[%c0, %c0_0], %1 {strides = array<i32>} : memref<64x128xf32, #tpu.memory_space<vmem>>, vector<64x128xf32>,
    %c0_i32 = arith.constant 0 : i32
    %3 = arith.addi %0, %c0_i32 : i32
    %c0_1 = arith.constant 0 : index
    %4 = arith.index_cast %3 : i32 to index
    %c0_2 = arith.constant 0 : index
    %c0_3 = arith.constant 0 : index
    %5 = vector.load %arg2[%c0_1, %4, %c0_2, %c0_3] : memref<1x8x8x128xbf16, #tpu.memory_space<vmem>>, vector<1x8x8x128xbf16>
    %6 = vector.shape_cast %5 : vector<1x8x8x128xbf16> to vector<8x8x128xbf16>
    %7 = vector.shape_cast %6 : vector<8x8x128xbf16> to vector<64x128xbf16>
    %c0_4 = arith.constant 0 : index
    %c0_5 = arith.constant 0 : index
    %8 = vector.load %arg6[%c0_4, %c0_5] : memref<64x128xf32, #tpu.memory_space<vmem>>, vector<64x128xf32>
    %c0_6 = arith.constant 0 : index
    %c0_7 = arith.constant 0 : index
    %c0_8 = arith.constant 0 : index
    %9 = vector.load %arg3[%c0_6, %c0_7, %c0_8] : memref<1x128x128xbf16, #tpu.memory_space<vmem>>, vector<1x128x128xbf16>
    %10 = vector.shape_cast %9 : vector<1x128x128xbf16> to vector<128x128xbf16>
    %cst_9 = arith.constant dense<0.000000e+00> : vector<64x128xf32>
    %11 = tpu.matmul %7, %10, %cst_9 {dimension_numbers = #tpu.dot_dimension_numbers<[1], [0], [0], [1], [0, 0, 1, 1], [], []>} : vector<64x128xbf16>, vector<128x128xbf16>, vector<64x128xf32> -> vector<64x128xf32>
    %12 = arith.addf %8, %11 : vector<64x128xf32>
    %c0_10 = arith.constant 0 : index
    %c0_11 = arith.constant 0 : index
    %13 = vector.load %arg6[%c0_10, %c0_11] : memref<64x128xf32, #tpu.memory_space<vmem>>, vector<64x128xf32>
    tpu.vector_store %arg6[%c0_10, %c0_11], %12 {strides = array<i32>} : memref<64x128xf32, #tpu.memory_space<vmem>>, vector<64x128xf32>,
    %c0_12 = arith.constant 0 : index
    %c0_13 = arith.constant 0 : index
    %14 = vector.load %arg6[%c0_12, %c0_13] : memref<64x128xf32, #tpu.memory_space<vmem>>, vector<64x128xf32>
    %15 = vector.shape_cast %14 : vector<64x128xf32> to vector<1x8x8x128xf32>
    %16 = arith.truncf %15 : vector<1x8x8x128xf32> to vector<1x8x8x128xbf16>
    %c0_14 = arith.constant 0 : index
    %c0_15 = arith.constant 0 : index
    %c0_16 = arith.constant 0 : index
    %c0_17 = arith.constant 0 : index
    %17 = vector.load %arg4[%c0_14, %c0_15, %c0_16, %c0_17] : memref<1x8x8x128xbf16, #tpu.memory_space<vmem>>, vector<1x8x8x128xbf16>
    tpu.vector_store %arg4[%c0_14, %c0_15, %c0_16, %c0_17], %16 {strides = array<i32>} : memref<1x8x8x128xbf16, #tpu.memory_space<vmem>>, vector<1x8x8x128xbf16>,
    %cst_18 = arith.constant dense<0.000000e+00> : vector<128xf32>
    %18 = vector.multi_reduction <add>, %14, %cst_18 [0] : vector<64x128xf32> to vector<128xf32>
    %19 = vector.shape_cast %18 : vector<128xf32> to vector<1x128xf32>
    %20 = arith.mulf %14, %14 : vector<64x128xf32>
    %cst_19 = arith.constant dense<0.000000e+00> : vector<128xf32>
    %21 = vector.multi_reduction <add>, %20, %cst_19 [0] : vector<64x128xf32> to vector<128xf32>
    %22 = vector.shape_cast %21 : vector<128xf32> to vector<1x128xf32>
    %23 = tpu.concatenate %19, %22 in 0 : vector<1x128xf32>, vector<1x128xf32> -> vector<2x128xf32>
    %24 = vector.shape_cast %23 : vector<2x128xf32> to vector<1x1x2x128xf32>
    %c0_20 = arith.constant 0 : index
    %c0_21 = arith.constant 0 : index
    %c0_22 = arith.constant 0 : index
    %c0_23 = arith.constant 0 : index
    %25 = vector.load %arg5[%c0_20, %c0_21, %c0_22, %c0_23] : memref<1x1x2x128xf32, #tpu.memory_space<vmem>>, vector<1x1x2x128xf32>
    tpu.vector_store %arg5[%c0_20, %c0_21, %c0_22, %c0_23], %24 {strides = array<i32>} : memref<1x1x2x128xf32, #tpu.memory_space<vmem>>, vector<1x1x2x128xf32>,
    return
  }
  func.func @transform_0(%arg0: i32, %arg1: i32) -> (i32, i32, i32, i32) {
    %c0_i32 = arith.constant 0 : i32
    %c0_i32_0 = arith.constant 0 : i32
    %c0_i32_1 = arith.constant 0 : i32
    %c0_i32_2 = arith.constant 0 : i32
    return %arg0, %c0_i32, %c0_i32_0, %c0_i32_1 : i32, i32, i32, i32
  }
  func.func @transform_1(%arg0: i32, %arg1: i32) -> (i32, i32, i32) {
    %c0_i32 = arith.constant 0 : i32
    %c0_i32_0 = arith.constant 0 : i32
    %c0_i32_1 = arith.constant 0 : i32
    %c0_i32_2 = arith.constant 0 : i32
    return %c0_i32, %c0_i32_0, %c0_i32_1 : i32, i32, i32
  }
  func.func @transform_2(%arg0: i32, %arg1: i32) -> (i32, i32, i32, i32) {
    %c0_i32 = arith.constant 0 : i32
    %c0_i32_0 = arith.constant 0 : i32
    %c0_i32_1 = arith.constant 0 : i32
    return %arg0, %arg1, %c0_i32, %c0_i32_0 : i32, i32, i32, i32
  }
  func.func @transform_3(%arg0: i32, %arg1: i32) -> (i32, i32, i32, i32) {
    %c0_i32 = arith.constant 0 : i32
    %c0_i32_0 = arith.constant 0 : i32
    %c0_i32_1 = arith.constant 0 : i32
    return %arg0, %arg1, %c0_i32, %c0_i32_0 : i32, i32, i32, i32
  }
}

module attributes {stable_mosaic.version = 11 : i64} {
  func.func @_bn_act_kernel(%arg0: i32, %arg1: i32, %arg2: memref<1x8x8x128xbf16, #tpu.memory_space<vmem>>, %arg3: memref<1x1x1x128xf32, #tpu.memory_space<vmem>>, %arg4: memref<1x1x1x128xf32, #tpu.memory_space<vmem>>, %arg5: memref<1x8x8x128xbf16, #tpu.memory_space<vmem>>) attributes {dimension_semantics = [#tpu.dimension_semantics<parallel>, #tpu.dimension_semantics<parallel>], iteration_bounds = array<i64: 2, 1>, scalar_prefetch = 0 : i64, scratch_operands = 0 : i64, tpu.core_type = #tpu.core_type<tc>, window_params = [{transform_indices = @transform_0, window_bounds = array<i64: 1, 8, 8, 128>}, {pipeline_mode = #tpu.pipeline_mode<synchronous>, transform_indices = @transform_1, window_bounds = array<i64: 1, 1, 1, 128>}, {pipeline_mode = #tpu.pipeline_mode<synchronous>, transform_indices = @transform_2, window_bounds = array<i64: 1, 1, 1, 128>}, {transform_indices = @transform_3, window_bounds = array<i64: 1, 8, 8, 128>}]} {
    %c0 = arith.constant 0 : index
    %c0_0 = arith.constant 0 : index
    %c0_1 = arith.constant 0 : index
    %c0_2 = arith.constant 0 : index
    %0 = vector.load %arg2[%c0, %c0_0, %c0_1, %c0_2] : memref<1x8x8x128xbf16, #tpu.memory_space<vmem>>, vector<1x8x8x128xbf16>
    %1 = arith.extf %0 : vector<1x8x8x128xbf16> to vector<1x8x8x128xf32>
    %c0_3 = arith.constant 0 : index
    %c0_4 = arith.constant 0 : index
    %c0_5 = arith.constant 0 : index
    %c0_6 = arith.constant 0 : index
    %2 = vector.load %arg3[%c0_3, %c0_4, %c0_5, %c0_6] : memref<1x1x1x128xf32, #tpu.memory_space<vmem>>, vector<1x1x1x128xf32>
    %3 = vector.broadcast %2 : vector<1x1x1x128xf32> to vector<1x8x8x128xf32>
    %4 = arith.mulf %1, %3 : vector<1x8x8x128xf32>
    %c0_7 = arith.constant 0 : index
    %c0_8 = arith.constant 0 : index
    %c0_9 = arith.constant 0 : index
    %c0_10 = arith.constant 0 : index
    %5 = vector.load %arg4[%c0_7, %c0_8, %c0_9, %c0_10] : memref<1x1x1x128xf32, #tpu.memory_space<vmem>>, vector<1x1x1x128xf32>
    %6 = vector.broadcast %5 : vector<1x1x1x128xf32> to vector<1x8x8x128xf32>
    %7 = arith.addf %4, %6 : vector<1x8x8x128xf32>
    %8 = arith.truncf %7 : vector<1x8x8x128xf32> to vector<1x8x8x128xbf16>
    %c0_11 = arith.constant 0 : index
    %c0_12 = arith.constant 0 : index
    %c0_13 = arith.constant 0 : index
    %c0_14 = arith.constant 0 : index
    %9 = vector.load %arg5[%c0_11, %c0_12, %c0_13, %c0_14] : memref<1x8x8x128xbf16, #tpu.memory_space<vmem>>, vector<1x8x8x128xbf16>
    tpu.vector_store %arg5[%c0_11, %c0_12, %c0_13, %c0_14], %8 {strides = array<i32>} : memref<1x8x8x128xbf16, #tpu.memory_space<vmem>>, vector<1x8x8x128xbf16>,
    return
  }
  func.func @transform_0(%arg0: i32, %arg1: i32) -> (i32, i32, i32, i32) {
    %c0_i32 = arith.constant 0 : i32
    %c0_i32_0 = arith.constant 0 : i32
    %c0_i32_1 = arith.constant 0 : i32
    return %arg0, %arg1, %c0_i32, %c0_i32_0 : i32, i32, i32, i32
  }
  func.func @transform_1(%arg0: i32, %arg1: i32) -> (i32, i32, i32, i32) {
    %c0_i32 = arith.constant 0 : i32
    %c0_i32_0 = arith.constant 0 : i32
    %c0_i32_1 = arith.constant 0 : i32
    %c0_i32_2 = arith.constant 0 : i32
    %c0_i32_3 = arith.constant 0 : i32
    return %c0_i32, %c0_i32_0, %c0_i32_1, %c0_i32_2 : i32, i32, i32, i32
  }
  func.func @transform_2(%arg0: i32, %arg1: i32) -> (i32, i32, i32, i32) {
    %c0_i32 = arith.constant 0 : i32
    %c0_i32_0 = arith.constant 0 : i32
    %c0_i32_1 = arith.constant 0 : i32
    %c0_i32_2 = arith.constant 0 : i32
    %c0_i32_3 = arith.constant 0 : i32
    return %c0_i32, %c0_i32_0, %c0_i32_1, %c0_i32_2 : i32, i32, i32, i32
  }
  func.func @transform_3(%arg0: i32, %arg1: i32) -> (i32, i32, i32, i32) {
    %c0_i32 = arith.constant 0 : i32
    %c0_i32_0 = arith.constant 0 : i32
    %c0_i32_1 = arith.constant 0 : i32
    return %arg0, %arg1, %c0_i32, %c0_i32_0 : i32, i32, i32, i32
  }
}

module attributes {stable_mosaic.version = 11 : i64} {
  func.func @_bn_add_relu_kernel(%arg0: i32, %arg1: i32, %arg2: memref<1x8x8x128xbf16, #tpu.memory_space<vmem>>, %arg3: memref<1x1x1x128xf32, #tpu.memory_space<vmem>>, %arg4: memref<1x1x1x128xf32, #tpu.memory_space<vmem>>, %arg5: memref<1x8x8x128xbf16, #tpu.memory_space<vmem>>, %arg6: memref<1x8x8x128xf32, #tpu.memory_space<vmem>>) attributes {dimension_semantics = [#tpu.dimension_semantics<parallel>, #tpu.dimension_semantics<parallel>], iteration_bounds = array<i64: 2, 1>, scalar_prefetch = 0 : i64, scratch_operands = 0 : i64, tpu.core_type = #tpu.core_type<tc>, window_params = [{transform_indices = @transform_0, window_bounds = array<i64: 1, 8, 8, 128>}, {pipeline_mode = #tpu.pipeline_mode<synchronous>, transform_indices = @transform_1, window_bounds = array<i64: 1, 1, 1, 128>}, {pipeline_mode = #tpu.pipeline_mode<synchronous>, transform_indices = @transform_2, window_bounds = array<i64: 1, 1, 1, 128>}, {transform_indices = @transform_3, window_bounds = array<i64: 1, 8, 8, 128>}, {transform_indices = @transform_4, window_bounds = array<i64: 1, 8, 8, 128>}]} {
    %c0 = arith.constant 0 : index
    %c0_0 = arith.constant 0 : index
    %c0_1 = arith.constant 0 : index
    %c0_2 = arith.constant 0 : index
    %0 = vector.load %arg2[%c0, %c0_0, %c0_1, %c0_2] : memref<1x8x8x128xbf16, #tpu.memory_space<vmem>>, vector<1x8x8x128xbf16>
    %1 = arith.extf %0 : vector<1x8x8x128xbf16> to vector<1x8x8x128xf32>
    %c0_3 = arith.constant 0 : index
    %c0_4 = arith.constant 0 : index
    %c0_5 = arith.constant 0 : index
    %c0_6 = arith.constant 0 : index
    %2 = vector.load %arg3[%c0_3, %c0_4, %c0_5, %c0_6] : memref<1x1x1x128xf32, #tpu.memory_space<vmem>>, vector<1x1x1x128xf32>
    %3 = vector.broadcast %2 : vector<1x1x1x128xf32> to vector<1x8x8x128xf32>
    %4 = arith.mulf %1, %3 : vector<1x8x8x128xf32>
    %c0_7 = arith.constant 0 : index
    %c0_8 = arith.constant 0 : index
    %c0_9 = arith.constant 0 : index
    %c0_10 = arith.constant 0 : index
    %5 = vector.load %arg4[%c0_7, %c0_8, %c0_9, %c0_10] : memref<1x1x1x128xf32, #tpu.memory_space<vmem>>, vector<1x1x1x128xf32>
    %6 = vector.broadcast %5 : vector<1x1x1x128xf32> to vector<1x8x8x128xf32>
    %7 = arith.addf %4, %6 : vector<1x8x8x128xf32>
    %c0_11 = arith.constant 0 : index
    %c0_12 = arith.constant 0 : index
    %c0_13 = arith.constant 0 : index
    %c0_14 = arith.constant 0 : index
    %8 = vector.load %arg5[%c0_11, %c0_12, %c0_13, %c0_14] : memref<1x8x8x128xbf16, #tpu.memory_space<vmem>>, vector<1x8x8x128xbf16>
    %9 = arith.extf %8 : vector<1x8x8x128xbf16> to vector<1x8x8x128xf32>
    %10 = arith.addf %7, %9 : vector<1x8x8x128xf32>
    %cst = arith.constant 0.000000e+00 : f32
    %11 = vector.broadcast %cst : f32 to vector<1x8x8x128xf32>
    %12 = arith.maximumf %10, %11 : vector<1x8x8x128xf32>
    %c0_15 = arith.constant 0 : index
    %c0_16 = arith.constant 0 : index
    %c0_17 = arith.constant 0 : index
    %c0_18 = arith.constant 0 : index
    %13 = vector.load %arg6[%c0_15, %c0_16, %c0_17, %c0_18] : memref<1x8x8x128xf32, #tpu.memory_space<vmem>>, vector<1x8x8x128xf32>
    tpu.vector_store %arg6[%c0_15, %c0_16, %c0_17, %c0_18], %12 {strides = array<i32>} : memref<1x8x8x128xf32, #tpu.memory_space<vmem>>, vector<1x8x8x128xf32>,
    return
  }
  func.func @transform_0(%arg0: i32, %arg1: i32) -> (i32, i32, i32, i32) {
    %c0_i32 = arith.constant 0 : i32
    %c0_i32_0 = arith.constant 0 : i32
    %c0_i32_1 = arith.constant 0 : i32
    return %arg0, %arg1, %c0_i32, %c0_i32_0 : i32, i32, i32, i32
  }
  func.func @transform_1(%arg0: i32, %arg1: i32) -> (i32, i32, i32, i32) {
    %c0_i32 = arith.constant 0 : i32
    %c0_i32_0 = arith.constant 0 : i32
    %c0_i32_1 = arith.constant 0 : i32
    %c0_i32_2 = arith.constant 0 : i32
    %c0_i32_3 = arith.constant 0 : i32
    return %c0_i32, %c0_i32_0, %c0_i32_1, %c0_i32_2 : i32, i32, i32, i32
  }
  func.func @transform_2(%arg0: i32, %arg1: i32) -> (i32, i32, i32, i32) {
    %c0_i32 = arith.constant 0 : i32
    %c0_i32_0 = arith.constant 0 : i32
    %c0_i32_1 = arith.constant 0 : i32
    %c0_i32_2 = arith.constant 0 : i32
    %c0_i32_3 = arith.constant 0 : i32
    return %c0_i32, %c0_i32_0, %c0_i32_1, %c0_i32_2 : i32, i32, i32, i32
  }
  func.func @transform_3(%arg0: i32, %arg1: i32) -> (i32, i32, i32, i32) {
    %c0_i32 = arith.constant 0 : i32
    %c0_i32_0 = arith.constant 0 : i32
    %c0_i32_1 = arith.constant 0 : i32
    return %arg0, %arg1, %c0_i32, %c0_i32_0 : i32, i32, i32, i32
  }
  func.func @transform_4(%arg0: i32, %arg1: i32) -> (i32, i32, i32, i32) {
    %c0_i32 = arith.constant 0 : i32
    %c0_i32_0 = arith.constant 0 : i32
    %c0_i32_1 = arith.constant 0 : i32
    return %arg0, %arg1, %c0_i32, %c0_i32_0 : i32, i32, i32, i32
  }
}

</mosaic_0001>

<llo_original>
// kernel: res_block.9
$region0: #{res_block.9}
  #allocation0 [shape = 'u32[]', space=smem, size = 0x4, offset = 0x4, fixed_abs, tag = 'smem constant byte address 0x4 - core index']
  #allocation1 [shape = 'u32[144,128]{1,0:T(1,128)}', space=vmem, size = 0x12000, scoped, tag = 'internal scratch']
  %s0 = inlined_call_operand.vmem [shape: bf16[2,8,8,128], index: 0, kind: input, shape index: {}]
  %s1 = inlined_call_operand.vmem [shape: f32[1,1,1,128], index: 1, kind: input, shape index: {}]
  %s2 = inlined_call_operand.vmem [shape: f32[1,1,1,128], index: 2, kind: input, shape index: {}]
  %s3 = inlined_call_operand.vmem [shape: bf16[2,8,8,128], index: 3, kind: output, shape index: {}]
  %s4 = sld [smem:[#allocation0]]
  $region45: #{res_block.9} parent=0
    _
  %s6 = ssub.s32 1, %s4
  %s7 = scalar_select 0, %s6, %s4
  loop: start=0, step=1, limit=4
  $region2: #{res_block.9} parent=0 // loop_pre_header
    _
  $region3: #{res_block.9} parent=0 // loop_header
    %s9 = sphi 0, %s13
    %p10 = scmp.ge.s32.totalorder %s9, 4
    %s16 = sphi 0, %s28
    %s17 = sphi 0, %s24
    %s18 = sphi 0, %s16
    %s19 = sphi 0, %s17
    %s20 = sphi 0, %s18
    %s21 = sphi 0, %s19
    %s33 = sphi 0, %s35
    %s36 = sphi 0, %s33
    %s37 = sphi 0, %s36
    %s53 = sphi 0, %s37
    %s57 = sphi 0, %s57
    %s59 = sphi 0, %s57
    %s60 = sphi 0, %s59
    %s74 = sphi 0, %s60
    %s78 = sphi 0, %s78
    %s80 = sphi 0, %s78
    %s81 = sphi 0, %s80
    %s95 = sphi 0, %s81
    %s103 = sphi 0, %s105
    %s106 = sphi 0, %s103
    %s107 = sphi 0, %s106
    %s123 = sphi 0, %s107
  $region4: #{res_block.9} parent=0 // loop_header_branch
    %12 = sbr.rel (%p10) target = $region8
  $region5: #{res_block.9} parent=0 // loop_body
    %s14 = ssub.s32 %s9, 1
    %s15 = ssub.s32 %s9, 2
    %s22 = sadd.s32 1, %s17
    %p23 = scmp.ge.s32.totalorder %s22, 1
    %s24 = scalar_select %p23, 0, %s22
    %s25 = sadd.s32 1, %s16
    %s26 = scalar_select %p23, %s25, %s16
    %p27 = scmp.ge.s32.totalorder %s26, 2
    %s28 = scalar_select %p27, 0, %s26
    %s29 = ssub.s32 %s16, %s28
    %s30 = ssub.s32 %s17, %s24
    %s31 = sor.u32 %s29, %s30
    %p32 = scmp.eq.s32.totalorder %s31, 0
    %s34 = sadd.s32 %s33, 1
    %s35 = scalar_select %p32, %s33, %s34
    %p38 = pneg %p32
    %p39 = scmp.eq.s32.totalorder %s9, 1
    %p40 = por %p38, %p39
    %p41 = scmp.ne.s32.totalorder %s33, %s36
    %p42 = scmp.eq.s32.totalorder %s9, 0
    %p43 = por %p41, %p42
    %p44 = scmp.ne.s32.totalorder %s33, %s36
    %p45 = scmp.eq.s32.totalorder %s14, 1
    %p46 = por %p44, %p45
    %p47 = scmp.ne.s32.totalorder %s36, %s37
    %p48 = scmp.eq.s32.totalorder %s14, 0
    %p49 = por %p47, %p48
    %p50 = scmp.ne.s32.totalorder %s36, %s37
    %p51 = scmp.eq.s32.totalorder %s15, 1
    %p52 = por %p50, %p51
    %p54 = scmp.ne.s32.totalorder %s37, %s53
    %p55 = scmp.eq.s32.totalorder %s15, 0
    %p56 = por %p54, %p55
    %s58 = sadd.s32 %s57, 1
    %p61 = scmp.eq.s32.totalorder %s9, 1
    %p62 = scmp.ne.s32.totalorder %s57, %s59
    %p63 = scmp.eq.s32.totalorder %s9, 0
    %p64 = por %p62, %p63
    %p65 = scmp.ne.s32.totalorder %s57, %s59
    %p66 = scmp.eq.s32.totalorder %s14, 1
    %p67 = por %p65, %p66
    %p68 = scmp.ne.s32.totalorder %s59, %s60
    %p69 = scmp.eq.s32.totalorder %s14, 0
    %p70 = por %p68, %p69
    %p71 = scmp.ne.s32.totalorder %s59, %s60
    %p72 = scmp.eq.s32.totalorder %s15, 1
    %p73 = por %p71, %p72
    %p75 = scmp.ne.s32.totalorder %s60, %s74
    %p76 = scmp.eq.s32.totalorder %s15, 0
    %p77 = por %p75, %p76
    %s79 = sadd.s32 %s78, 1
    %p82 = scmp.eq.s32.totalorder %s9, 1
    %p83 = scmp.ne.s32.totalorder %s78, %s80
    %p84 = scmp.eq.s32.totalorder %s9, 0
    %p85 = por %p83, %p84
    %p86 = scmp.ne.s32.totalorder %s78, %s80
    %p87 = scmp.eq.s32.totalorder %s14, 1
    %p88 = por %p86, %p87
    %p89 = scmp.ne.s32.totalorder %s80, %s81
    %p90 = scmp.eq.s32.totalorder %s14, 0
    %p91 = por %p89, %p90
    %p92 = scmp.ne.s32.totalorder %s80, %s81
    %p93 = scmp.eq.s32.totalorder %s15, 1
    %p94 = por %p92, %p93
    %p96 = scmp.ne.s32.totalorder %s81, %s95
    %p97 = scmp.eq.s32.totalorder %s15, 0
    %p98 = por %p96, %p97
    %s99 = ssub.s32 %s16, %s28
    %s100 = ssub.s32 %s17, %s24
    %s101 = sor.u32 %s99, %s100
    %p102 = scmp.eq.s32.totalorder %s101, 0
    %s104 = sadd.s32 %s103, 1
    %s105 = scalar_select %p102, %s103, %s104
    %p108 = pneg %p102
    %p109 = scmp.eq.s32.totalorder %s9, 1
    %p110 = por %p108, %p109
    %p111 = scmp.ne.s32.totalorder %s103, %s106
    %p112 = scmp.eq.s32.totalorder %s9, 0
    %p113 = por %p111, %p112
    %p114 = scmp.ne.s32.totalorder %s103, %s106
    %p115 = scmp.eq.s32.totalorder %s14, 1
    %p116 = por %p114, %p115
    %p117 = scmp.ne.s32.totalorder %s106, %s107
    %p118 = scmp.eq.s32.totalorder %s14, 0
    %p119 = por %p117, %p118
    %p120 = scmp.ne.s32.totalorder %s106, %s107
    %p121 = scmp.eq.s32.totalorder %s15, 1
    %p122 = por %p120, %p121
    %p124 = scmp.ne.s32.totalorder %s107, %s123
    %p125 = scmp.eq.s32.totalorder %s15, 0
    %p126 = por %p124, %p125
    %p127 = scmp.le.s32.totalorder 1, %s9
    %p128 = scmp.lt.s32.totalorder %s9, 3
    %p129 = pnand %p127, %p128
    %p130 = pneg %p129
    // Predicated region
    $region9: #{res_block.9} parent=5 // pred_check
      _
    $region10: #{res_block.9} parent=5 // pred_check_branch
      %132 = sbr.rel (%p129) target = $region12
    $region11: #{res_block.9} parent=5 // pred_region
      %s133 = ssub.s32 %s9, 1
      // Predicated region
      $region13: #{res_block.9} parent=11 // pred_check
        %p134 = pneg %p70
      $region14: #{res_block.9} parent=11 // pred_check_branch
        %136 = sbr.rel (%p134) target = $region16
      $region15: #{res_block.9} parent=11 // pred_region
        _
      $region16: #{res_block.9} parent=11 // pred_fallthru
        _
      // Predicated region
      $region17: #{res_block.9} parent=11 // pred_check
        %p137 = pneg %p91
      $region18: #{res_block.9} parent=11 // pred_check_branch
        %139 = sbr.rel (%p137) target = $region20
      $region19: #{res_block.9} parent=11 // pred_region
        _
      $region20: #{res_block.9} parent=11 // pred_fallthru
        _
    $region12: #{res_block.9} parent=5 // pred_fallthru
      _
    %p140 = scmp.lt.s32.totalorder %s9, 2
    // Predicated region
    $region21: #{res_block.9} parent=5 // pred_check
      %p141 = pneg %p140
    $region22: #{res_block.9} parent=5 // pred_check_branch
      %143 = sbr.rel (%p141) target = $region24
    $region23: #{res_block.9} parent=5 // pred_region
      // Predicated region
      $region25: #{res_block.9} parent=23 // pred_check
        %p144 = pneg %p43
      $region26: #{res_block.9} parent=23 // pred_check_branch
        %146 = sbr.rel (%p144) target = $region28
      $region27: #{res_block.9} parent=23 // pred_region
        %s147 = smul.u32 8, %s17
        %p148 = scmp.lt.s32.totalorder %s16, 1
        %s149 = scalar_select %p148, %s16, 1
        %p150 = scmp.lt.s32.totalorder %s147, 7
        %s151 = scalar_select %p150, %s147, 7
        %s152 = smul.addr %s149, 8
        %s153 = sadd.s32 %s151, %s152
        %s154 = smul.addr %s153, 4
        %s155 = scalar_lea.vmem %s0, %s154
        %s156 = smul.u32 8, %s17
      $region28: #{res_block.9} parent=23 // pred_fallthru
        _
    $region24: #{res_block.9} parent=5 // pred_fallthru
      _
    %p157 = scmp.le.s32.totalorder 1, %s9
    %p158 = scmp.lt.s32.totalorder %s9, 3
    %p159 = pnand %p157, %p158
    %p160 = pneg %p159
    // Predicated region
    $region29: #{res_block.9} parent=5 // pred_check
      _
    $region30: #{res_block.9} parent=5 // pred_check_branch
      %162 = sbr.rel (%p159) target = $region32
    $region31: #{res_block.9} parent=5 // pred_region
      %s163 = ssub.s32 %s9, 1
      %s164 = smul.u32 8, %s19
      %p165 = scmp.lt.s32.totalorder %s18, 1
      %s166 = scalar_select %p165, %s18, 1
      %p167 = scmp.lt.s32.totalorder %s164, 7
      %s168 = scalar_select %p167, %s164, 7
      %s169 = smul.addr %s166, 8
      %s170 = sadd.s32 %s168, %s169
      %s171 = smul.addr %s170, 4
      %s172 = scalar_lea.vmem %s0, %s171
      %p173 = pneg %p49
      %p174 = pneg %p46
      %p175 = pneg %p70
      %p176 = pneg %p67
      %p177 = pneg %p91
      %p178 = pneg %p88
      %p179 = pneg %p119
      %p180 = pneg %p116
      %s181 = smul.u32 8, %s19
      %p182 = scmp.lt.s32.totalorder %s18, 1
      %s183 = scalar_select %p182, %s18, 1
      %p184 = scmp.lt.s32.totalorder %s181, 7
      %s185 = scalar_select %p184, %s181, 7
      %s186 = smul.addr %s183, 8
      %s187 = sadd.s32 %s185, %s186
      %s188 = smul.addr %s187, 4
      %s189 = scalar_lea.vmem %s3, %s188
      %s190 = smul.u32 8, %s19
      %p191 = scmp.lt.s32.totalorder %s18, 1
      %s192 = scalar_select %p191, %s18, 1
      %p193 = scmp.lt.s32.totalorder %s190, 7
      %s194 = scalar_select %p193, %s190, 7
      %s195 = smul.addr %s192, 8
      %s196 = sadd.s32 %s194, %s195
      %s197 = smul.addr %s196, 4
      %s198 = scalar_lea.vmem %s0, %s197
      %s199 = smul.u32 8, %s19
      %s200 = smul.u32 8, %s19
      %p201 = scmp.lt.s32.totalorder %s18, 1
      %s202 = scalar_select %p201, %s18, 1
      %p203 = scmp.lt.s32.totalorder %s200, 7
      %s204 = scalar_select %p203, %s200, 7
      %s205 = smul.addr %s202, 8
      %s206 = sadd.s32 %s204, %s205
      %s207 = smul.addr %s206, 4
      %s208 = scalar_lea.vmem %s3, %s207
      %s209 = smul.u32 8, %s19
      %v210 = vld [vmem:[%s198] sm:$0xf]
      %v211 = vld [vmem:[%s198 + $0x4] sm:$0xf]
      %v212 = vld [vmem:[%s198 + $0x8] sm:$0xf]
      %v213 = vld [vmem:[%s198 + $0xc] sm:$0xf]
      %v214 = vld [vmem:[%s198 + $0x10] sm:$0xf]
      %v215 = vld [vmem:[%s198 + $0x14] sm:$0xf]
      %v216 = vld [vmem:[%s198 + $0x18] sm:$0xf]
      %v217 = vld [vmem:[%s198 + $0x1c] sm:$0xf]
      %v218 = vunpack.c.l.bf16 %v210
      %v219 = vunpack.c.l.bf16 %v211
      %v220 = vunpack.c.l.bf16 %v212
      %v221 = vunpack.c.l.bf16 %v213
      %v222 = vunpack.c.l.bf16 %v214
      %v223 = vunpack.c.l.bf16 %v215
      %v224 = vunpack.c.l.bf16 %v216
      %v225 = vunpack.c.l.bf16 %v217
      %v226 = vld [vmem:[%s1] sm:$0x1]
      %v228 = vlaneseq
      %v229 = vshrl.u32 %v228, 7
      %v230 = vsub.s32 0, %v229
      %v231 = vrot.slane %v226, %v230
      %v233 = vmul.f32 %v218, %v231
      %v234 = vmul.f32 %v219, %v231
      %v235 = vmul.f32 %v220, %v231
      %v236 = vmul.f32 %v221, %v231
      %v237 = vmul.f32 %v222, %v231
      %v238 = vmul.f32 %v223, %v231
      %v239 = vmul.f32 %v224, %v231
      %v240 = vmul.f32 %v225, %v231
      %v241 = vld [vmem:[%s2] sm:$0x1]
      %v243 = vlaneseq
      %v244 = vshrl.u32 %v243, 7
      %v245 = vsub.s32 0, %v244
      %v246 = vrot.slane %v241, %v245
      %v248 = vadd.f32 %v233, %v246
      %v249 = vadd.f32 %v234, %v246
      %v250 = vadd.f32 %v235, %v246
      %v251 = vadd.f32 %v236, %v246
      %v252 = vadd.f32 %v237, %v246
      %v253 = vadd.f32 %v238, %v246
      %v254 = vadd.f32 %v239, %v246
      %v255 = vadd.f32 %v240, %v246
      %v256 = vmax.f32 %v248, 0.0
      %v257 = vmax.f32 %v249, 0.0
      %v258 = vmax.f32 %v250, 0.0
      %v259 = vmax.f32 %v251, 0.0
      %v260 = vmax.f32 %v252, 0.0
      %v261 = vmax.f32 %v253, 0.0
      %v262 = vmax.f32 %v254, 0.0
      %v263 = vmax.f32 %v255, 0.0
      %v264 = vpack.c.bf16 %v256, %v256
      %v265 = vpack.c.bf16 %v257, %v257
      %v266 = vpack.c.bf16 %v258, %v258
      %v267 = vpack.c.bf16 %v259, %v259
      %v268 = vpack.c.bf16 %v260, %v260
      %v269 = vpack.c.bf16 %v261, %v261
      %v270 = vpack.c.bf16 %v262, %v262
      %v271 = vpack.c.bf16 %v263, %v263
      %272 = vst [vmem:[%s208] sm:$0xf] %v264
      %273 = vst [vmem:[%s208 + $0x4] sm:$0xf] %v265
      %274 = vst [vmem:[%s208 + $0x8] sm:$0xf] %v266
      %275 = vst [vmem:[%s208 + $0xc] sm:$0xf] %v267
      %276 = vst [vmem:[%s208 + $0x10] sm:$0xf] %v268
      %277 = vst [vmem:[%s208 + $0x14] sm:$0xf] %v269
      %278 = vst [vmem:[%s208 + $0x18] sm:$0xf] %v270
      %279 = vst [vmem:[%s208 + $0x1c] sm:$0xf] %v271
      %s280 = smul.u32 8, %s19
      %p281 = scmp.lt.s32.totalorder %s18, 1
      %s282 = scalar_select %p281, %s18, 1
      %p283 = scmp.lt.s32.totalorder %s280, 7
      %s284 = scalar_select %p283, %s280, 7
      %s285 = smul.addr %s282, 8
      %s286 = sadd.s32 %s284, %s285
      %s287 = smul.addr %s286, 4
      %s288 = scalar_lea.vmem %s3, %s287
      // Predicated region
      $region33: #{res_block.9} parent=31 // pred_check
        %p289 = pneg %p116
      $region34: #{res_block.9} parent=31 // pred_check_branch
        %291 = sbr.rel (%p289) target = $region36
      $region35: #{res_block.9} parent=31 // pred_region
        %s292 = smul.u32 8, %s19
      $region36: #{res_block.9} parent=31 // pred_fallthru
        _
    $region32: #{res_block.9} parent=5 // pred_fallthru
      _
    %p293 = scmp.le.s32.totalorder 2, %s9
    // Predicated region
    $region37: #{res_block.9} parent=5 // pred_check
      %p294 = pneg %p293
    $region38: #{res_block.9} parent=5 // pred_check_branch
      %296 = sbr.rel (%p294) target = $region40
    $region39: #{res_block.9} parent=5 // pred_region
      %s297 = ssub.s32 %s9, 2
      // Predicated region
      $region41: #{res_block.9} parent=39 // pred_check
        %p298 = pneg %p122
      $region42: #{res_block.9} parent=39 // pred_check_branch
        %300 = sbr.rel (%p298) target = $region44
      $region43: #{res_block.9} parent=39 // pred_region
        %s301 = smul.u32 8, %s21
        %p302 = scmp.lt.s32.totalorder %s20, 1
        %s303 = scalar_select %p302, %s20, 1
        %p304 = scmp.lt.s32.totalorder %s301, 7
        %s305 = scalar_select %p304, %s301, 7
        %s306 = smul.addr %s303, 8
        %s307 = sadd.s32 %s305, %s306
        %s308 = smul.addr %s307, 4
        %s309 = scalar_lea.vmem %s3, %s308
      $region44: #{res_block.9} parent=39 // pred_fallthru
        _
    $region40: #{res_block.9} parent=5 // pred_fallthru
      _
  $region6: #{res_block.9} parent=0 // loop_footer
    %s13 = sadd.s32 1, %s9
  $region7: #{res_block.9} parent=0 // loop_footer_branch
    %8 = sbr.rel target = $region3
  $region8: #{res_block.9} parent=0 // loop_exit
    _

// kernel: res_block.13
$region0: #{res_block.13}
  #allocation0 [shape = 'u32[]', space=smem, size = 0x4, offset = 0x4, fixed_abs, tag = 'smem constant byte address 0x4 - core index']
  #allocation1 [shape = 'u32[144,128]{1,0:T(1,128)}', space=vmem, size = 0x12000, scoped, tag = 'internal scratch']
  #allocation2 [shape = 'f32[64,128]{1,0:T(8,128)}', space=vmem, size = 0x8000, scoped, tag = 'scratch operand']
  %s0 = inlined_call_operand.vmem [shape: bf16[2,8,8,128], index: 0, kind: input, shape index: {}]
  %s1 = inlined_call_operand.vmem [shape: bf16[1,128,128], index: 1, kind: input, shape index: {}]
  %s2 = inlined_call_operand.vmem [shape: bf16[2,8,8,128], index: 2, kind: output, shape index: {0}]
  %s3 = inlined_call_operand.vmem [shape: f32[2,1,2,128], index: 3, kind: output, shape index: {1}]
  %4 = xla_tuple %s2, %s3
  %s5 = sld [smem:[#allocation0]]
  $region49: #{res_block.13} parent=0
    _
  %s7 = ssub.s32 1, %s5
  %s8 = scalar_select 0, %s7, %s5
  loop: start=0, step=1, limit=4
  $region2: #{res_block.13} parent=0 // loop_pre_header
    _
  $region3: #{res_block.13} parent=0 // loop_header
    %s10 = sphi 0, %s14
    %p11 = scmp.ge.s32.totalorder %s10, 4
    %s17 = sphi 0, %s29
    %s18 = sphi 0, %s25
    %s19 = sphi 0, %s17
    %s20 = sphi 0, %s18
    %s21 = sphi 0, %s19
    %s22 = sphi 0, %s20
    %s32 = sphi 0, %s34
    %s35 = sphi 0, %s32
    %s36 = sphi 0, %s35
    %s52 = sphi 0, %s36
    %s56 = sphi 0, %s56
    %s58 = sphi 0, %s56
    %s59 = sphi 0, %s58
    %s73 = sphi 0, %s59
    %s81 = sphi 0, %s83
    %s84 = sphi 0, %s81
    %s85 = sphi 0, %s84
    %s101 = sphi 0, %s85
    %s109 = sphi 0, %s111
    %s112 = sphi 0, %s109
    %s113 = sphi 0, %s112
    %s129 = sphi 0, %s113
  $region4: #{res_block.13} parent=0 // loop_header_branch
    %13 = sbr.rel (%p11) target = $region8
  $region5: #{res_block.13} parent=0 // loop_body
    %s15 = ssub.s32 %s10, 1
    %s16 = ssub.s32 %s10, 2
    %s23 = sadd.s32 1, %s18
    %p24 = scmp.ge.s32.totalorder %s23, 1
    %s25 = scalar_select %p24, 0, %s23
    %s26 = sadd.s32 1, %s17
    %s27 = scalar_select %p24, %s26, %s17
    %p28 = scmp.ge.s32.totalorder %s27, 2
    %s29 = scalar_select %p28, 0, %s27
    %s30 = ssub.s32 %s17, %s29
    %p31 = scmp.eq.s32.totalorder %s30, 0
    %s33 = sadd.s32 %s32, 1
    %s34 = scalar_select %p31, %s32, %s33
    %p37 = pneg %p31
    %p38 = scmp.eq.s32.totalorder %s10, 1
    %p39 = por %p37, %p38
    %p40 = scmp.ne.s32.totalorder %s32, %s35
    %p41 = scmp.eq.s32.totalorder %s10, 0
    %p42 = por %p40, %p41
    %p43 = scmp.ne.s32.totalorder %s32, %s35
    %p44 = scmp.eq.s32.totalorder %s15, 1
    %p45 = por %p43, %p44
    %p46 = scmp.ne.s32.totalorder %s35, %s36
    %p47 = scmp.eq.s32.totalorder %s15, 0
    %p48 = por %p46, %p47
    %p49 = scmp.ne.s32.totalorder %s35, %s36
    %p50 = scmp.eq.s32.totalorder %s16, 1
    %p51 = por %p49, %p50
    %p53 = scmp.ne.s32.totalorder %s36, %s52
    %p54 = scmp.eq.s32.totalorder %s16, 0
    %p55 = por %p53, %p54
    %s57 = sadd.s32 %s56, 1
    %p60 = scmp.eq.s32.totalorder %s10, 1
    %p61 = scmp.ne.s32.totalorder %s56, %s58
    %p62 = scmp.eq.s32.totalorder %s10, 0
    %p63 = por %p61, %p62
    %p64 = scmp.ne.s32.totalorder %s56, %s58
    %p65 = scmp.eq.s32.totalorder %s15, 1
    %p66 = por %p64, %p65
    %p67 = scmp.ne.s32.totalorder %s58, %s59
    %p68 = scmp.eq.s32.totalorder %s15, 0
    %p69 = por %p67, %p68
    %p70 = scmp.ne.s32.totalorder %s58, %s59
    %p71 = scmp.eq.s32.totalorder %s16, 1
    %p72 = por %p70, %p71
    %p74 = scmp.ne.s32.totalorder %s59, %s73
    %p75 = scmp.eq.s32.totalorder %s16, 0
    %p76 = por %p74, %p75
    %s77 = ssub.s32 %s17, %s29
    %s78 = ssub.s32 %s18, %s25
    %s79 = sor.u32 %s77, %s78
    %p80 = scmp.eq.s32.totalorder %s79, 0
    %s82 = sadd.s32 %s81, 1
    %s83 = scalar_select %p80, %s81, %s82
    %p86 = pneg %p80
    %p87 = scmp.eq.s32.totalorder %s10, 1
    %p88 = por %p86, %p87
    %p89 = scmp.ne.s32.totalorder %s81, %s84
    %p90 = scmp.eq.s32.totalorder %s10, 0
    %p91 = por %p89, %p90
    %p92 = scmp.ne.s32.totalorder %s81, %s84
    %p93 = scmp.eq.s32.totalorder %s15, 1
    %p94 = por %p92, %p93
    %p95 = scmp.ne.s32.totalorder %s84, %s85
    %p96 = scmp.eq.s32.totalorder %s15, 0
    %p97 = por %p95, %p96
    %p98 = scmp.ne.s32.totalorder %s84, %s85
    %p99 = scmp.eq.s32.totalorder %s16, 1
    %p100 = por %p98, %p99
    %p102 = scmp.ne.s32.totalorder %s85, %s101
    %p103 = scmp.eq.s32.totalorder %s16, 0
    %p104 = por %p102, %p103
    %s105 = ssub.s32 %s17, %s29
    %s106 = ssub.s32 %s18, %s25
    %s107 = sor.u32 %s105, %s106
    %p108 = scmp.eq.s32.totalorder %s107, 0
    %s110 = sadd.s32 %s109, 1
    %s111 = scalar_select %p108, %s109, %s110
    %p114 = pneg %p108
    %p115 = scmp.eq.s32.totalorder %s10, 1
    %p116 = por %p114, %p115
    %p117 = scmp.ne.s32.totalorder %s109, %s112
    %p118 = scmp.eq.s32.totalorder %s10, 0
    %p119 = por %p117, %p118
    %p120 = scmp.ne.s32.totalorder %s109, %s112
    %p121 = scmp.eq.s32.totalorder %s15, 1
    %p122 = por %p120, %p121
    %p123 = scmp.ne.s32.totalorder %s112, %s113
    %p124 = scmp.eq.s32.totalorder %s15, 0
    %p125 = por %p123, %p124
    %p126 = scmp.ne.s32.totalorder %s112, %s113
    %p127 = scmp.eq.s32.totalorder %s16, 1
    %p128 = por %p126, %p127
    %p130 = scmp.ne.s32.totalorder %s113, %s129
    %p131 = scmp.eq.s32.totalorder %s16, 0
    %p132 = por %p130, %p131
    %p133 = scmp.le.s32.totalorder 1, %s10
    %p134 = scmp.lt.s32.totalorder %s10, 3
    %p135 = pnand %p133, %p134
    %p136 = pneg %p135
    // Predicated region
    $region9: #{res_block.13} parent=5 // pred_check
      _
    $region10: #{res_block.13} parent=5 // pred_check_branch
      %138 = sbr.rel (%p135) target = $region12
    $region11: #{res_block.13} parent=5 // pred_region
      %s139 = ssub.s32 %s10, 1
      // Predicated region
      $region13: #{res_block.13} parent=11 // pred_check
        %p140 = pneg %p69
      $region14: #{res_block.13} parent=11 // pred_check_branch
        %142 = sbr.rel (%p140) target = $region16
      $region15: #{res_block.13} parent=11 // pred_region
        _
      $region16: #{res_block.13} parent=11 // pred_fallthru
        _
    $region12: #{res_block.13} parent=5 // pred_fallthru
      _
    %p143 = scmp.lt.s32.totalorder %s10, 2
    // Predicated region
    $region17: #{res_block.13} parent=5 // pred_check
      %p144 = pneg %p143
    $region18: #{res_block.13} parent=5 // pred_check_branch
      %146 = sbr.rel (%p144) target = $region20
    $region19: #{res_block.13} parent=5 // pred_region
      // Predicated region
      $region21: #{res_block.13} parent=19 // pred_check
        %p147 = pneg %p42
      $region22: #{res_block.13} parent=19 // pred_check_branch
        %149 = sbr.rel (%p147) target = $region24
      $region23: #{res_block.13} parent=19 // pred_region
        %p150 = scmp.lt.s32.totalorder %s17, 1
        %s151 = scalar_select %p150, %s17, 1
        %s152 = smul.addr %s151, 8
        %s153 = smul.addr %s152, 4
        %s154 = scalar_lea.vmem %s0, %s153
      $region24: #{res_block.13} parent=19 // pred_fallthru
        _
    $region20: #{res_block.13} parent=5 // pred_fallthru
      _
    %p155 = scmp.le.s32.totalorder 1, %s10
    %p156 = scmp.lt.s32.totalorder %s10, 3
    %p157 = pnand %p155, %p156
    %p158 = pneg %p157
    // Predicated region
    $region25: #{res_block.13} parent=5 // pred_check
      _
    $region26: #{res_block.13} parent=5 // pred_check_branch
      %160 = sbr.rel (%p157) target = $region28
    $region27: #{res_block.13} parent=5 // pred_region
      %s161 = ssub.s32 %s10, 1
      %p162 = scmp.lt.s32.totalorder %s19, 1
      %s163 = scalar_select %p162, %s19, 1
      %s164 = smul.addr %s163, 8
      %s165 = smul.addr %s164, 4
      %s166 = scalar_lea.vmem %s0, %s165
      %p167 = pneg %p48
      %p168 = pneg %p45
      %p169 = pneg %p69
      %p170 = pneg %p66
      %p171 = pneg %p97
      %p172 = pneg %p94
      %s173 = smul.u32 8, %s20
      %p174 = scmp.lt.s32.totalorder %s19, 1
      %s175 = scalar_select %p174, %s19, 1
      %p176 = scmp.lt.s32.totalorder %s173, 7
      %s177 = scalar_select %p176, %s173, 7
      %s178 = smul.addr %s175, 8
      %s179 = sadd.s32 %s177, %s178
      %s180 = smul.addr %s179, 4
      %s181 = scalar_lea.vmem %s2, %s180
      %p182 = pneg %p125
      %p183 = pneg %p122
      %p184 = scmp.lt.s32.totalorder %s19, 1
      %s185 = scalar_select %p184, %s19, 1
      %p186 = scmp.lt.s32.totalorder %s20, 0
      %s187 = scalar_select %p186, %s20, 0
      %s188 = sadd.s32 %s187, %s185
      %s189 = smul.addr %s188, 2
      %s190 = scalar_lea.vmem %s3, %s189
      %p191 = scmp.lt.s32.totalorder %s19, 1
      %s192 = scalar_select %p191, %s19, 1
      %s193 = smul.addr %s192, 8
      %s194 = smul.addr %s193, 4
      %s195 = scalar_lea.vmem %s0, %s194
      %s196 = smul.u32 8, %s20
      %p197 = scmp.lt.s32.totalorder %s19, 1
      %s198 = scalar_select %p197, %s19, 1
      %p199 = scmp.lt.s32.totalorder %s196, 7
      %s200 = scalar_select %p199, %s196, 7
      %s201 = smul.addr %s198, 8
      %s202 = sadd.s32 %s200, %s201
      %s203 = smul.addr %s202, 4
      %s204 = scalar_lea.vmem %s2, %s203
      %s205 = smul.u32 8, %s20
      %p206 = scmp.lt.s32.totalorder %s19, 1
      %s207 = scalar_select %p206, %s19, 1
      %p208 = scmp.lt.s32.totalorder %s20, 0
      %s209 = scalar_select %p208, %s20, 0
      %s210 = sadd.s32 %s209, %s207
      %s211 = smul.addr %s210, 2
      %s212 = scalar_lea.vmem %s3, %s211
      %s214 = smul.u32 %s20, 8
      %215 = vst [vmem:[#allocation2] sm:$0xff] 0.0
      %216 = vst [vmem:[#allocation2 + $0x8] sm:$0xff] 0.0
      %217 = vst [vmem:[#allocation2 + $0x10] sm:$0xff] 0.0
      %218 = vst [vmem:[#allocation2 + $0x18] sm:$0xff] 0.0
      %219 = vst [vmem:[#allocation2 + $0x20] sm:$0xff] 0.0
      %220 = vst [vmem:[#allocation2 + $0x28] sm:$0xff] 0.0
      %221 = vst [vmem:[#allocation2 + $0x30] sm:$0xff] 0.0
      %222 = vst [vmem:[#allocation2 + $0x38] sm:$0xff] 0.0
      %s223 = smul.addr %s214, 4
      %s224 = scalar_lea.vmem %s195, %s223
      %v225 = vld [vmem:[%s224] sm:$0xf]
      %v226 = vld [vmem:[%s224 + $0x4] sm:$0xf]
      %v227 = vld [vmem:[%s224 + $0x8] sm:$0xf]
      %v228 = vld [vmem:[%s224 + $0xc] sm:$0xf]
      %v229 = vld [vmem:[%s224 + $0x10] sm:$0xf]
      %v230 = vld [vmem:[%s224 + $0x14] sm:$0xf]
      %v231 = vld [vmem:[%s224 + $0x18] sm:$0xf]
      %v232 = vld [vmem:[%s224 + $0x1c] sm:$0xf]
      %v233 = vld [vmem:[#allocation2] sm:$0xff]
      %v234 = vld [vmem:[#allocation2 + $0x8] sm:$0xff]
      %v235 = vld [vmem:[#allocation2 + $0x10] sm:$0xff]
      %v236 = vld [vmem:[#allocation2 + $0x18] sm:$0xff]
      %v237 = vld [vmem:[#allocation2 + $0x20] sm:$0xff]
      %v238 = vld [vmem:[#allocation2 + $0x28] sm:$0xff]
      %v239 = vld [vmem:[#allocation2 + $0x30] sm:$0xff]
      %v240 = vld [vmem:[#allocation2 + $0x38] sm:$0xff]
      %v241 = vld [vmem:[%s1] sm:$0xf]
      %v242 = vld [vmem:[%s1 + $0x4] sm:$0xf]
      %v243 = vld [vmem:[%s1 + $0x8] sm:$0xf]
      %v244 = vld [vmem:[%s1 + $0xc] sm:$0xf]
      %v245 = vld [vmem:[%s1 + $0x10] sm:$0xf]
      %v246 = vld [vmem:[%s1 + $0x14] sm:$0xf]
      %v247 = vld [vmem:[%s1 + $0x18] sm:$0xf]
      %v248 = vld [vmem:[%s1 + $0x1c] sm:$0xf]
      %v249 = vld [vmem:[%s1 + $0x20] sm:$0xf]
      %v250 = vld [vmem:[%s1 + $0x24] sm:$0xf]
      %v251 = vld [vmem:[%s1 + $0x28] sm:$0xf]
      %v252 = vld [vmem:[%s1 + $0x2c] sm:$0xf]
      %v253 = vld [vmem:[%s1 + $0x30] sm:$0xf]
      %v254 = vld [vmem:[%s1 + $0x34] sm:$0xf]
      %v255 = vld [vmem:[%s1 + $0x38] sm:$0xf]
      %v256 = vld [vmem:[%s1 + $0x3c] sm:$0xf]
      %v265 = vunpack.c.l.b16 %v225
      %v266 = vunpack.c.l.b16 %v226
      %v267 = vunpack.c.l.b16 %v227
      %v268 = vunpack.c.l.b16 %v228
      %v269 = vunpack.c.l.b16 %v229
      %v270 = vunpack.c.l.b16 %v230
      %v271 = vunpack.c.l.b16 %v231
      %v272 = vunpack.c.l.b16 %v232
      %v273 = vpack.c.b16 %v266, %v265
      %v274 = vpack.c.b16 %v268, %v267
      %v275 = vpack.c.b16 %v270, %v269
      %v276 = vpack.c.b16 %v272, %v271
      %v297 = vunpack.c.l.b16 %v241
      %v298 = vunpack.c.l.b16 %v242
      %v299 = vunpack.c.l.b16 %v243
      %v300 = vunpack.c.l.b16 %v244
      %v301 = vunpack.c.l.b16 %v245
      %v302 = vunpack.c.l.b16 %v246
      %v303 = vunpack.c.l.b16 %v247
      %v304 = vunpack.c.l.b16 %v248
      %v305 = vunpack.c.l.b16 %v249
      %v306 = vunpack.c.l.b16 %v250
      %v307 = vunpack.c.l.b16 %v251
      %v308 = vunpack.c.l.b16 %v252
      %v309 = vunpack.c.l.b16 %v253
      %v310 = vunpack.c.l.b16 %v254
      %v311 = vunpack.c.l.b16 %v255
      %v312 = vunpack.c.l.b16 %v256
      %v313 = vpack.c.b16 %v298, %v297
      %v314 = vpack.c.b16 %v300, %v299
      %v315 = vpack.c.b16 %v302, %v301
      %v316 = vpack.c.b16 %v304, %v303
      %v317 = vpack.c.b16 %v306, %v305
      %v318 = vpack.c.b16 %v308, %v307
      %v319 = vpack.c.b16 %v310, %v309
      %v320 = vpack.c.b16 %v312, %v311
      %329 = vmatprep.subr.bf16.mxu0 0
      %330 = vmatpush1.bf16.msra.mxu0 %v313
      %331 = vmatprep.subr.bf16.mxu0 0
      %332 = vmatpush1.bf16.msra.mxu0 %v314
      %333 = vmatprep.subr.bf16.mxu0 0
      %334 = vmatpush1.bf16.msra.mxu0 %v315
      %335 = vmatprep.subr.bf16.mxu0 0
      %336 = vmatpush1.bf16.msra.mxu0 %v316
      %337 = vmatprep.subr.bf16.mxu0 0
      %338 = vmatpush1.bf16.msra.mxu0 %v317
      %339 = vmatprep.subr.bf16.mxu0 0
      %340 = vmatpush1.bf16.msra.mxu0 %v318
      %341 = vmatprep.subr.bf16.mxu0 0
      %342 = vmatpush1.bf16.msra.mxu0 %v319
      %343 = vmatprep.subr.bf16.mxu0 0
      %344 = vmatpush1.bf16.msra.mxu0 %v320
      %345 = vmatprep.subr.bf16.mxu0 0
      %346 = vmatpush1.bf16.msra.mxu0 0
      %347 = vmatprep.subr.bf16.mxu0 0
      %348 = vmatpush1.bf16.msra.mxu0 0
      %349 = vmatprep.subr.bf16.mxu0 0
      %350 = vmatpush1.bf16.msra.mxu0 0
      %351 = vmatprep.subr.bf16.mxu0 0
      %352 = vmatpush1.bf16.msra.mxu0 0
      %353 = vmatprep.subr.bf16.mxu0 0
      %354 = vmatpush1.bf16.msra.mxu0 0
      %355 = vmatprep.subr.bf16.mxu0 0
      %356 = vmatpush1.bf16.msra.mxu0 0
      %357 = vmatprep.subr.bf16.mxu0 0
      %358 = vmatpush1.bf16.msra.mxu0 0
      %359 = vmatprep.subr.bf16.mxu0 0
      %360 = vmatpush1.bf16.msra.mxu0 0
      %361 = vmatprep.mubr.bf16.mxu0 0
      %362 = vmatmul.mubr.bf16.gmra.mrb[0].mxu0 %v273
      %v363 = vpop.f32.mrb[0].mxu0
      %v364 = vadd.f32 0.0, %v363
      %v365 = vpop.f32.mrb[0].mxu0
      %v366 = vpop.f32.mrb[0].mxu0
      %v367 = vadd.f32 0.0, %v366
      %v368 = vpop.f32.mrb[0].mxu0
      %369 = vmatprep.mubr.bf16.mxu0 0
      %370 = vmatmul.mubr.bf16.gmra.mrb[0].mxu0 %v274
      %v371 = vpop.f32.mrb[0].mxu0
      %v372 = vadd.f32 0.0, %v371
      %v373 = vpop.f32.mrb[0].mxu0
      %v374 = vpop.f32.mrb[0].mxu0
      %v375 = vadd.f32 0.0, %v374
      %v376 = vpop.f32.mrb[0].mxu0
      %377 = vmatprep.mubr.bf16.mxu0 0
      %378 = vmatmul.mubr.bf16.gmra.mrb[0].mxu0 %v275
      %v379 = vpop.f32.mrb[0].mxu0
      %v380 = vadd.f32 0.0, %v379
      %v381 = vpop.f32.mrb[0].mxu0
      %v382 = vpop.f32.mrb[0].mxu0
      %v383 = vadd.f32 0.0, %v382
      %v384 = vpop.f32.mrb[0].mxu0
      %385 = vmatprep.mubr.bf16.mxu0 0
      %386 = vmatmul.mubr.bf16.gmra.mrb[0].mxu0 %v276
      %v387 = vpop.f32.mrb[0].mxu0
      %v388 = vadd.f32 0.0, %v387
      %v389 = vpop.f32.mrb[0].mxu0
      %v390 = vpop.f32.mrb[0].mxu0
      %v391 = vadd.f32 0.0, %v390
      %v392 = vpop.f32.mrb[0].mxu0
      %393 = vdwg.mxu0
      %v394 = vadd.f32 %v233, %v364
      %v395 = vadd.f32 %v234, %v367
      %v396 = vadd.f32 %v235, %v372
      %v397 = vadd.f32 %v236, %v375
      %v398 = vadd.f32 %v237, %v380
      %v399 = vadd.f32 %v238, %v383
      %v400 = vadd.f32 %v239, %v388
      %v401 = vadd.f32 %v240, %v391
      %402 = vst [vmem:[#allocation2] sm:$0xff] %v394
      %403 = vst [vmem:[#allocation2 + $0x8] sm:$0xff] %v395
      %404 = vst [vmem:[#allocation2 + $0x10] sm:$0xff] %v396
      %405 = vst [vmem:[#allocation2 + $0x18] sm:$0xff] %v397
      %406 = vst [vmem:[#allocation2 + $0x20] sm:$0xff] %v398
      %407 = vst [vmem:[#allocation2 + $0x28] sm:$0xff] %v399
      %408 = vst [vmem:[#allocation2 + $0x30] sm:$0xff] %v400
      %409 = vst [vmem:[#allocation2 + $0x38] sm:$0xff] %v401
      %v410 = vld [vmem:[#allocation2] sm:$0xff]
      %v411 = vld [vmem:[#allocation2 + $0x8] sm:$0xff]
      %v412 = vld [vmem:[#allocation2 + $0x10] sm:$0xff]
      %v413 = vld [vmem:[#allocation2 + $0x18] sm:$0xff]
      %v414 = vld [vmem:[#allocation2 + $0x20] sm:$0xff]
      %v415 = vld [vmem:[#allocation2 + $0x28] sm:$0xff]
      %v416 = vld [vmem:[#allocation2 + $0x30] sm:$0xff]
      %v417 = vld [vmem:[#allocation2 + $0x38] sm:$0xff]
      %v418 = vpack.c.bf16 %v410, %v410
      %v419 = vpack.c.bf16 %v411, %v411
      %v420 = vpack.c.bf16 %v412, %v412
      %v421 = vpack.c.bf16 %v413, %v413
      %v422 = vpack.c.bf16 %v414, %v414
      %v423 = vpack.c.bf16 %v415, %v415
      %v424 = vpack.c.bf16 %v416, %v416
      %v425 = vpack.c.bf16 %v417, %v417
      %426 = vst [vmem:[%s204] sm:$0xf] %v418
      %427 = vst [vmem:[%s204 + $0x4] sm:$0xf] %v419
      %428 = vst [vmem:[%s204 + $0x8] sm:$0xf] %v420
      %429 = vst [vmem:[%s204 + $0xc] sm:$0xf] %v421
      %430 = vst [vmem:[%s204 + $0x10] sm:$0xf] %v422
      %431 = vst [vmem:[%s204 + $0x14] sm:$0xf] %v423
      %432 = vst [vmem:[%s204 + $0x18] sm:$0xf] %v424
      %433 = vst [vmem:[%s204 + $0x1c] sm:$0xf] %v425
      %v434 = vadd.f32 %v410, %v411
      %v435 = vadd.f32 %v434, %v412
      %v436 = vadd.f32 %v435, %v413
      %v437 = vadd.f32 %v436, %v414
      %v438 = vadd.f32 %v437, %v415
      %v439 = vadd.f32 %v438, %v416
      %v440 = vadd.f32 %v439, %v417
      %v441 = vrot.slane %v440, 4
      %v442 = vadd.f32 %v440, %v441
      %v443 = vrot.slane %v442, 2
      %v444 = vadd.f32 %v442, %v443
      %v445 = vrot.slane %v444, 1
      %v446 = vadd.f32 %v444, %v445
      %v447 = vmul.f32 %v410, %v410
      %v448 = vmul.f32 %v411, %v411
      %v449 = vmul.f32 %v412, %v412
      %v450 = vmul.f32 %v413, %v413
      %v451 = vmul.f32 %v414, %v414
      %v452 = vmul.f32 %v415, %v415
      %v453 = vmul.f32 %v416, %v416
      %v454 = vmul.f32 %v417, %v417
      %v455 = vadd.f32 %v447, %v448
      %v456 = vadd.f32 %v455, %v449
      %v457 = vadd.f32 %v456, %v450
      %v458 = vadd.f32 %v457, %v451
      %v459 = vadd.f32 %v458, %v452
      %v460 = vadd.f32 %v459, %v453
      %v461 = vadd.f32 %v460, %v454
      %v462 = vrot.slane %v461, 4
      %v463 = vadd.f32 %v461, %v462
      %v464 = vrot.slane %v463, 2
      %v465 = vadd.f32 %v463, %v464
      %v466 = vrot.slane %v465, 1
      %v467 = vadd.f32 %v465, %v466
      %vm468 = vcmask 1040384
      %v469 = vsel %vm468, %v446, %v467
      %470 = vst [vmem:[%s212] sm:$0x3] %v469
      %s471 = smul.u32 8, %s20
      %p472 = scmp.lt.s32.totalorder %s19, 1
      %s473 = scalar_select %p472, %s19, 1
      %p474 = scmp.lt.s32.totalorder %s471, 7
      %s475 = scalar_select %p474, %s471, 7
      %s476 = smul.addr %s473, 8
      %s477 = sadd.s32 %s475, %s476
      %s478 = smul.addr %s477, 4
      %s479 = scalar_lea.vmem %s2, %s478
      %p480 = scmp.lt.s32.totalorder %s19, 1
      %s481 = scalar_select %p480, %s19, 1
      %p482 = scmp.lt.s32.totalorder %s20, 0
      %s483 = scalar_select %p482, %s20, 0
      %s484 = sadd.s32 %s483, %s481
      %s485 = smul.addr %s484, 2
      %s486 = scalar_lea.vmem %s3, %s485
      // Predicated region
      $region29: #{res_block.13} parent=27 // pred_check
        %p487 = pneg %p94
      $region30: #{res_block.13} parent=27 // pred_check_branch
        %489 = sbr.rel (%p487) target = $region32
      $region31: #{res_block.13} parent=27 // pred_region
        %s490 = smul.u32 8, %s20
      $region32: #{res_block.13} parent=27 // pred_fallthru
        _
      // Predicated region
      $region33: #{res_block.13} parent=27 // pred_check
        %p491 = pneg %p122
      $region34: #{res_block.13} parent=27 // pred_check_branch
        %493 = sbr.rel (%p491) target = $region36
      $region35: #{res_block.13} parent=27 // pred_region
        _
      $region36: #{res_block.13} parent=27 // pred_fallthru
        _
    $region28: #{res_block.13} parent=5 // pred_fallthru
      _
    %p494 = scmp.le.s32.totalorder 2, %s10
    // Predicated region
    $region37: #{res_block.13} parent=5 // pred_check
      %p495 = pneg %p494
    $region38: #{res_block.13} parent=5 // pred_check_branch
      %497 = sbr.rel (%p495) target = $region40
    $region39: #{res_block.13} parent=5 // pred_region
      %s498 = ssub.s32 %s10, 2
      // Predicated region
      $region41: #{res_block.13} parent=39 // pred_check
        %p499 = pneg %p100
      $region42: #{res_block.13} parent=39 // pred_check_branch
        %501 = sbr.rel (%p499) target = $region44
      $region43: #{res_block.13} parent=39 // pred_region
        %s502 = smul.u32 8, %s22
        %p503 = scmp.lt.s32.totalorder %s21, 1
        %s504 = scalar_select %p503, %s21, 1
        %p505 = scmp.lt.s32.totalorder %s502, 7
        %s506 = scalar_select %p505, %s502, 7
        %s507 = smul.addr %s504, 8
        %s508 = sadd.s32 %s506, %s507
        %s509 = smul.addr %s508, 4
        %s510 = scalar_lea.vmem %s2, %s509
      $region44: #{res_block.13} parent=39 // pred_fallthru
        _
      // Predicated region
      $region45: #{res_block.13} parent=39 // pred_check
        %p511 = pneg %p128
      $region46: #{res_block.13} parent=39 // pred_check_branch
        %513 = sbr.rel (%p511) target = $region48
      $region47: #{res_block.13} parent=39 // pred_region
        %p514 = scmp.lt.s32.totalorder %s21, 1
        %s515 = scalar_select %p514, %s21, 1
        %p516 = scmp.lt.s32.totalorder %s22, 0
        %s517 = scalar_select %p516, %s22, 0
        %s518 = sadd.s32 %s517, %s515
        %s519 = smul.addr %s518, 2
        %s520 = scalar_lea.vmem %s3, %s519
      $region48: #{res_block.13} parent=39 // pred_fallthru
        _
    $region40: #{res_block.13} parent=5 // pred_fallthru
      _
  $region6: #{res_block.13} parent=0 // loop_footer
    %s14 = sadd.s32 1, %s10
  $region7: #{res_block.13} parent=0 // loop_footer_branch
    %9 = sbr.rel target = $region3
  $region8: #{res_block.13} parent=0 // loop_exit
    _

// kernel: res_block.14
$region0: #{res_block.14}
  #allocation0 [shape = 'u32[]', space=smem, size = 0x4, offset = 0x4, fixed_abs, tag = 'smem constant byte address 0x4 - core index']
  #allocation1 [shape = 'u32[144,128]{1,0:T(1,128)}', space=vmem, size = 0x12000, scoped, tag = 'internal scratch']
  %s0 = inlined_call_operand.vmem [shape: bf16[2,8,8,128], index: 0, kind: input, shape index: {}]
  %s1 = inlined_call_operand.vmem [shape: f32[1,1,1,128], index: 1, kind: input, shape index: {}]
  %s2 = inlined_call_operand.vmem [shape: f32[1,1,1,128], index: 2, kind: input, shape index: {}]
  %s3 = inlined_call_operand.vmem [shape: bf16[2,8,8,128], index: 3, kind: output, shape index: {}]
  %s4 = sld [smem:[#allocation0]]
  $region45: #{res_block.14} parent=0
    _
  %s6 = ssub.s32 1, %s4
  %s7 = scalar_select 0, %s6, %s4
  loop: start=0, step=1, limit=4
  $region2: #{res_block.14} parent=0 // loop_pre_header
    _
  $region3: #{res_block.14} parent=0 // loop_header
    %s9 = sphi 0, %s13
    %p10 = scmp.ge.s32.totalorder %s9, 4
    %s16 = sphi 0, %s28
    %s17 = sphi 0, %s24
    %s18 = sphi 0, %s16
    %s19 = sphi 0, %s17
    %s20 = sphi 0, %s18
    %s21 = sphi 0, %s19
    %s33 = sphi 0, %s35
    %s36 = sphi 0, %s33
    %s37 = sphi 0, %s36
    %s53 = sphi 0, %s37
    %s57 = sphi 0, %s57
    %s59 = sphi 0, %s57
    %s60 = sphi 0, %s59
    %s74 = sphi 0, %s60
    %s78 = sphi 0, %s78
    %s80 = sphi 0, %s78
    %s81 = sphi 0, %s80
    %s95 = sphi 0, %s81
    %s103 = sphi 0, %s105
    %s106 = sphi 0, %s103
    %s107 = sphi 0, %s106
    %s123 = sphi 0, %s107
  $region4: #{res_block.14} parent=0 // loop_header_branch
    %12 = sbr.rel (%p10) target = $region8
  $region5: #{res_block.14} parent=0 // loop_body
    %s14 = ssub.s32 %s9, 1
    %s15 = ssub.s32 %s9, 2
    %s22 = sadd.s32 1, %s17
    %p23 = scmp.ge.s32.totalorder %s22, 1
    %s24 = scalar_select %p23, 0, %s22
    %s25 = sadd.s32 1, %s16
    %s26 = scalar_select %p23, %s25, %s16
    %p27 = scmp.ge.s32.totalorder %s26, 2
    %s28 = scalar_select %p27, 0, %s26
    %s29 = ssub.s32 %s16, %s28
    %s30 = ssub.s32 %s17, %s24
    %s31 = sor.u32 %s29, %s30
    %p32 = scmp.eq.s32.totalorder %s31, 0
    %s34 = sadd.s32 %s33, 1
    %s35 = scalar_select %p32, %s33, %s34
    %p38 = pneg %p32
    %p39 = scmp.eq.s32.totalorder %s9, 1
    %p40 = por %p38, %p39
    %p41 = scmp.ne.s32.totalorder %s33, %s36
    %p42 = scmp.eq.s32.totalorder %s9, 0
    %p43 = por %p41, %p42
    %p44 = scmp.ne.s32.totalorder %s33, %s36
    %p45 = scmp.eq.s32.totalorder %s14, 1
    %p46 = por %p44, %p45
    %p47 = scmp.ne.s32.totalorder %s36, %s37
    %p48 = scmp.eq.s32.totalorder %s14, 0
    %p49 = por %p47, %p48
    %p50 = scmp.ne.s32.totalorder %s36, %s37
    %p51 = scmp.eq.s32.totalorder %s15, 1
    %p52 = por %p50, %p51
    %p54 = scmp.ne.s32.totalorder %s37, %s53
    %p55 = scmp.eq.s32.totalorder %s15, 0
    %p56 = por %p54, %p55
    %s58 = sadd.s32 %s57, 1
    %p61 = scmp.eq.s32.totalorder %s9, 1
    %p62 = scmp.ne.s32.totalorder %s57, %s59
    %p63 = scmp.eq.s32.totalorder %s9, 0
    %p64 = por %p62, %p63
    %p65 = scmp.ne.s32.totalorder %s57, %s59
    %p66 = scmp.eq.s32.totalorder %s14, 1
    %p67 = por %p65, %p66
    %p68 = scmp.ne.s32.totalorder %s59, %s60
    %p69 = scmp.eq.s32.totalorder %s14, 0
    %p70 = por %p68, %p69
    %p71 = scmp.ne.s32.totalorder %s59, %s60
    %p72 = scmp.eq.s32.totalorder %s15, 1
    %p73 = por %p71, %p72
    %p75 = scmp.ne.s32.totalorder %s60, %s74
    %p76 = scmp.eq.s32.totalorder %s15, 0
    %p77 = por %p75, %p76
    %s79 = sadd.s32 %s78, 1
    %p82 = scmp.eq.s32.totalorder %s9, 1
    %p83 = scmp.ne.s32.totalorder %s78, %s80
    %p84 = scmp.eq.s32.totalorder %s9, 0
    %p85 = por %p83, %p84
    %p86 = scmp.ne.s32.totalorder %s78, %s80
    %p87 = scmp.eq.s32.totalorder %s14, 1
    %p88 = por %p86, %p87
    %p89 = scmp.ne.s32.totalorder %s80, %s81
    %p90 = scmp.eq.s32.totalorder %s14, 0
    %p91 = por %p89, %p90
    %p92 = scmp.ne.s32.totalorder %s80, %s81
    %p93 = scmp.eq.s32.totalorder %s15, 1
    %p94 = por %p92, %p93
    %p96 = scmp.ne.s32.totalorder %s81, %s95
    %p97 = scmp.eq.s32.totalorder %s15, 0
    %p98 = por %p96, %p97
    %s99 = ssub.s32 %s16, %s28
    %s100 = ssub.s32 %s17, %s24
    %s101 = sor.u32 %s99, %s100
    %p102 = scmp.eq.s32.totalorder %s101, 0
    %s104 = sadd.s32 %s103, 1
    %s105 = scalar_select %p102, %s103, %s104
    %p108 = pneg %p102
    %p109 = scmp.eq.s32.totalorder %s9, 1
    %p110 = por %p108, %p109
    %p111 = scmp.ne.s32.totalorder %s103, %s106
    %p112 = scmp.eq.s32.totalorder %s9, 0
    %p113 = por %p111, %p112
    %p114 = scmp.ne.s32.totalorder %s103, %s106
    %p115 = scmp.eq.s32.totalorder %s14, 1
    %p116 = por %p114, %p115
    %p117 = scmp.ne.s32.totalorder %s106, %s107
    %p118 = scmp.eq.s32.totalorder %s14, 0
    %p119 = por %p117, %p118
    %p120 = scmp.ne.s32.totalorder %s106, %s107
    %p121 = scmp.eq.s32.totalorder %s15, 1
    %p122 = por %p120, %p121
    %p124 = scmp.ne.s32.totalorder %s107, %s123
    %p125 = scmp.eq.s32.totalorder %s15, 0
    %p126 = por %p124, %p125
    %p127 = scmp.le.s32.totalorder 1, %s9
    %p128 = scmp.lt.s32.totalorder %s9, 3
    %p129 = pnand %p127, %p128
    %p130 = pneg %p129
    // Predicated region
    $region9: #{res_block.14} parent=5 // pred_check
      _
    $region10: #{res_block.14} parent=5 // pred_check_branch
      %132 = sbr.rel (%p129) target = $region12
    $region11: #{res_block.14} parent=5 // pred_region
      %s133 = ssub.s32 %s9, 1
      // Predicated region
      $region13: #{res_block.14} parent=11 // pred_check
        %p134 = pneg %p70
      $region14: #{res_block.14} parent=11 // pred_check_branch
        %136 = sbr.rel (%p134) target = $region16
      $region15: #{res_block.14} parent=11 // pred_region
        _
      $region16: #{res_block.14} parent=11 // pred_fallthru
        _
      // Predicated region
      $region17: #{res_block.14} parent=11 // pred_check
        %p137 = pneg %p91
      $region18: #{res_block.14} parent=11 // pred_check_branch
        %139 = sbr.rel (%p137) target = $region20
      $region19: #{res_block.14} parent=11 // pred_region
        _
      $region20: #{res_block.14} parent=11 // pred_fallthru
        _
    $region12: #{res_block.14} parent=5 // pred_fallthru
      _
    %p140 = scmp.lt.s32.totalorder %s9, 2
    // Predicated region
    $region21: #{res_block.14} parent=5 // pred_check
      %p141 = pneg %p140
    $region22: #{res_block.14} parent=5 // pred_check_branch
      %143 = sbr.rel (%p141) target = $region24
    $region23: #{res_block.14} parent=5 // pred_region
      // Predicated region
      $region25: #{res_block.14} parent=23 // pred_check
        %p144 = pneg %p43
      $region26: #{res_block.14} parent=23 // pred_check_branch
        %146 = sbr.rel (%p144) target = $region28
      $region27: #{res_block.14} parent=23 // pred_region
        %s147 = smul.u32 8, %s17
        %p148 = scmp.lt.s32.totalorder %s16, 1
        %s149 = scalar_select %p148, %s16, 1
        %p150 = scmp.lt.s32.totalorder %s147, 7
        %s151 = scalar_select %p150, %s147, 7
        %s152 = smul.addr %s149, 8
        %s153 = sadd.s32 %s151, %s152
        %s154 = smul.addr %s153, 4
        %s155 = scalar_lea.vmem %s0, %s154
        %s156 = smul.u32 8, %s17
      $region28: #{res_block.14} parent=23 // pred_fallthru
        _
    $region24: #{res_block.14} parent=5 // pred_fallthru
      _
    %p157 = scmp.le.s32.totalorder 1, %s9
    %p158 = scmp.lt.s32.totalorder %s9, 3
    %p159 = pnand %p157, %p158
    %p160 = pneg %p159
    // Predicated region
    $region29: #{res_block.14} parent=5 // pred_check
      _
    $region30: #{res_block.14} parent=5 // pred_check_branch
      %162 = sbr.rel (%p159) target = $region32
    $region31: #{res_block.14} parent=5 // pred_region
      %s163 = ssub.s32 %s9, 1
      %s164 = smul.u32 8, %s19
      %p165 = scmp.lt.s32.totalorder %s18, 1
      %s166 = scalar_select %p165, %s18, 1
      %p167 = scmp.lt.s32.totalorder %s164, 7
      %s168 = scalar_select %p167, %s164, 7
      %s169 = smul.addr %s166, 8
      %s170 = sadd.s32 %s168, %s169
      %s171 = smul.addr %s170, 4
      %s172 = scalar_lea.vmem %s0, %s171
      %p173 = pneg %p49
      %p174 = pneg %p46
      %p175 = pneg %p70
      %p176 = pneg %p67
      %p177 = pneg %p91
      %p178 = pneg %p88
      %p179 = pneg %p119
      %p180 = pneg %p116
      %s181 = smul.u32 8, %s19
      %p182 = scmp.lt.s32.totalorder %s18, 1
      %s183 = scalar_select %p182, %s18, 1
      %p184 = scmp.lt.s32.totalorder %s181, 7
      %s185 = scalar_select %p184, %s181, 7
      %s186 = smul.addr %s183, 8
      %s187 = sadd.s32 %s185, %s186
      %s188 = smul.addr %s187, 4
      %s189 = scalar_lea.vmem %s3, %s188
      %s190 = smul.u32 8, %s19
      %p191 = scmp.lt.s32.totalorder %s18, 1
      %s192 = scalar_select %p191, %s18, 1
      %p193 = scmp.lt.s32.totalorder %s190, 7
      %s194 = scalar_select %p193, %s190, 7
      %s195 = smul.addr %s192, 8
      %s196 = sadd.s32 %s194, %s195
      %s197 = smul.addr %s196, 4
      %s198 = scalar_lea.vmem %s0, %s197
      %s199 = smul.u32 8, %s19
      %s200 = smul.u32 8, %s19
      %p201 = scmp.lt.s32.totalorder %s18, 1
      %s202 = scalar_select %p201, %s18, 1
      %p203 = scmp.lt.s32.totalorder %s200, 7
      %s204 = scalar_select %p203, %s200, 7
      %s205 = smul.addr %s202, 8
      %s206 = sadd.s32 %s204, %s205
      %s207 = smul.addr %s206, 4
      %s208 = scalar_lea.vmem %s3, %s207
      %s209 = smul.u32 8, %s19
      %v210 = vld [vmem:[%s198] sm:$0xf]
      %v211 = vld [vmem:[%s198 + $0x4] sm:$0xf]
      %v212 = vld [vmem:[%s198 + $0x8] sm:$0xf]
      %v213 = vld [vmem:[%s198 + $0xc] sm:$0xf]
      %v214 = vld [vmem:[%s198 + $0x10] sm:$0xf]
      %v215 = vld [vmem:[%s198 + $0x14] sm:$0xf]
      %v216 = vld [vmem:[%s198 + $0x18] sm:$0xf]
      %v217 = vld [vmem:[%s198 + $0x1c] sm:$0xf]
      %v218 = vunpack.c.l.bf16 %v210
      %v219 = vunpack.c.l.bf16 %v211
      %v220 = vunpack.c.l.bf16 %v212
      %v221 = vunpack.c.l.bf16 %v213
      %v222 = vunpack.c.l.bf16 %v214
      %v223 = vunpack.c.l.bf16 %v215
      %v224 = vunpack.c.l.bf16 %v216
      %v225 = vunpack.c.l.bf16 %v217
      %v226 = vld [vmem:[%s1] sm:$0x1]
      %v228 = vlaneseq
      %v229 = vshrl.u32 %v228, 7
      %v230 = vsub.s32 0, %v229
      %v231 = vrot.slane %v226, %v230
      %v233 = vmul.f32 %v218, %v231
      %v234 = vmul.f32 %v219, %v231
      %v235 = vmul.f32 %v220, %v231
      %v236 = vmul.f32 %v221, %v231
      %v237 = vmul.f32 %v222, %v231
      %v238 = vmul.f32 %v223, %v231
      %v239 = vmul.f32 %v224, %v231
      %v240 = vmul.f32 %v225, %v231
      %v241 = vld [vmem:[%s2] sm:$0x1]
      %v243 = vlaneseq
      %v244 = vshrl.u32 %v243, 7
      %v245 = vsub.s32 0, %v244
      %v246 = vrot.slane %v241, %v245
      %v248 = vadd.f32 %v233, %v246
      %v249 = vadd.f32 %v234, %v246
      %v250 = vadd.f32 %v235, %v246
      %v251 = vadd.f32 %v236, %v246
      %v252 = vadd.f32 %v237, %v246
      %v253 = vadd.f32 %v238, %v246
      %v254 = vadd.f32 %v239, %v246
      %v255 = vadd.f32 %v240, %v246
      %v256 = vpack.c.bf16 %v248, %v248
      %v257 = vpack.c.bf16 %v249, %v249
      %v258 = vpack.c.bf16 %v250, %v250
      %v259 = vpack.c.bf16 %v251, %v251
      %v260 = vpack.c.bf16 %v252, %v252
      %v261 = vpack.c.bf16 %v253, %v253
      %v262 = vpack.c.bf16 %v254, %v254
      %v263 = vpack.c.bf16 %v255, %v255
      %264 = vst [vmem:[%s208] sm:$0xf] %v256
      %265 = vst [vmem:[%s208 + $0x4] sm:$0xf] %v257
      %266 = vst [vmem:[%s208 + $0x8] sm:$0xf] %v258
      %267 = vst [vmem:[%s208 + $0xc] sm:$0xf] %v259
      %268 = vst [vmem:[%s208 + $0x10] sm:$0xf] %v260
      %269 = vst [vmem:[%s208 + $0x14] sm:$0xf] %v261
      %270 = vst [vmem:[%s208 + $0x18] sm:$0xf] %v262
      %271 = vst [vmem:[%s208 + $0x1c] sm:$0xf] %v263
      %s272 = smul.u32 8, %s19
      %p273 = scmp.lt.s32.totalorder %s18, 1
      %s274 = scalar_select %p273, %s18, 1
      %p275 = scmp.lt.s32.totalorder %s272, 7
      %s276 = scalar_select %p275, %s272, 7
      %s277 = smul.addr %s274, 8
      %s278 = sadd.s32 %s276, %s277
      %s279 = smul.addr %s278, 4
      %s280 = scalar_lea.vmem %s3, %s279
      // Predicated region
      $region33: #{res_block.14} parent=31 // pred_check
        %p281 = pneg %p116
      $region34: #{res_block.14} parent=31 // pred_check_branch
        %283 = sbr.rel (%p281) target = $region36
      $region35: #{res_block.14} parent=31 // pred_region
        %s284 = smul.u32 8, %s19
      $region36: #{res_block.14} parent=31 // pred_fallthru
        _
    $region32: #{res_block.14} parent=5 // pred_fallthru
      _
    %p285 = scmp.le.s32.totalorder 2, %s9
    // Predicated region
    $region37: #{res_block.14} parent=5 // pred_check
      %p286 = pneg %p285
    $region38: #{res_block.14} parent=5 // pred_check_branch
      %288 = sbr.rel (%p286) target = $region40
    $region39: #{res_block.14} parent=5 // pred_region
      %s289 = ssub.s32 %s9, 2
      // Predicated region
      $region41: #{res_block.14} parent=39 // pred_check
        %p290 = pneg %p122
      $region42: #{res_block.14} parent=39 // pred_check_branch
        %292 = sbr.rel (%p290) target = $region44
      $region43: #{res_block.14} parent=39 // pred_region
        %s293 = smul.u32 8, %s21
        %p294 = scmp.lt.s32.totalorder %s20, 1
        %s295 = scalar_select %p294, %s20, 1
        %p296 = scmp.lt.s32.totalorder %s293, 7
        %s297 = scalar_select %p296, %s293, 7
        %s298 = smul.addr %s295, 8
        %s299 = sadd.s32 %s297, %s298
        %s300 = smul.addr %s299, 4
        %s301 = scalar_lea.vmem %s3, %s300
      $region44: #{res_block.14} parent=39 // pred_fallthru
        _
    $region40: #{res_block.14} parent=5 // pred_fallthru
      _
  $region6: #{res_block.14} parent=0 // loop_footer
    %s13 = sadd.s32 1, %s9
  $region7: #{res_block.14} parent=0 // loop_footer_branch
    %8 = sbr.rel target = $region3
  $region8: #{res_block.14} parent=0 // loop_exit
    _

// kernel: res_block.8
$region0: #{res_block.8}
  #allocation0 [shape = 'u32[]', space=smem, size = 0x4, offset = 0x4, fixed_abs, tag = 'smem constant byte address 0x4 - core index']
  #allocation1 [shape = 'u32[144,128]{1,0:T(1,128)}', space=vmem, size = 0x12000, scoped, tag = 'internal scratch']
  #allocation2 [shape = 'f32[64,128]{1,0:T(8,128)}', space=vmem, size = 0x8000, scoped, tag = 'scratch operand']
  %s0 = inlined_call_operand.vmem [shape: bf16[2,8,8,1152], index: 0, kind: input, shape index: {}]
  %s1 = inlined_call_operand.vmem [shape: bf16[1,1152,128], index: 1, kind: input, shape index: {}]
  %s2 = inlined_call_operand.vmem [shape: bf16[2,8,8,128], index: 2, kind: output, shape index: {0}]
  %s3 = inlined_call_operand.vmem [shape: f32[2,1,2,128], index: 3, kind: output, shape index: {1}]
  %4 = xla_tuple %s2, %s3
  %s5 = sld [smem:[#allocation0]]
  $region49: #{res_block.8} parent=0
    _
  %s7 = ssub.s32 1, %s5
  %s8 = scalar_select 0, %s7, %s5
  loop: start=0, step=1, limit=4
  $region2: #{res_block.8} parent=0 // loop_pre_header
    _
  $region3: #{res_block.8} parent=0 // loop_header
    %s10 = sphi 0, %s14
    %p11 = scmp.ge.s32.totalorder %s10, 4
    %s17 = sphi 0, %s29
    %s18 = sphi 0, %s25
    %s19 = sphi 0, %s17
    %s20 = sphi 0, %s18
    %s21 = sphi 0, %s19
    %s22 = sphi 0, %s20
    %s32 = sphi 0, %s34
    %s35 = sphi 0, %s32
    %s36 = sphi 0, %s35
    %s52 = sphi 0, %s36
    %s56 = sphi 0, %s56
    %s58 = sphi 0, %s56
    %s59 = sphi 0, %s58
    %s73 = sphi 0, %s59
    %s81 = sphi 0, %s83
    %s84 = sphi 0, %s81
    %s85 = sphi 0, %s84
    %s101 = sphi 0, %s85
    %s109 = sphi 0, %s111
    %s112 = sphi 0, %s109
    %s113 = sphi 0, %s112
    %s129 = sphi 0, %s113
  $region4: #{res_block.8} parent=0 // loop_header_branch
    %13 = sbr.rel (%p11) target = $region8
  $region5: #{res_block.8} parent=0 // loop_body
    %s15 = ssub.s32 %s10, 1
    %s16 = ssub.s32 %s10, 2
    %s23 = sadd.s32 1, %s18
    %p24 = scmp.ge.s32.totalorder %s23, 1
    %s25 = scalar_select %p24, 0, %s23
    %s26 = sadd.s32 1, %s17
    %s27 = scalar_select %p24, %s26, %s17
    %p28 = scmp.ge.s32.totalorder %s27, 2
    %s29 = scalar_select %p28, 0, %s27
    %s30 = ssub.s32 %s17, %s29
    %p31 = scmp.eq.s32.totalorder %s30, 0
    %s33 = sadd.s32 %s32, 1
    %s34 = scalar_select %p31, %s32, %s33
    %p37 = pneg %p31
    %p38 = scmp.eq.s32.totalorder %s10, 1
    %p39 = por %p37, %p38
    %p40 = scmp.ne.s32.totalorder %s32, %s35
    %p41 = scmp.eq.s32.totalorder %s10, 0
    %p42 = por %p40, %p41
    %p43 = scmp.ne.s32.totalorder %s32, %s35
    %p44 = scmp.eq.s32.totalorder %s15, 1
    %p45 = por %p43, %p44
    %p46 = scmp.ne.s32.totalorder %s35, %s36
    %p47 = scmp.eq.s32.totalorder %s15, 0
    %p48 = por %p46, %p47
    %p49 = scmp.ne.s32.totalorder %s35, %s36
    %p50 = scmp.eq.s32.totalorder %s16, 1
    %p51 = por %p49, %p50
    %p53 = scmp.ne.s32.totalorder %s36, %s52
    %p54 = scmp.eq.s32.totalorder %s16, 0
    %p55 = por %p53, %p54
    %s57 = sadd.s32 %s56, 1
    %p60 = scmp.eq.s32.totalorder %s10, 1
    %p61 = scmp.ne.s32.totalorder %s56, %s58
    %p62 = scmp.eq.s32.totalorder %s10, 0
    %p63 = por %p61, %p62
    %p64 = scmp.ne.s32.totalorder %s56, %s58
    %p65 = scmp.eq.s32.totalorder %s15, 1
    %p66 = por %p64, %p65
    %p67 = scmp.ne.s32.totalorder %s58, %s59
    %p68 = scmp.eq.s32.totalorder %s15, 0
    %p69 = por %p67, %p68
    %p70 = scmp.ne.s32.totalorder %s58, %s59
    %p71 = scmp.eq.s32.totalorder %s16, 1
    %p72 = por %p70, %p71
    %p74 = scmp.ne.s32.totalorder %s59, %s73
    %p75 = scmp.eq.s32.totalorder %s16, 0
    %p76 = por %p74, %p75
    %s77 = ssub.s32 %s17, %s29
    %s78 = ssub.s32 %s18, %s25
    %s79 = sor.u32 %s77, %s78
    %p80 = scmp.eq.s32.totalorder %s79, 0
    %s82 = sadd.s32 %s81, 1
    %s83 = scalar_select %p80, %s81, %s82
    %p86 = pneg %p80
    %p87 = scmp.eq.s32.totalorder %s10, 1
    %p88 = por %p86, %p87
    %p89 = scmp.ne.s32.totalorder %s81, %s84
    %p90 = scmp.eq.s32.totalorder %s10, 0
    %p91 = por %p89, %p90
    %p92 = scmp.ne.s32.totalorder %s81, %s84
    %p93 = scmp.eq.s32.totalorder %s15, 1
    %p94 = por %p92, %p93
    %p95 = scmp.ne.s32.totalorder %s84, %s85
    %p96 = scmp.eq.s32.totalorder %s15, 0
    %p97 = por %p95, %p96
    %p98 = scmp.ne.s32.totalorder %s84, %s85
    %p99 = scmp.eq.s32.totalorder %s16, 1
    %p100 = por %p98, %p99
    %p102 = scmp.ne.s32.totalorder %s85, %s101
    %p103 = scmp.eq.s32.totalorder %s16, 0
    %p104 = por %p102, %p103
    %s105 = ssub.s32 %s17, %s29
    %s106 = ssub.s32 %s18, %s25
    %s107 = sor.u32 %s105, %s106
    %p108 = scmp.eq.s32.totalorder %s107, 0
    %s110 = sadd.s32 %s109, 1
    %s111 = scalar_select %p108, %s109, %s110
    %p114 = pneg %p108
    %p115 = scmp.eq.s32.totalorder %s10, 1
    %p116 = por %p114, %p115
    %p117 = scmp.ne.s32.totalorder %s109, %s112
    %p118 = scmp.eq.s32.totalorder %s10, 0
    %p119 = por %p117, %p118
    %p120 = scmp.ne.s32.totalorder %s109, %s112
    %p121 = scmp.eq.s32.totalorder %s15, 1
    %p122 = por %p120, %p121
    %p123 = scmp.ne.s32.totalorder %s112, %s113
    %p124 = scmp.eq.s32.totalorder %s15, 0
    %p125 = por %p123, %p124
    %p126 = scmp.ne.s32.totalorder %s112, %s113
    %p127 = scmp.eq.s32.totalorder %s16, 1
    %p128 = por %p126, %p127
    %p130 = scmp.ne.s32.totalorder %s113, %s129
    %p131 = scmp.eq.s32.totalorder %s16, 0
    %p132 = por %p130, %p131
    %p133 = scmp.le.s32.totalorder 1, %s10
    %p134 = scmp.lt.s32.totalorder %s10, 3
    %p135 = pnand %p133, %p134
    %p136 = pneg %p135
    // Predicated region
    $region9: #{res_block.8} parent=5 // pred_check
      _
    $region10: #{res_block.8} parent=5 // pred_check_branch
      %138 = sbr.rel (%p135) target = $region12
    $region11: #{res_block.8} parent=5 // pred_region
      %s139 = ssub.s32 %s10, 1
      // Predicated region
      $region13: #{res_block.8} parent=11 // pred_check
        %p140 = pneg %p69
      $region14: #{res_block.8} parent=11 // pred_check_branch
        %142 = sbr.rel (%p140) target = $region16
      $region15: #{res_block.8} parent=11 // pred_region
        _
      $region16: #{res_block.8} parent=11 // pred_fallthru
        _
    $region12: #{res_block.8} parent=5 // pred_fallthru
      _
    %p143 = scmp.lt.s32.totalorder %s10, 2
    // Predicated region
    $region17: #{res_block.8} parent=5 // pred_check
      %p144 = pneg %p143
    $region18: #{res_block.8} parent=5 // pred_check_branch
      %146 = sbr.rel (%p144) target = $region20
    $region19: #{res_block.8} parent=5 // pred_region
      // Predicated region
      $region21: #{res_block.8} parent=19 // pred_check
        %p147 = pneg %p42
      $region22: #{res_block.8} parent=19 // pred_check_branch
        %149 = sbr.rel (%p147) target = $region24
      $region23: #{res_block.8} parent=19 // pred_region
        %p150 = scmp.lt.s32.totalorder %s17, 1
        %s151 = scalar_select %p150, %s17, 1
        %s152 = smul.addr %s151, 72
        %s153 = smul.addr %s152, 4
        %s154 = scalar_lea.vmem %s0, %s153
      $region24: #{res_block.8} parent=19 // pred_fallthru
        _
    $region20: #{res_block.8} parent=5 // pred_fallthru
      _
    %p155 = scmp.le.s32.totalorder 1, %s10
    %p156 = scmp.lt.s32.totalorder %s10, 3
    %p157 = pnand %p155, %p156
    %p158 = pneg %p157
    // Predicated region
    $region25: #{res_block.8} parent=5 // pred_check
      _
    $region26: #{res_block.8} parent=5 // pred_check_branch
      %160 = sbr.rel (%p157) target = $region28
    $region27: #{res_block.8} parent=5 // pred_region
      %s161 = ssub.s32 %s10, 1
      %p162 = scmp.lt.s32.totalorder %s19, 1
      %s163 = scalar_select %p162, %s19, 1
      %s164 = smul.addr %s163, 72
      %s165 = smul.addr %s164, 4
      %s166 = scalar_lea.vmem %s0, %s165
      %p167 = pneg %p48
      %p168 = pneg %p45
      %p169 = pneg %p69
      %p170 = pneg %p66
      %p171 = pneg %p97
      %p172 = pneg %p94
      %s173 = smul.u32 8, %s20
      %p174 = scmp.lt.s32.totalorder %s19, 1
      %s175 = scalar_select %p174, %s19, 1
      %p176 = scmp.lt.s32.totalorder %s173, 7
      %s177 = scalar_select %p176, %s173, 7
      %s178 = smul.addr %s175, 8
      %s179 = sadd.s32 %s177, %s178
      %s180 = smul.addr %s179, 4
      %s181 = scalar_lea.vmem %s2, %s180
      %p182 = pneg %p125
      %p183 = pneg %p122
      %p184 = scmp.lt.s32.totalorder %s19, 1
      %s185 = scalar_select %p184, %s19, 1
      %p186 = scmp.lt.s32.totalorder %s20, 0
      %s187 = scalar_select %p186, %s20, 0
      %s188 = sadd.s32 %s187, %s185
      %s189 = smul.addr %s188, 2
      %s190 = scalar_lea.vmem %s3, %s189
      %p191 = scmp.lt.s32.totalorder %s19, 1
      %s192 = scalar_select %p191, %s19, 1
      %s193 = smul.addr %s192, 72
      %s194 = smul.addr %s193, 4
      %s195 = scalar_lea.vmem %s0, %s194
      %s196 = smul.u32 8, %s20
      %p197 = scmp.lt.s32.totalorder %s19, 1
      %s198 = scalar_select %p197, %s19, 1
      %p199 = scmp.lt.s32.totalorder %s196, 7
      %s200 = scalar_select %p199, %s196, 7
      %s201 = smul.addr %s198, 8
      %s202 = sadd.s32 %s200, %s201
      %s203 = smul.addr %s202, 4
      %s204 = scalar_lea.vmem %s2, %s203
      %s205 = smul.u32 8, %s20
      %p206 = scmp.lt.s32.totalorder %s19, 1
      %s207 = scalar_select %p206, %s19, 1
      %p208 = scmp.lt.s32.totalorder %s20, 0
      %s209 = scalar_select %p208, %s20, 0
      %s210 = sadd.s32 %s209, %s207
      %s211 = smul.addr %s210, 2
      %s212 = scalar_lea.vmem %s3, %s211
      %s214 = smul.u32 %s20, 8
      %215 = vst [vmem:[#allocation2] sm:$0xff] 0.0
      %216 = vst [vmem:[#allocation2 + $0x8] sm:$0xff] 0.0
      %217 = vst [vmem:[#allocation2 + $0x10] sm:$0xff] 0.0
      %218 = vst [vmem:[#allocation2 + $0x18] sm:$0xff] 0.0
      %219 = vst [vmem:[#allocation2 + $0x20] sm:$0xff] 0.0
      %220 = vst [vmem:[#allocation2 + $0x28] sm:$0xff] 0.0
      %221 = vst [vmem:[#allocation2 + $0x30] sm:$0xff] 0.0
      %222 = vst [vmem:[#allocation2 + $0x38] sm:$0xff] 0.0
      %s223 = smul.u32 %s214, 9
      %s224 = smul.addr %s223, 4
      %s225 = scalar_lea.vmem %s195, %s224
      %v226 = vld [vmem:[%s225] sm:$0xff]
      %v227 = vld [vmem:[%s225 + $0x8] sm:$0xff]
      %v228 = vld [vmem:[%s225 + $0x10] sm:$0xff]
      %v229 = vld [vmem:[%s225 + $0x18] sm:$0xff]
      %v230 = vld [vmem:[%s225 + $0x20] sm:$0xf]
      %v231 = vld [vmem:[%s225 + $0x24] sm:$0xff]
      %v232 = vld [vmem:[%s225 + $0x2c] sm:$0xff]
      %v233 = vld [vmem:[%s225 + $0x34] sm:$0xff]
      %v234 = vld [vmem:[%s225 + $0x3c] sm:$0xff]
      %v235 = vld [vmem:[%s225 + $0x44] sm:$0xf]
      %v236 = vld [vmem:[%s225 + $0x48] sm:$0xff]
      %v237 = vld [vmem:[%s225 + $0x50] sm:$0xff]
      %v238 = vld [vmem:[%s225 + $0x58] sm:$0xff]
      %v239 = vld [vmem:[%s225 + $0x60] sm:$0xff]
      %v240 = vld [vmem:[%s225 + $0x68] sm:$0xf]
      %v241 = vld [vmem:[%s225 + $0x6c] sm:$0xff]
      %v242 = vld [vmem:[%s225 + $0x74] sm:$0xff]
      %v243 = vld [vmem:[%s225 + $0x7c] sm:$0xff]
      %v244 = vld [vmem:[%s225 + $0x84] sm:$0xff]
      %v245 = vld [vmem:[%s225 + $0x8c] sm:$0xf]
      %v246 = vld [vmem:[%s225 + $0x90] sm:$0xff]
      %v247 = vld [vmem:[%s225 + $0x98] sm:$0xff]
      %v248 = vld [vmem:[%s225 + $0xa0] sm:$0xff]
      %v249 = vld [vmem:[%s225 + $0xa8] sm:$0xff]
      %v250 = vld [vmem:[%s225 + $0xb0] sm:$0xf]
      %v251 = vld [vmem:[%s225 + $0xb4] sm:$0xff]
      %v252 = vld [vmem:[%s225 + $0xbc] sm:$0xff]
      %v253 = vld [vmem:[%s225 + $0xc4] sm:$0xff]
      %v254 = vld [vmem:[%s225 + $0xcc] sm:$0xff]
      %v255 = vld [vmem:[%s225 + $0xd4] sm:$0xf]
      %v256 = vld [vmem:[%s225 + $0xd8] sm:$0xff]
      %v257 = vld [vmem:[%s225 + $0xe0] sm:$0xff]
      %v258 = vld [vmem:[%s225 + $0xe8] sm:$0xff]
      %v259 = vld [vmem:[%s225 + $0xf0] sm:$0xff]
      %v260 = vld [vmem:[%s225 + $0xf8] sm:$0xf]
      %v261 = vld [vmem:[%s225 + $0xfc] sm:$0xff]
      %v262 = vld [vmem:[%s225 + $0x104] sm:$0xff]
      %v263 = vld [vmem:[%s225 + $0x10c] sm:$0xff]
      %v264 = vld [vmem:[%s225 + $0x114] sm:$0xff]
      %v265 = vld [vmem:[%s225 + $0x11c] sm:$0xf]
      %v266 = vld [vmem:[#allocation2] sm:$0xff]
      %v267 = vld [vmem:[#allocation2 + $0x8] sm:$0xff]
      %v268 = vld [vmem:[#allocation2 + $0x10] sm:$0xff]
      %v269 = vld [vmem:[#allocation2 + $0x18] sm:$0xff]
      %v270 = vld [vmem:[#allocation2 + $0x20] sm:$0xff]
      %v271 = vld [vmem:[#allocation2 + $0x28] sm:$0xff]
      %v272 = vld [vmem:[#allocation2 + $0x30] sm:$0xff]
      %v273 = vld [vmem:[#allocation2 + $0x38] sm:$0xff]
      %v274 = vld [vmem:[%s1] sm:$0xf]
      %v275 = vld [vmem:[%s1 + $0x4] sm:$0xf]
      %v276 = vld [vmem:[%s1 + $0x8] sm:$0xf]
      %v277 = vld [vmem:[%s1 + $0xc] sm:$0xf]
      %v278 = vld [vmem:[%s1 + $0x10] sm:$0xf]
      %v279 = vld [vmem:[%s1 + $0x14] sm:$0xf]
      %v280 = vld [vmem:[%s1 + $0x18] sm:$0xf]
      %v281 = vld [vmem:[%s1 + $0x1c] sm:$0xf]
      %v282 = vld [vmem:[%s1 + $0x20] sm:$0xf]
      %v283 = vld [vmem:[%s1 + $0x24] sm:$0xf]
      %v284 = vld [vmem:[%s1 + $0x28] sm:$0xf]
      %v285 = vld [vmem:[%s1 + $0x2c] sm:$0xf]
      %v286 = vld [vmem:[%s1 + $0x30] sm:$0xf]
      %v287 = vld [vmem:[%s1 + $0x34] sm:$0xf]
      %v288 = vld [vmem:[%s1 + $0x38] sm:$0xf]
      %v289 = vld [vmem:[%s1 + $0x3c] sm:$0xf]
      %v290 = vld [vmem:[%s1 + $0x40] sm:$0xf]
      %v291 = vld [vmem:[%s1 + $0x44] sm:$0xf]
      %v292 = vld [vmem:[%s1 + $0x48] sm:$0xf]
      %v293 = vld [vmem:[%s1 + $0x4c] sm:$0xf]
      %v294 = vld [vmem:[%s1 + $0x50] sm:$0xf]
      %v295 = vld [vmem:[%s1 + $0x54] sm:$0xf]
      %v296 = vld [vmem:[%s1 + $0x58] sm:$0xf]
      %v297 = vld [vmem:[%s1 + $0x5c] sm:$0xf]
      %v298 = vld [vmem:[%s1 + $0x60] sm:$0xf]
      %v299 = vld [vmem:[%s1 + $0x64] sm:$0xf]
      %v300 = vld [vmem:[%s1 + $0x68] sm:$0xf]
      %v301 = vld [vmem:[%s1 + $0x6c] sm:$0xf]
      %v302 = vld [vmem:[%s1 + $0x70] sm:$0xf]
      %v303 = vld [vmem:[%s1 + $0x74] sm:$0xf]
      %v304 = vld [vmem:[%s1 + $0x78] sm:$0xf]
      %v305 = vld [vmem:[%s1 + $0x7c] sm:$0xf]
      %v306 = vld [vmem:[%s1 + $0x80] sm:$0xf]
      %v307 = vld [vmem:[%s1 + $0x84] sm:$0xf]
      %v308 = vld [vmem:[%s1 + $0x88] sm:$0xf]
      %v309 = vld [vmem:[%s1 + $0x8c] sm:$0xf]
      %v310 = vld [vmem:[%s1 + $0x90] sm:$0xf]
      %v311 = vld [vmem:[%s1 + $0x94] sm:$0xf]
      %v312 = vld [vmem:[%s1 + $0x98] sm:$0xf]
      %v313 = vld [vmem:[%s1 + $0x9c] sm:$0xf]
      %v314 = vld [vmem:[%s1 + $0xa0] sm:$0xf]
      %v315 = vld [vmem:[%s1 + $0xa4] sm:$0xf]
      %v316 = vld [vmem:[%s1 + $0xa8] sm:$0xf]
      %v317 = vld [vmem:[%s1 + $0xac] sm:$0xf]
      %v318 = vld [vmem:[%s1 + $0xb0] sm:$0xf]
      %v319 = vld [vmem:[%s1 + $0xb4] sm:$0xf]
      %v320 = vld [vmem:[%s1 + $0xb8] sm:$0xf]
      %v321 = vld [vmem:[%s1 + $0xbc] sm:$0xf]
      %v322 = vld [vmem:[%s1 + $0xc0] sm:$0xf]
      %v323 = vld [vmem:[%s1 + $0xc4] sm:$0xf]
      %v324 = vld [vmem:[%s1 + $0xc8] sm:$0xf]
      %v325 = vld [vmem:[%s1 + $0xcc] sm:$0xf]
      %v326 = vld [vmem:[%s1 + $0xd0] sm:$0xf]
      %v327 = vld [vmem:[%s1 + $0xd4] sm:$0xf]
      %v328 = vld [vmem:[%s1 + $0xd8] sm:$0xf]
      %v329 = vld [vmem:[%s1 + $0xdc] sm:$0xf]
      %v330 = vld [vmem:[%s1 + $0xe0] sm:$0xf]
      %v331 = vld [vmem:[%s1 + $0xe4] sm:$0xf]
      %v332 = vld [vmem:[%s1 + $0xe8] sm:$0xf]
      %v333 = vld [vmem:[%s1 + $0xec] sm:$0xf]
      %v334 = vld [vmem:[%s1 + $0xf0] sm:$0xf]
      %v335 = vld [vmem:[%s1 + $0xf4] sm:$0xf]
      %v336 = vld [vmem:[%s1 + $0xf8] sm:$0xf]
      %v337 = vld [vmem:[%s1 + $0xfc] sm:$0xf]
      %v338 = vld [vmem:[%s1 + $0x100] sm:$0xf]
      %v339 = vld [vmem:[%s1 + $0x104] sm:$0xf]
      %v340 = vld [vmem:[%s1 + $0x108] sm:$0xf]
      %v341 = vld [vmem:[%s1 + $0x10c] sm:$0xf]
      %v342 = vld [vmem:[%s1 + $0x110] sm:$0xf]
      %v343 = vld [vmem:[%s1 + $0x114] sm:$0xf]
      %v344 = vld [vmem:[%s1 + $0x118] sm:$0xf]
      %v345 = vld [vmem:[%s1 + $0x11c] sm:$0xf]
      %v346 = vld [vmem:[%s1 + $0x120] sm:$0xf]
      %v347 = vld [vmem:[%s1 + $0x124] sm:$0xf]
      %v348 = vld [vmem:[%s1 + $0x128] sm:$0xf]
      %v349 = vld [vmem:[%s1 + $0x12c] sm:$0xf]
      %v350 = vld [vmem:[%s1 + $0x130] sm:$0xf]
      %v351 = vld [vmem:[%s1 + $0x134] sm:$0xf]
      %v352 = vld [vmem:[%s1 + $0x138] sm:$0xf]
      %v353 = vld [vmem:[%s1 + $0x13c] sm:$0xf]
      %v354 = vld [vmem:[%s1 + $0x140] sm:$0xf]
      %v355 = vld [vmem:[%s1 + $0x144] sm:$0xf]
      %v356 = vld [vmem:[%s1 + $0x148] sm:$0xf]
      %v357 = vld [vmem:[%s1 + $0x14c] sm:$0xf]
      %v358 = vld [vmem:[%s1 + $0x150] sm:$0xf]
      %v359 = vld [vmem:[%s1 + $0x154] sm:$0xf]
      %v360 = vld [vmem:[%s1 + $0x158] sm:$0xf]
      %v361 = vld [vmem:[%s1 + $0x15c] sm:$0xf]
      %v362 = vld [vmem:[%s1 + $0x160] sm:$0xf]
      %v363 = vld [vmem:[%s1 + $0x164] sm:$0xf]
      %v364 = vld [vmem:[%s1 + $0x168] sm:$0xf]
      %v365 = vld [vmem:[%s1 + $0x16c] sm:$0xf]
      %v366 = vld [vmem:[%s1 + $0x170] sm:$0xf]
      %v367 = vld [vmem:[%s1 + $0x174] sm:$0xf]
      %v368 = vld [vmem:[%s1 + $0x178] sm:$0xf]
      %v369 = vld [vmem:[%s1 + $0x17c] sm:$0xf]
      %v370 = vld [vmem:[%s1 + $0x180] sm:$0xf]
      %v371 = vld [vmem:[%s1 + $0x184] sm:$0xf]
      %v372 = vld [vmem:[%s1 + $0x188] sm:$0xf]
      %v373 = vld [vmem:[%s1 + $0x18c] sm:$0xf]
      %v374 = vld [vmem:[%s1 + $0x190] sm:$0xf]
      %v375 = vld [vmem:[%s1 + $0x194] sm:$0xf]
      %v376 = vld [vmem:[%s1 + $0x198] sm:$0xf]
      %v377 = vld [vmem:[%s1 + $0x19c] sm:$0xf]
      %v378 = vld [vmem:[%s1 + $0x1a0] sm:$0xf]
      %v379 = vld [vmem:[%s1 + $0x1a4] sm:$0xf]
      %v380 = vld [vmem:[%s1 + $0x1a8] sm:$0xf]
      %v381 = vld [vmem:[%s1 + $0x1ac] sm:$0xf]
      %v382 = vld [vmem:[%s1 + $0x1b0] sm:$0xf]
      %v383 = vld [vmem:[%s1 + $0x1b4] sm:$0xf]
      %v384 = vld [vmem:[%s1 + $0x1b8] sm:$0xf]
      %v385 = vld [vmem:[%s1 + $0x1bc] sm:$0xf]
      %v386 = vld [vmem:[%s1 + $0x1c0] sm:$0xf]
      %v387 = vld [vmem:[%s1 + $0x1c4] sm:$0xf]
      %v388 = vld [vmem:[%s1 + $0x1c8] sm:$0xf]
      %v389 = vld [vmem:[%s1 + $0x1cc] sm:$0xf]
      %v390 = vld [vmem:[%s1 + $0x1d0] sm:$0xf]
      %v391 = vld [vmem:[%s1 + $0x1d4] sm:$0xf]
      %v392 = vld [vmem:[%s1 + $0x1d8] sm:$0xf]
      %v393 = vld [vmem:[%s1 + $0x1dc] sm:$0xf]
      %v394 = vld [vmem:[%s1 + $0x1e0] sm:$0xf]
      %v395 = vld [vmem:[%s1 + $0x1e4] sm:$0xf]
      %v396 = vld [vmem:[%s1 + $0x1e8] sm:$0xf]
      %v397 = vld [vmem:[%s1 + $0x1ec] sm:$0xf]
      %v398 = vld [vmem:[%s1 + $0x1f0] sm:$0xf]
      %v399 = vld [vmem:[%s1 + $0x1f4] sm:$0xf]
      %v400 = vld [vmem:[%s1 + $0x1f8] sm:$0xf]
      %v401 = vld [vmem:[%s1 + $0x1fc] sm:$0xf]
      %v402 = vld [vmem:[%s1 + $0x200] sm:$0xf]
      %v403 = vld [vmem:[%s1 + $0x204] sm:$0xf]
      %v404 = vld [vmem:[%s1 + $0x208] sm:$0xf]
      %v405 = vld [vmem:[%s1 + $0x20c] sm:$0xf]
      %v406 = vld [vmem:[%s1 + $0x210] sm:$0xf]
      %v407 = vld [vmem:[%s1 + $0x214] sm:$0xf]
      %v408 = vld [vmem:[%s1 + $0x218] sm:$0xf]
      %v409 = vld [vmem:[%s1 + $0x21c] sm:$0xf]
      %v410 = vld [vmem:[%s1 + $0x220] sm:$0xf]
      %v411 = vld [vmem:[%s1 + $0x224] sm:$0xf]
      %v412 = vld [vmem:[%s1 + $0x228] sm:$0xf]
      %v413 = vld [vmem:[%s1 + $0x22c] sm:$0xf]
      %v414 = vld [vmem:[%s1 + $0x230] sm:$0xf]
      %v415 = vld [vmem:[%s1 + $0x234] sm:$0xf]
      %v416 = vld [vmem:[%s1 + $0x238] sm:$0xf]
      %v417 = vld [vmem:[%s1 + $0x23c] sm:$0xf]
      %v458 = vunpack.c.l.b16 %v226
      %v459 = vunpack.c.h.b16 %v226
      %v460 = vunpack.c.l.b16 %v227
      %v461 = vunpack.c.h.b16 %v227
      %v462 = vunpack.c.l.b16 %v228
      %v463 = vunpack.c.h.b16 %v228
      %v464 = vunpack.c.l.b16 %v229
      %v465 = vunpack.c.h.b16 %v229
      %v466 = vunpack.c.l.b16 %v230
      %v467 = vunpack.c.l.b16 %v231
      %v468 = vunpack.c.h.b16 %v231
      %v469 = vunpack.c.l.b16 %v232
      %v470 = vunpack.c.h.b16 %v232
      %v471 = vunpack.c.l.b16 %v233
      %v472 = vunpack.c.h.b16 %v233
      %v473 = vunpack.c.l.b16 %v234
      %v474 = vunpack.c.h.b16 %v234
      %v475 = vunpack.c.l.b16 %v235
      %v476 = vunpack.c.l.b16 %v236
      %v477 = vunpack.c.h.b16 %v236
      %v478 = vunpack.c.l.b16 %v237
      %v479 = vunpack.c.h.b16 %v237
      %v480 = vunpack.c.l.b16 %v238
      %v481 = vunpack.c.h.b16 %v238
      %v482 = vunpack.c.l.b16 %v239
      %v483 = vunpack.c.h.b16 %v239
      %v484 = vunpack.c.l.b16 %v240
      %v485 = vunpack.c.l.b16 %v241
      %v486 = vunpack.c.h.b16 %v241
      %v487 = vunpack.c.l.b16 %v242
      %v488 = vunpack.c.h.b16 %v242
      %v489 = vunpack.c.l.b16 %v243
      %v490 = vunpack.c.h.b16 %v243
      %v491 = vunpack.c.l.b16 %v244
      %v492 = vunpack.c.h.b16 %v244
      %v493 = vunpack.c.l.b16 %v245
      %v494 = vunpack.c.l.b16 %v246
      %v495 = vunpack.c.h.b16 %v246
      %v496 = vunpack.c.l.b16 %v247
      %v497 = vunpack.c.h.b16 %v247
      %v498 = vunpack.c.l.b16 %v248
      %v499 = vunpack.c.h.b16 %v248
      %v500 = vunpack.c.l.b16 %v249
      %v501 = vunpack.c.h.b16 %v249
      %v502 = vunpack.c.l.b16 %v250
      %v503 = vunpack.c.l.b16 %v251
      %v504 = vunpack.c.h.b16 %v251
      %v505 = vunpack.c.l.b16 %v252
      %v506 = vunpack.c.h.b16 %v252
      %v507 = vunpack.c.l.b16 %v253
      %v508 = vunpack.c.h.b16 %v253
      %v509 = vunpack.c.l.b16 %v254
      %v510 = vunpack.c.h.b16 %v254
      %v511 = vunpack.c.l.b16 %v255
      %v512 = vunpack.c.l.b16 %v256
      %v513 = vunpack.c.h.b16 %v256
      %v514 = vunpack.c.l.b16 %v257
      %v515 = vunpack.c.h.b16 %v257
      %v516 = vunpack.c.l.b16 %v258
      %v517 = vunpack.c.h.b16 %v258
      %v518 = vunpack.c.l.b16 %v259
      %v519 = vunpack.c.h.b16 %v259
      %v520 = vunpack.c.l.b16 %v260
      %v521 = vunpack.c.l.b16 %v261
      %v522 = vunpack.c.h.b16 %v261
      %v523 = vunpack.c.l.b16 %v262
      %v524 = vunpack.c.h.b16 %v262
      %v525 = vunpack.c.l.b16 %v263
      %v526 = vunpack.c.h.b16 %v263
      %v527 = vunpack.c.l.b16 %v264
      %v528 = vunpack.c.h.b16 %v264
      %v529 = vunpack.c.l.b16 %v265
      %v530 = vpack.c.b16 %v467, %v458
      %v531 = vpack.c.b16 %v468, %v459
      %v532 = vpack.c.b16 %v469, %v460
      %v533 = vpack.c.b16 %v470, %v461
      %v534 = vpack.c.b16 %v471, %v462
      %v535 = vpack.c.b16 %v472, %v463
      %v536 = vpack.c.b16 %v473, %v464
      %v537 = vpack.c.b16 %v474, %v465
      %v538 = vpack.c.b16 %v475, %v466
      %v539 = vpack.c.b16 %v485, %v476
      %v540 = vpack.c.b16 %v486, %v477
      %v541 = vpack.c.b16 %v487, %v478
      %v542 = vpack.c.b16 %v488, %v479
      %v543 = vpack.c.b16 %v489, %v480
      %v544 = vpack.c.b16 %v490, %v481
      %v545 = vpack.c.b16 %v491, %v482
      %v546 = vpack.c.b16 %v492, %v483
      %v547 = vpack.c.b16 %v493, %v484
      %v548 = vpack.c.b16 %v503, %v494
      %v549 = vpack.c.b16 %v504, %v495
      %v550 = vpack.c.b16 %v505, %v496
      %v551 = vpack.c.b16 %v506, %v497
      %v552 = vpack.c.b16 %v507, %v498
      %v553 = vpack.c.b16 %v508, %v499
      %v554 = vpack.c.b16 %v509, %v500
      %v555 = vpack.c.b16 %v510, %v501
      %v556 = vpack.c.b16 %v511, %v502
      %v557 = vpack.c.b16 %v521, %v512
      %v558 = vpack.c.b16 %v522, %v513
      %v559 = vpack.c.b16 %v523, %v514
      %v560 = vpack.c.b16 %v524, %v515
      %v561 = vpack.c.b16 %v525, %v516
      %v562 = vpack.c.b16 %v526, %v517
      %v563 = vpack.c.b16 %v527, %v518
      %v564 = vpack.c.b16 %v528, %v519
      %v565 = vpack.c.b16 %v529, %v520
      %v746 = vunpack.c.l.b16 %v274
      %v747 = vunpack.c.l.b16 %v275
      %v748 = vunpack.c.l.b16 %v276
      %v749 = vunpack.c.l.b16 %v277
      %v750 = vunpack.c.l.b16 %v278
      %v751 = vunpack.c.l.b16 %v279
      %v752 = vunpack.c.l.b16 %v280
      %v753 = vunpack.c.l.b16 %v281
      %v754 = vunpack.c.l.b16 %v282
      %v755 = vunpack.c.l.b16 %v283
      %v756 = vunpack.c.l.b16 %v284
      %v757 = vunpack.c.l.b16 %v285
      %v758 = vunpack.c.l.b16 %v286
      %v759 = vunpack.c.l.b16 %v287
      %v760 = vunpack.c.l.b16 %v288
      %v761 = vunpack.c.l.b16 %v289
      %v762 = vunpack.c.l.b16 %v290
      %v763 = vunpack.c.l.b16 %v291
      %v764 = vunpack.c.l.b16 %v292
      %v765 = vunpack.c.l.b16 %v293
      %v766 = vunpack.c.l.b16 %v294
      %v767 = vunpack.c.l.b16 %v295
      %v768 = vunpack.c.l.b16 %v296
      %v769 = vunpack.c.l.b16 %v297
      %v770 = vunpack.c.l.b16 %v298
      %v771 = vunpack.c.l.b16 %v299
      %v772 = vunpack.c.l.b16 %v300
      %v773 = vunpack.c.l.b16 %v301
      %v774 = vunpack.c.l.b16 %v302
      %v775 = vunpack.c.l.b16 %v303
      %v776 = vunpack.c.l.b16 %v304
      %v777 = vunpack.c.l.b16 %v305
      %v778 = vunpack.c.l.b16 %v306
      %v779 = vunpack.c.l.b16 %v307
      %v780 = vunpack.c.l.b16 %v308
      %v781 = vunpack.c.l.b16 %v309
      %v782 = vunpack.c.l.b16 %v310
      %v783 = vunpack.c.l.b16 %v311
      %v784 = vunpack.c.l.b16 %v312
      %v785 = vunpack.c.l.b16 %v313
      %v786 = vunpack.c.l.b16 %v314
      %v787 = vunpack.c.l.b16 %v315
      %v788 = vunpack.c.l.b16 %v316
      %v789 = vunpack.c.l.b16 %v317
      %v790 = vunpack.c.l.b16 %v318
      %v791 = vunpack.c.l.b16 %v319
      %v792 = vunpack.c.l.b16 %v320
      %v793 = vunpack.c.l.b16 %v321
      %v794 = vunpack.c.l.b16 %v322
      %v795 = vunpack.c.l.b16 %v323
      %v796 = vunpack.c.l.b16 %v324
      %v797 = vunpack.c.l.b16 %v325
      %v798 = vunpack.c.l.b16 %v326
      %v799 = vunpack.c.l.b16 %v327
      %v800 = vunpack.c.l.b16 %v328
      %v801 = vunpack.c.l.b16 %v329
      %v802 = vunpack.c.l.b16 %v330
      %v803 = vunpack.c.l.b16 %v331
      %v804 = vunpack.c.l.b16 %v332
      %v805 = vunpack.c.l.b16 %v333
      %v806 = vunpack.c.l.b16 %v334
      %v807 = vunpack.c.l.b16 %v335
      %v808 = vunpack.c.l.b16 %v336
      %v809 = vunpack.c.l.b16 %v337
      %v810 = vunpack.c.l.b16 %v338
      %v811 = vunpack.c.l.b16 %v339
      %v812 = vunpack.c.l.b16 %v340
      %v813 = vunpack.c.l.b16 %v341
      %v814 = vunpack.c.l.b16 %v342
      %v815 = vunpack.c.l.b16 %v343
      %v816 = vunpack.c.l.b16 %v344
      %v817 = vunpack.c.l.b16 %v345
      %v818 = vunpack.c.l.b16 %v346
      %v819 = vunpack.c.l.b16 %v347
      %v820 = vunpack.c.l.b16 %v348
      %v821 = vunpack.c.l.b16 %v349
      %v822 = vunpack.c.l.b16 %v350
      %v823 = vunpack.c.l.b16 %v351
      %v824 = vunpack.c.l.b16 %v352
      %v825 = vunpack.c.l.b16 %v353
      %v826 = vunpack.c.l.b16 %v354
      %v827 = vunpack.c.l.b16 %v355
      %v828 = vunpack.c.l.b16 %v356
      %v829 = vunpack.c.l.b16 %v357
      %v830 = vunpack.c.l.b16 %v358
      %v831 = vunpack.c.l.b16 %v359
      %v832 = vunpack.c.l.b16 %v360
      %v833 = vunpack.c.l.b16 %v361
      %v834 = vunpack.c.l.b16 %v362
      %v835 = vunpack.c.l.b16 %v363
      %v836 = vunpack.c.l.b16 %v364
      %v837 = vunpack.c.l.b16 %v365
      %v838 = vunpack.c.l.b16 %v366
      %v839 = vunpack.c.l.b16 %v367
      %v840 = vunpack.c.l.b16 %v368
      %v841 = vunpack.c.l.b16 %v369
      %v842 = vunpack.c.l.b16 %v370
      %v843 = vunpack.c.l.b16 %v371
      %v844 = vunpack.c.l.b16 %v372
      %v845 = vunpack.c.l.b16 %v373
      %v846 = vunpack.c.l.b16 %v374
      %v847 = vunpack.c.l.b16 %v375
      %v848 = vunpack.c.l.b16 %v376
      %v849 = vunpack.c.l.b16 %v377
      %v850 = vunpack.c.l.b16 %v378
      %v851 = vunpack.c.l.b16 %v379
      %v852 = vunpack.c.l.b16 %v380
      %v853 = vunpack.c.l.b16 %v381
      %v854 = vunpack.c.l.b16 %v382
      %v855 = vunpack.c.l.b16 %v383
      %v856 = vunpack.c.l.b16 %v384
      %v857 = vunpack.c.l.b16 %v385
      %v858 = vunpack.c.l.b16 %v386
      %v859 = vunpack.c.l.b16 %v387
      %v860 = vunpack.c.l.b16 %v388
      %v861 = vunpack.c.l.b16 %v389
      %v862 = vunpack.c.l.b16 %v390
      %v863 = vunpack.c.l.b16 %v391
      %v864 = vunpack.c.l.b16 %v392
      %v865 = vunpack.c.l.b16 %v393
      %v866 = vunpack.c.l.b16 %v394
      %v867 = vunpack.c.l.b16 %v395
      %v868 = vunpack.c.l.b16 %v396
      %v869 = vunpack.c.l.b16 %v397
      %v870 = vunpack.c.l.b16 %v398
      %v871 = vunpack.c.l.b16 %v399
      %v872 = vunpack.c.l.b16 %v400
      %v873 = vunpack.c.l.b16 %v401
      %v874 = vunpack.c.l.b16 %v402
      %v875 = vunpack.c.l.b16 %v403
      %v876 = vunpack.c.l.b16 %v404
      %v877 = vunpack.c.l.b16 %v405
      %v878 = vunpack.c.l.b16 %v406
      %v879 = vunpack.c.l.b16 %v407
      %v880 = vunpack.c.l.b16 %v408
      %v881 = vunpack.c.l.b16 %v409
      %v882 = vunpack.c.l.b16 %v410
      %v883 = vunpack.c.l.b16 %v411
      %v884 = vunpack.c.l.b16 %v412
      %v885 = vunpack.c.l.b16 %v413
      %v886 = vunpack.c.l.b16 %v414
      %v887 = vunpack.c.l.b16 %v415
      %v888 = vunpack.c.l.b16 %v416
      %v889 = vunpack.c.l.b16 %v417
      %v890 = vpack.c.b16 %v747, %v746
      %v891 = vpack.c.b16 %v749, %v748
      %v892 = vpack.c.b16 %v751, %v750
      %v893 = vpack.c.b16 %v753, %v752
      %v894 = vpack.c.b16 %v755, %v754
      %v895 = vpack.c.b16 %v757, %v756
      %v896 = vpack.c.b16 %v759, %v758
      %v897 = vpack.c.b16 %v761, %v760
      %v898 = vpack.c.b16 %v763, %v762
      %v899 = vpack.c.b16 %v765, %v764
      %v900 = vpack.c.b16 %v767, %v766
      %v901 = vpack.c.b16 %v769, %v768
      %v902 = vpack.c.b16 %v771, %v770
      %v903 = vpack.c.b16 %v773, %v772
      %v904 = vpack.c.b16 %v775, %v774
      %v905 = vpack.c.b16 %v777, %v776
      %v906 = vpack.c.b16 %v779, %v778
      %v907 = vpack.c.b16 %v781, %v780
      %v908 = vpack.c.b16 %v783, %v782
      %v909 = vpack.c.b16 %v785, %v784
      %v910 = vpack.c.b16 %v787, %v786
      %v911 = vpack.c.b16 %v789, %v788
      %v912 = vpack.c.b16 %v791, %v790
      %v913 = vpack.c.b16 %v793, %v792
      %v914 = vpack.c.b16 %v795, %v794
      %v915 = vpack.c.b16 %v797, %v796
      %v916 = vpack.c.b16 %v799, %v798
      %v917 = vpack.c.b16 %v801, %v800
      %v918 = vpack.c.b16 %v803, %v802
      %v919 = vpack.c.b16 %v805, %v804
      %v920 = vpack.c.b16 %v807, %v806
      %v921 = vpack.c.b16 %v809, %v808
      %v922 = vpack.c.b16 %v811, %v810
      %v923 = vpack.c.b16 %v813, %v812
      %v924 = vpack.c.b16 %v815, %v814
      %v925 = vpack.c.b16 %v817, %v816
      %v926 = vpack.c.b16 %v819, %v818
      %v927 = vpack.c.b16 %v821, %v820
      %v928 = vpack.c.b16 %v823, %v822
      %v929 = vpack.c.b16 %v825, %v824
      %v930 = vpack.c.b16 %v827, %v826
      %v931 = vpack.c.b16 %v829, %v828
      %v932 = vpack.c.b16 %v831, %v830
      %v933 = vpack.c.b16 %v833, %v832
      %v934 = vpack.c.b16 %v835, %v834
      %v935 = vpack.c.b16 %v837, %v836
      %v936 = vpack.c.b16 %v839, %v838
      %v937 = vpack.c.b16 %v841, %v840
      %v938 = vpack.c.b16 %v843, %v842
      %v939 = vpack.c.b16 %v845, %v844
      %v940 = vpack.c.b16 %v847, %v846
      %v941 = vpack.c.b16 %v849, %v848
      %v942 = vpack.c.b16 %v851, %v850
      %v943 = vpack.c.b16 %v853, %v852
      %v944 = vpack.c.b16 %v855, %v854
      %v945 = vpack.c.b16 %v857, %v856
      %v946 = vpack.c.b16 %v859, %v858
      %v947 = vpack.c.b16 %v861, %v860
      %v948 = vpack.c.b16 %v863, %v862
      %v949 = vpack.c.b16 %v865, %v864
      %v950 = vpack.c.b16 %v867, %v866
      %v951 = vpack.c.b16 %v869, %v868
      %v952 = vpack.c.b16 %v871, %v870
      %v953 = vpack.c.b16 %v873, %v872
      %v954 = vpack.c.b16 %v875, %v874
      %v955 = vpack.c.b16 %v877, %v876
      %v956 = vpack.c.b16 %v879, %v878
      %v957 = vpack.c.b16 %v881, %v880
      %v958 = vpack.c.b16 %v883, %v882
      %v959 = vpack.c.b16 %v885, %v884
      %v960 = vpack.c.b16 %v887, %v886
      %v961 = vpack.c.b16 %v889, %v888
      %1034 = vmatprep.subr.bf16.mxu0 0
      %1035 = vmatpush1.bf16.msra.mxu0 %v890
      %1036 = vmatprep.subr.bf16.mxu0 0
      %1037 = vmatpush1.bf16.msra.mxu0 %v891
      %1038 = vmatprep.subr.bf16.mxu0 0
      %1039 = vmatpush1.bf16.msra.mxu0 %v892
      %1040 = vmatprep.subr.bf16.mxu0 0
      %1041 = vmatpush1.bf16.msra.mxu0 %v893
      %1042 = vmatprep.subr.bf16.mxu0 0
      %1043 = vmatpush1.bf16.msra.mxu0 %v894
      %1044 = vmatprep.subr.bf16.mxu0 0
      %1045 = vmatpush1.bf16.msra.mxu0 %v895
      %1046 = vmatprep.subr.bf16.mxu0 0
      %1047 = vmatpush1.bf16.msra.mxu0 %v896
      %1048 = vmatprep.subr.bf16.mxu0 0
      %1049 = vmatpush1.bf16.msra.mxu0 %v897
      %1050 = vmatprep.subr.bf16.mxu0 0
      %1051 = vmatpush1.bf16.msra.mxu0 %v898
      %1052 = vmatprep.subr.bf16.mxu0 0
      %1053 = vmatpush1.bf16.msra.mxu0 %v899
      %1054 = vmatprep.subr.bf16.mxu0 0
      %1055 = vmatpush1.bf16.msra.mxu0 %v900
      %1056 = vmatprep.subr.bf16.mxu0 0
      %1057 = vmatpush1.bf16.msra.mxu0 %v901
      %1058 = vmatprep.subr.bf16.mxu0 0
      %1059 = vmatpush1.bf16.msra.mxu0 %v902
      %1060 = vmatprep.subr.bf16.mxu0 0
      %1061 = vmatpush1.bf16.msra.mxu0 %v903
      %1062 = vmatprep.subr.bf16.mxu0 0
      %1063 = vmatpush1.bf16.msra.mxu0 %v904
      %1064 = vmatprep.subr.bf16.mxu0 0
      %1065 = vmatpush1.bf16.msra.mxu0 %v905
      %1066 = vmatprep.mubr.bf16.mxu0 %v531
      %1067 = vmatmul.mubr.bf16.gmra.mrb[0].mxu0 %v530
      %v1068 = vpop.f32.mrb[0].mxu0
      %v1069 = vadd.f32 0.0, %v1068
      %v1070 = vpop.f32.mrb[0].mxu0
      %v1071 = vpop.f32.mrb[0].mxu0
      %v1072 = vadd.f32 0.0, %v1071
      %v1073 = vpop.f32.mrb[0].mxu0
      %1074 = vmatprep.mubr.bf16.mxu0 %v540
      %1075 = vmatmul.mubr.bf16.gmra.mrb[0].mxu0 %v539
      %v1076 = vpop.f32.mrb[0].mxu0
      %v1077 = vadd.f32 0.0, %v1076
      %v1078 = vpop.f32.mrb[0].mxu0
      %v1079 = vpop.f32.mrb[0].mxu0
      %v1080 = vadd.f32 0.0, %v1079
      %v1081 = vpop.f32.mrb[0].mxu0
      %1082 = vmatprep.mubr.bf16.mxu0 %v549
      %1083 = vmatmul.mubr.bf16.gmra.mrb[0].mxu0 %v548
      %v1084 = vpop.f32.mrb[0].mxu0
      %v1085 = vadd.f32 0.0, %v1084
      %v1086 = vpop.f32.mrb[0].mxu0
      %v1087 = vpop.f32.mrb[0].mxu0
      %v1088 = vadd.f32 0.0, %v1087
      %v1089 = vpop.f32.mrb[0].mxu0
      %1090 = vmatprep.mubr.bf16.mxu0 %v558
      %1091 = vmatmul.mubr.bf16.gmra.mrb[0].mxu0 %v557
      %v1092 = vpop.f32.mrb[0].mxu0
      %v1093 = vadd.f32 0.0, %v1092
      %v1094 = vpop.f32.mrb[0].mxu0
      %v1095 = vpop.f32.mrb[0].mxu0
      %v1096 = vadd.f32 0.0, %v1095
      %v1097 = vpop.f32.mrb[0].mxu0
      %1098 = vdwg.mxu0
      %1099 = vmatprep.subr.bf16.mxu0 0
      %1100 = vmatpush1.bf16.msra.mxu0 %v906
      %1101 = vmatprep.subr.bf16.mxu0 0
      %1102 = vmatpush1.bf16.msra.mxu0 %v907
      %1103 = vmatprep.subr.bf16.mxu0 0
      %1104 = vmatpush1.bf16.msra.mxu0 %v908
      %1105 = vmatprep.subr.bf16.mxu0 0
      %1106 = vmatpush1.bf16.msra.mxu0 %v909
      %1107 = vmatprep.subr.bf16.mxu0 0
      %1108 = vmatpush1.bf16.msra.mxu0 %v910
      %1109 = vmatprep.subr.bf16.mxu0 0
      %1110 = vmatpush1.bf16.msra.mxu0 %v911
      %1111 = vmatprep.subr.bf16.mxu0 0
      %1112 = vmatpush1.bf16.msra.mxu0 %v912
      %1113 = vmatprep.subr.bf16.mxu0 0
      %1114 = vmatpush1.bf16.msra.mxu0 %v913
      %1115 = vmatprep.subr.bf16.mxu0 0
      %1116 = vmatpush1.bf16.msra.mxu0 %v914
      %1117 = vmatprep.subr.bf16.mxu0 0
      %1118 = vmatpush1.bf16.msra.mxu0 %v915
      %1119 = vmatprep.subr.bf16.mxu0 0
      %1120 = vmatpush1.bf16.msra.mxu0 %v916
      %1121 = vmatprep.subr.bf16.mxu0 0
      %1122 = vmatpush1.bf16.msra.mxu0 %v917
      %1123 = vmatprep.subr.bf16.mxu0 0
      %1124 = vmatpush1.bf16.msra.mxu0 %v918
      %1125 = vmatprep.subr.bf16.mxu0 0
      %1126 = vmatpush1.bf16.msra.mxu0 %v919
      %1127 = vmatprep.subr.bf16.mxu0 0
      %1128 = vmatpush1.bf16.msra.mxu0 %v920
      %1129 = vmatprep.subr.bf16.mxu0 0
      %1130 = vmatpush1.bf16.msra.mxu0 %v921
      %1131 = vmatprep.mubr.bf16.mxu0 %v533
      %1132 = vmatmul.mubr.bf16.gmra.mrb[0].mxu0 %v532
      %v1133 = vpop.f32.mrb[0].mxu0
      %v1134 = vadd.f32 %v1069, %v1133
      %v1135 = vpop.f32.mrb[0].mxu0
      %v1136 = vpop.f32.mrb[0].mxu0
      %v1137 = vadd.f32 %v1072, %v1136
      %v1138 = vpop.f32.mrb[0].mxu0
      %1139 = vmatprep.mubr.bf16.mxu0 %v542
      %1140 = vmatmul.mubr.bf16.gmra.mrb[0].mxu0 %v541
      %v1141 = vpop.f32.mrb[0].mxu0
      %v1142 = vadd.f32 %v1077, %v1141
      %v1143 = vpop.f32.mrb[0].mxu0
      %v1144 = vpop.f32.mrb[0].mxu0
      %v1145 = vadd.f32 %v1080, %v1144
      %v1146 = vpop.f32.mrb[0].mxu0
      %1147 = vmatprep.mubr.bf16.mxu0 %v551
      %1148 = vmatmul.mubr.bf16.gmra.mrb[0].mxu0 %v550
      %v1149 = vpop.f32.mrb[0].mxu0
      %v1150 = vadd.f32 %v1085, %v1149
      %v1151 = vpop.f32.mrb[0].mxu0
      %v1152 = vpop.f32.mrb[0].mxu0
      %v1153 = vadd.f32 %v1088, %v1152
      %v1154 = vpop.f32.mrb[0].mxu0
      %1155 = vmatprep.mubr.bf16.mxu0 %v560
      %1156 = vmatmul.mubr.bf16.gmra.mrb[0].mxu0 %v559
      %v1157 = vpop.f32.mrb[0].mxu0
      %v1158 = vadd.f32 %v1093, %v1157
      %v1159 = vpop.f32.mrb[0].mxu0
      %v1160 = vpop.f32.mrb[0].mxu0
      %v1161 = vadd.f32 %v1096, %v1160
      %v1162 = vpop.f32.mrb[0].mxu0
      %1163 = vdwg.mxu0
      %1164 = vmatprep.subr.bf16.mxu0 0
      %1165 = vmatpush1.bf16.msra.mxu0 %v922
      %1166 = vmatprep.subr.bf16.mxu0 0
      %1167 = vmatpush1.bf16.msra.mxu0 %v923
      %1168 = vmatprep.subr.bf16.mxu0 0
      %1169 = vmatpush1.bf16.msra.mxu0 %v924
      %1170 = vmatprep.subr.bf16.mxu0 0
      %1171 = vmatpush1.bf16.msra.mxu0 %v925
      %1172 = vmatprep.subr.bf16.mxu0 0
      %1173 = vmatpush1.bf16.msra.mxu0 %v926
      %1174 = vmatprep.subr.bf16.mxu0 0
      %1175 = vmatpush1.bf16.msra.mxu0 %v927
      %1176 = vmatprep.subr.bf16.mxu0 0
      %1177 = vmatpush1.bf16.msra.mxu0 %v928
      %1178 = vmatprep.subr.bf16.mxu0 0
      %1179 = vmatpush1.bf16.msra.mxu0 %v929
      %1180 = vmatprep.subr.bf16.mxu0 0
      %1181 = vmatpush1.bf16.msra.mxu0 %v930
      %1182 = vmatprep.subr.bf16.mxu0 0
      %1183 = vmatpush1.bf16.msra.mxu0 %v931
      %1184 = vmatprep.subr.bf16.mxu0 0
      %1185 = vmatpush1.bf16.msra.mxu0 %v932
      %1186 = vmatprep.subr.bf16.mxu0 0
      %1187 = vmatpush1.bf16.msra.mxu0 %v933
      %1188 = vmatprep.subr.bf16.mxu0 0
      %1189 = vmatpush1.bf16.msra.mxu0 %v934
      %1190 = vmatprep.subr.bf16.mxu0 0
      %1191 = vmatpush1.bf16.msra.mxu0 %v935
      %1192 = vmatprep.subr.bf16.mxu0 0
      %1193 = vmatpush1.bf16.msra.mxu0 %v936
      %1194 = vmatprep.subr.bf16.mxu0 0
      %1195 = vmatpush1.bf16.msra.mxu0 %v937
      %1196 = vmatprep.mubr.bf16.mxu0 %v535
      %1197 = vmatmul.mubr.bf16.gmra.mrb[0].mxu0 %v534
      %v1198 = vpop.f32.mrb[0].mxu0
      %v1199 = vadd.f32 %v1134, %v1198
      %v1200 = vpop.f32.mrb[0].mxu0
      %v1201 = vpop.f32.mrb[0].mxu0
      %v1202 = vadd.f32 %v1137, %v1201
      %v1203 = vpop.f32.mrb[0].mxu0
      %1204 = vmatprep.mubr.bf16.mxu0 %v544
      %1205 = vmatmul.mubr.bf16.gmra.mrb[0].mxu0 %v543
      %v1206 = vpop.f32.mrb[0].mxu0
      %v1207 = vadd.f32 %v1142, %v1206
      %v1208 = vpop.f32.mrb[0].mxu0
      %v1209 = vpop.f32.mrb[0].mxu0
      %v1210 = vadd.f32 %v1145, %v1209
      %v1211 = vpop.f32.mrb[0].mxu0
      %1212 = vmatprep.mubr.bf16.mxu0 %v553
      %1213 = vmatmul.mubr.bf16.gmra.mrb[0].mxu0 %v552
      %v1214 = vpop.f32.mrb[0].mxu0
      %v1215 = vadd.f32 %v1150, %v1214
      %v1216 = vpop.f32.mrb[0].mxu0
      %v1217 = vpop.f32.mrb[0].mxu0
      %v1218 = vadd.f32 %v1153, %v1217
      %v1219 = vpop.f32.mrb[0].mxu0
      %1220 = vmatprep.mubr.bf16.mxu0 %v562
      %1221 = vmatmul.mubr.bf16.gmra.mrb[0].mxu0 %v561
      %v1222 = vpop.f32.mrb[0].mxu0
      %v1223 = vadd.f32 %v1158, %v1222
      %v1224 = vpop.f32.mrb[0].mxu0
      %v1225 = vpop.f32.mrb[0].mxu0
      %v1226 = vadd.f32 %v1161, %v1225
      %v1227 = vpop.f32.mrb[0].mxu0
      %1228 = vdwg.mxu0
      %1229 = vmatprep.subr.bf16.mxu0 0
      %1230 = vmatpush1.bf16.msra.mxu0 %v938
      %1231 = vmatprep.subr.bf16.mxu0 0
      %1232 = vmatpush1.bf16.msra.mxu0 %v939
      %1233 = vmatprep.subr.bf16.mxu0 0
      %1234 = vmatpush1.bf16.msra.mxu0 %v940
      %1235 = vmatprep.subr.bf16.mxu0 0
      %1236 = vmatpush1.bf16.msra.mxu0 %v941
      %1237 = vmatprep.subr.bf16.mxu0 0
      %1238 = vmatpush1.bf16.msra.mxu0 %v942
      %1239 = vmatprep.subr.bf16.mxu0 0
      %1240 = vmatpush1.bf16.msra.mxu0 %v943
      %1241 = vmatprep.subr.bf16.mxu0 0
      %1242 = vmatpush1.bf16.msra.mxu0 %v944
      %1243 = vmatprep.subr.bf16.mxu0 0
      %1244 = vmatpush1.bf16.msra.mxu0 %v945
      %1245 = vmatprep.subr.bf16.mxu0 0
      %1246 = vmatpush1.bf16.msra.mxu0 %v946
      %1247 = vmatprep.subr.bf16.mxu0 0
      %1248 = vmatpush1.bf16.msra.mxu0 %v947
      %1249 = vmatprep.subr.bf16.mxu0 0
      %1250 = vmatpush1.bf16.msra.mxu0 %v948
      %1251 = vmatprep.subr.bf16.mxu0 0
      %1252 = vmatpush1.bf16.msra.mxu0 %v949
      %1253 = vmatprep.subr.bf16.mxu0 0
      %1254 = vmatpush1.bf16.msra.mxu0 %v950
      %1255 = vmatprep.subr.bf16.mxu0 0
      %1256 = vmatpush1.bf16.msra.mxu0 %v951
      %1257 = vmatprep.subr.bf16.mxu0 0
      %1258 = vmatpush1.bf16.msra.mxu0 %v952
      %1259 = vmatprep.subr.bf16.mxu0 0
      %1260 = vmatpush1.bf16.msra.mxu0 %v953
      %1261 = vmatprep.mubr.bf16.mxu0 %v537
      %1262 = vmatmul.mubr.bf16.gmra.mrb[0].mxu0 %v536
      %v1263 = vpop.f32.mrb[0].mxu0
      %v1264 = vadd.f32 %v1199, %v1263
      %v1265 = vpop.f32.mrb[0].mxu0
      %v1266 = vpop.f32.mrb[0].mxu0
      %v1267 = vadd.f32 %v1202, %v1266
      %v1268 = vpop.f32.mrb[0].mxu0
      %1269 = vmatprep.mubr.bf16.mxu0 %v546
      %1270 = vmatmul.mubr.bf16.gmra.mrb[0].mxu0 %v545
      %v1271 = vpop.f32.mrb[0].mxu0
      %v1272 = vadd.f32 %v1207, %v1271
      %v1273 = vpop.f32.mrb[0].mxu0
      %v1274 = vpop.f32.mrb[0].mxu0
      %v1275 = vadd.f32 %v1210, %v1274
      %v1276 = vpop.f32.mrb[0].mxu0
      %1277 = vmatprep.mubr.bf16.mxu0 %v555
      %1278 = vmatmul.mubr.bf16.gmra.mrb[0].mxu0 %v554
      %v1279 = vpop.f32.mrb[0].mxu0
      %v1280 = vadd.f32 %v1215, %v1279
      %v1281 = vpop.f32.mrb[0].mxu0
      %v1282 = vpop.f32.mrb[0].mxu0
      %v1283 = vadd.f32 %v1218, %v1282
      %v1284 = vpop.f32.mrb[0].mxu0
      %1285 = vmatprep.mubr.bf16.mxu0 %v564
      %1286 = vmatmul.mubr.bf16.gmra.mrb[0].mxu0 %v563
      %v1287 = vpop.f32.mrb[0].mxu0
      %v1288 = vadd.f32 %v1223, %v1287
      %v1289 = vpop.f32.mrb[0].mxu0
      %v1290 = vpop.f32.mrb[0].mxu0
      %v1291 = vadd.f32 %v1226, %v1290
      %v1292 = vpop.f32.mrb[0].mxu0
      %1293 = vdwg.mxu0
      %1294 = vmatprep.subr.bf16.mxu0 0
      %1295 = vmatpush1.bf16.msra.mxu0 %v954
      %1296 = vmatprep.subr.bf16.mxu0 0
      %1297 = vmatpush1.bf16.msra.mxu0 %v955
      %1298 = vmatprep.subr.bf16.mxu0 0
      %1299 = vmatpush1.bf16.msra.mxu0 %v956
      %1300 = vmatprep.subr.bf16.mxu0 0
      %1301 = vmatpush1.bf16.msra.mxu0 %v957
      %1302 = vmatprep.subr.bf16.mxu0 0
      %1303 = vmatpush1.bf16.msra.mxu0 %v958
      %1304 = vmatprep.subr.bf16.mxu0 0
      %1305 = vmatpush1.bf16.msra.mxu0 %v959
      %1306 = vmatprep.subr.bf16.mxu0 0
      %1307 = vmatpush1.bf16.msra.mxu0 %v960
      %1308 = vmatprep.subr.bf16.mxu0 0
      %1309 = vmatpush1.bf16.msra.mxu0 %v961
      %1310 = vmatprep.subr.bf16.mxu0 0
      %1311 = vmatpush1.bf16.msra.mxu0 0
      %1312 = vmatprep.subr.bf16.mxu0 0
      %1313 = vmatpush1.bf16.msra.mxu0 0
      %1314 = vmatprep.subr.bf16.mxu0 0
      %1315 = vmatpush1.bf16.msra.mxu0 0
      %1316 = vmatprep.subr.bf16.mxu0 0
      %1317 = vmatpush1.bf16.msra.mxu0 0
      %1318 = vmatprep.subr.bf16.mxu0 0
      %1319 = vmatpush1.bf16.msra.mxu0 0
      %1320 = vmatprep.subr.bf16.mxu0 0
      %1321 = vmatpush1.bf16.msra.mxu0 0
      %1322 = vmatprep.subr.bf16.mxu0 0
      %1323 = vmatpush1.bf16.msra.mxu0 0
      %1324 = vmatprep.subr.bf16.mxu0 0
      %1325 = vmatpush1.bf16.msra.mxu0 0
      %1326 = vmatprep.mubr.bf16.mxu0 0
      %1327 = vmatmul.mubr.bf16.gmra.mrb[0].mxu0 %v538
      %v1328 = vpop.f32.mrb[0].mxu0
      %v1329 = vadd.f32 %v1264, %v1328
      %v1330 = vpop.f32.mrb[0].mxu0
      %v1331 = vpop.f32.mrb[0].mxu0
      %v1332 = vadd.f32 %v1267, %v1331
      %v1333 = vpop.f32.mrb[0].mxu0
      %1334 = vmatprep.mubr.bf16.mxu0 0
      %1335 = vmatmul.mubr.bf16.gmra.mrb[0].mxu0 %v547
      %v1336 = vpop.f32.mrb[0].mxu0
      %v1337 = vadd.f32 %v1272, %v1336
      %v1338 = vpop.f32.mrb[0].mxu0
      %v1339 = vpop.f32.mrb[0].mxu0
      %v1340 = vadd.f32 %v1275, %v1339
      %v1341 = vpop.f32.mrb[0].mxu0
      %1342 = vmatprep.mubr.bf16.mxu0 0
      %1343 = vmatmul.mubr.bf16.gmra.mrb[0].mxu0 %v556
      %v1344 = vpop.f32.mrb[0].mxu0
      %v1345 = vadd.f32 %v1280, %v1344
      %v1346 = vpop.f32.mrb[0].mxu0
      %v1347 = vpop.f32.mrb[0].mxu0
      %v1348 = vadd.f32 %v1283, %v1347
      %v1349 = vpop.f32.mrb[0].mxu0
      %1350 = vmatprep.mubr.bf16.mxu0 0
      %1351 = vmatmul.mubr.bf16.gmra.mrb[0].mxu0 %v565
      %v1352 = vpop.f32.mrb[0].mxu0
      %v1353 = vadd.f32 %v1288, %v1352
      %v1354 = vpop.f32.mrb[0].mxu0
      %v1355 = vpop.f32.mrb[0].mxu0
      %v1356 = vadd.f32 %v1291, %v1355
      %v1357 = vpop.f32.mrb[0].mxu0
      %1358 = vdwg.mxu0
      %v1359 = vadd.f32 %v266, %v1329
      %v1360 = vadd.f32 %v267, %v1332
      %v1361 = vadd.f32 %v268, %v1337
      %v1362 = vadd.f32 %v269, %v1340
      %v1363 = vadd.f32 %v270, %v1345
      %v1364 = vadd.f32 %v271, %v1348
      %v1365 = vadd.f32 %v272, %v1353
      %v1366 = vadd.f32 %v273, %v1356
      %1367 = vst [vmem:[#allocation2] sm:$0xff] %v1359
      %1368 = vst [vmem:[#allocation2 + $0x8] sm:$0xff] %v1360
      %1369 = vst [vmem:[#allocation2 + $0x10] sm:$0xff] %v1361
      %1370 = vst [vmem:[#allocation2 + $0x18] sm:$0xff] %v1362
      %1371 = vst [vmem:[#allocation2 + $0x20] sm:$0xff] %v1363
      %1372 = vst [vmem:[#allocation2 + $0x28] sm:$0xff] %v1364
      %1373 = vst [vmem:[#allocation2 + $0x30] sm:$0xff] %v1365
      %1374 = vst [vmem:[#allocation2 + $0x38] sm:$0xff] %v1366
      %v1375 = vld [vmem:[#allocation2] sm:$0xff]
      %v1376 = vld [vmem:[#allocation2 + $0x8] sm:$0xff]
      %v1377 = vld [vmem:[#allocation2 + $0x10] sm:$0xff]
      %v1378 = vld [vmem:[#allocation2 + $0x18] sm:$0xff]
      %v1379 = vld [vmem:[#allocation2 + $0x20] sm:$0xff]
      %v1380 = vld [vmem:[#allocation2 + $0x28] sm:$0xff]
      %v1381 = vld [vmem:[#allocation2 + $0x30] sm:$0xff]
      %v1382 = vld [vmem:[#allocation2 + $0x38] sm:$0xff]
      %v1383 = vpack.c.bf16 %v1375, %v1375
      %v1384 = vpack.c.bf16 %v1376, %v1376
      %v1385 = vpack.c.bf16 %v1377, %v1377
      %v1386 = vpack.c.bf16 %v1378, %v1378
      %v1387 = vpack.c.bf16 %v1379, %v1379
      %v1388 = vpack.c.bf16 %v1380, %v1380
      %v1389 = vpack.c.bf16 %v1381, %v1381
      %v1390 = vpack.c.bf16 %v1382, %v1382
      %1391 = vst [vmem:[%s204] sm:$0xf] %v1383
      %1392 = vst [vmem:[%s204 + $0x4] sm:$0xf] %v1384
      %1393 = vst [vmem:[%s204 + $0x8] sm:$0xf] %v1385
      %1394 = vst [vmem:[%s204 + $0xc] sm:$0xf] %v1386
      %1395 = vst [vmem:[%s204 + $0x10] sm:$0xf] %v1387
      %1396 = vst [vmem:[%s204 + $0x14] sm:$0xf] %v1388
      %1397 = vst [vmem:[%s204 + $0x18] sm:$0xf] %v1389
      %1398 = vst [vmem:[%s204 + $0x1c] sm:$0xf] %v1390
      %v1399 = vadd.f32 %v1375, %v1376
      %v1400 = vadd.f32 %v1399, %v1377
      %v1401 = vadd.f32 %v1400, %v1378
      %v1402 = vadd.f32 %v1401, %v1379
      %v1403 = vadd.f32 %v1402, %v1380
      %v1404 = vadd.f32 %v1403, %v1381
      %v1405 = vadd.f32 %v1404, %v1382
      %v1406 = vrot.slane %v1405, 4
      %v1407 = vadd.f32 %v1405, %v1406
      %v1408 = vrot.slane %v1407, 2
      %v1409 = vadd.f32 %v1407, %v1408
      %v1410 = vrot.slane %v1409, 1
      %v1411 = vadd.f32 %v1409, %v1410
      %v1412 = vmul.f32 %v1375, %v1375
      %v1413 = vmul.f32 %v1376, %v1376
      %v1414 = vmul.f32 %v1377, %v1377
      %v1415 = vmul.f32 %v1378, %v1378
      %v1416 = vmul.f32 %v1379, %v1379
      %v1417 = vmul.f32 %v1380, %v1380
      %v1418 = vmul.f32 %v1381, %v1381
      %v1419 = vmul.f32 %v1382, %v1382
      %v1420 = vadd.f32 %v1412, %v1413
      %v1421 = vadd.f32 %v1420, %v1414
      %v1422 = vadd.f32 %v1421, %v1415
      %v1423 = vadd.f32 %v1422, %v1416
      %v1424 = vadd.f32 %v1423, %v1417
      %v1425 = vadd.f32 %v1424, %v1418
      %v1426 = vadd.f32 %v1425, %v1419
      %v1427 = vrot.slane %v1426, 4
      %v1428 = vadd.f32 %v1426, %v1427
      %v1429 = vrot.slane %v1428, 2
      %v1430 = vadd.f32 %v1428, %v1429
      %v1431 = vrot.slane %v1430, 1
      %v1432 = vadd.f32 %v1430, %v1431
      %vm1433 = vcmask 1040384
      %v1434 = vsel %vm1433, %v1411, %v1432
      %1435 = vst [vmem:[%s212] sm:$0x3] %v1434
      %s1436 = smul.u32 8, %s20
      %p1437 = scmp.lt.s32.totalorder %s19, 1
      %s1438 = scalar_select %p1437, %s19, 1
      %p1439 = scmp.lt.s32.totalorder %s1436, 7
      %s1440 = scalar_select %p1439, %s1436, 7
      %s1441 = smul.addr %s1438, 8
      %s1442 = sadd.s32 %s1440, %s1441
      %s1443 = smul.addr %s1442, 4
      %s1444 = scalar_lea.vmem %s2, %s1443
      %p1445 = scmp.lt.s32.totalorder %s19, 1
      %s1446 = scalar_select %p1445, %s19, 1
      %p1447 = scmp.lt.s32.totalorder %s20, 0
      %s1448 = scalar_select %p1447, %s20, 0
      %s1449 = sadd.s32 %s1448, %s1446
      %s1450 = smul.addr %s1449, 2
      %s1451 = scalar_lea.vmem %s3, %s1450
      // Predicated region
      $region29: #{res_block.8} parent=27 // pred_check
        %p1452 = pneg %p94
      $region30: #{res_block.8} parent=27 // pred_check_branch
        %1454 = sbr.rel (%p1452) target = $region32
      $region31: #{res_block.8} parent=27 // pred_region
        %s1455 = smul.u32 8, %s20
      $region32: #{res_block.8} parent=27 // pred_fallthru
        _
      // Predicated region
      $region33: #{res_block.8} parent=27 // pred_check
        %p1456 = pneg %p122
      $region34: #{res_block.8} parent=27 // pred_check_branch
        %1458 = sbr.rel (%p1456) target = $region36
      $region35: #{res_block.8} parent=27 // pred_region
        _
      $region36: #{res_block.8} parent=27 // pred_fallthru
        _
    $region28: #{res_block.8} parent=5 // pred_fallthru
      _
    %p1459 = scmp.le.s32.totalorder 2, %s10
    // Predicated region
    $region37: #{res_block.8} parent=5 // pred_check
      %p1460 = pneg %p1459
    $region38: #{res_block.8} parent=5 // pred_check_branch
      %1462 = sbr.rel (%p1460) target = $region40
    $region39: #{res_block.8} parent=5 // pred_region
      %s1463 = ssub.s32 %s10, 2
      // Predicated region
      $region41: #{res_block.8} parent=39 // pred_check
        %p1464 = pneg %p100
      $region42: #{res_block.8} parent=39 // pred_check_branch
        %1466 = sbr.rel (%p1464) target = $region44
      $region43: #{res_block.8} parent=39 // pred_region
        %s1467 = smul.u32 8, %s22
        %p1468 = scmp.lt.s32.totalorder %s21, 1
        %s1469 = scalar_select %p1468, %s21, 1
        %p1470 = scmp.lt.s32.totalorder %s1467, 7
        %s1471 = scalar_select %p1470, %s1467, 7
        %s1472 = smul.addr %s1469, 8
        %s1473 = sadd.s32 %s1471, %s1472
        %s1474 = smul.addr %s1473, 4
        %s1475 = scalar_lea.vmem %s2, %s1474
      $region44: #{res_block.8} parent=39 // pred_fallthru
        _
      // Predicated region
      $region45: #{res_block.8} parent=39 // pred_check
        %p1476 = pneg %p128
      $region46: #{res_block.8} parent=39 // pred_check_branch
        %1478 = sbr.rel (%p1476) target = $region48
      $region47: #{res_block.8} parent=39 // pred_region
        %p1479 = scmp.lt.s32.totalorder %s21, 1
        %s1480 = scalar_select %p1479, %s21, 1
        %p1481 = scmp.lt.s32.totalorder %s22, 0
        %s1482 = scalar_select %p1481, %s22, 0
        %s1483 = sadd.s32 %s1482, %s1480
        %s1484 = smul.addr %s1483, 2
        %s1485 = scalar_lea.vmem %s3, %s1484
      $region48: #{res_block.8} parent=39 // pred_fallthru
        _
    $region40: #{res_block.8} parent=5 // pred_fallthru
      _
  $region6: #{res_block.8} parent=0 // loop_footer
    %s14 = sadd.s32 1, %s10
  $region7: #{res_block.8} parent=0 // loop_footer_branch
    %9 = sbr.rel target = $region3
  $region8: #{res_block.8} parent=0 // loop_exit
    _

// kernel: res_block.15
$region0: #{res_block.15}
  #allocation0 [shape = 'u32[]', space=smem, size = 0x4, offset = 0x4, fixed_abs, tag = 'smem constant byte address 0x4 - core index']
  #allocation1 [shape = 'u32[144,128]{1,0:T(1,128)}', space=vmem, size = 0x12000, scoped, tag = 'internal scratch']
  %s0 = inlined_call_operand.vmem [shape: bf16[2,8,8,128], index: 0, kind: input, shape index: {}]
  %s1 = inlined_call_operand.vmem [shape: f32[1,1,1,128], index: 1, kind: input, shape index: {}]
  %s2 = inlined_call_operand.vmem [shape: f32[1,1,1,128], index: 2, kind: input, shape index: {}]
  %s3 = inlined_call_operand.vmem [shape: bf16[2,8,8,128], index: 3, kind: input, shape index: {}]
  %s4 = inlined_call_operand.vmem [shape: f32[2,8,8,128], index: 4, kind: output, shape index: {}]
  %s5 = sld [smem:[#allocation0]]
  $region49: #{res_block.15} parent=0
    _
  %s7 = ssub.s32 1, %s5
  %s8 = scalar_select 0, %s7, %s5
  loop: start=0, step=1, limit=4
  $region2: #{res_block.15} parent=0 // loop_pre_header
    _
  $region3: #{res_block.15} parent=0 // loop_header
    %s10 = sphi 0, %s14
    %p11 = scmp.ge.s32.totalorder %s10, 4
    %s17 = sphi 0, %s29
    %s18 = sphi 0, %s25
    %s19 = sphi 0, %s17
    %s20 = sphi 0, %s18
    %s21 = sphi 0, %s19
    %s22 = sphi 0, %s20
    %s34 = sphi 0, %s36
    %s37 = sphi 0, %s34
    %s38 = sphi 0, %s37
    %s54 = sphi 0, %s38
    %s58 = sphi 0, %s58
    %s60 = sphi 0, %s58
    %s61 = sphi 0, %s60
    %s75 = sphi 0, %s61
    %s79 = sphi 0, %s79
    %s81 = sphi 0, %s79
    %s82 = sphi 0, %s81
    %s96 = sphi 0, %s82
    %s104 = sphi 0, %s106
    %s107 = sphi 0, %s104
    %s108 = sphi 0, %s107
    %s124 = sphi 0, %s108
    %s132 = sphi 0, %s134
    %s135 = sphi 0, %s132
    %s136 = sphi 0, %s135
    %s152 = sphi 0, %s136
  $region4: #{res_block.15} parent=0 // loop_header_branch
    %13 = sbr.rel (%p11) target = $region8
  $region5: #{res_block.15} parent=0 // loop_body
    %s15 = ssub.s32 %s10, 1
    %s16 = ssub.s32 %s10, 2
    %s23 = sadd.s32 1, %s18
    %p24 = scmp.ge.s32.totalorder %s23, 1
    %s25 = scalar_select %p24, 0, %s23
    %s26 = sadd.s32 1, %s17
    %s27 = scalar_select %p24, %s26, %s17
    %p28 = scmp.ge.s32.totalorder %s27, 2
    %s29 = scalar_select %p28, 0, %s27
    %s30 = ssub.s32 %s17, %s29
    %s31 = ssub.s32 %s18, %s25
    %s32 = sor.u32 %s30, %s31
    %p33 = scmp.eq.s32.totalorder %s32, 0
    %s35 = sadd.s32 %s34, 1
    %s36 = scalar_select %p33, %s34, %s35
    %p39 = pneg %p33
    %p40 = scmp.eq.s32.totalorder %s10, 1
    %p41 = por %p39, %p40
    %p42 = scmp.ne.s32.totalorder %s34, %s37
    %p43 = scmp.eq.s32.totalorder %s10, 0
    %p44 = por %p42, %p43
    %p45 = scmp.ne.s32.totalorder %s34, %s37
    %p46 = scmp.eq.s32.totalorder %s15, 1
    %p47 = por %p45, %p46
    %p48 = scmp.ne.s32.totalorder %s37, %s38
    %p49 = scmp.eq.s32.totalorder %s15, 0
    %p50 = por %p48, %p49
    %p51 = scmp.ne.s32.totalorder %s37, %s38
    %p52 = scmp.eq.s32.totalorder %s16, 1
    %p53 = por %p51, %p52
    %p55 = scmp.ne.s32.totalorder %s38, %s54
    %p56 = scmp.eq.s32.totalorder %s16, 0
    %p57 = por %p55, %p56
    %s59 = sadd.s32 %s58, 1
    %p62 = scmp.eq.s32.totalorder %s10, 1
    %p63 = scmp.ne.s32.totalorder %s58, %s60
    %p64 = scmp.eq.s32.totalorder %s10, 0
    %p65 = por %p63, %p64
    %p66 = scmp.ne.s32.totalorder %s58, %s60
    %p67 = scmp.eq.s32.totalorder %s15, 1
    %p68 = por %p66, %p67
    %p69 = scmp.ne.s32.totalorder %s60, %s61
    %p70 = scmp.eq.s32.totalorder %s15, 0
    %p71 = por %p69, %p70
    %p72 = scmp.ne.s32.totalorder %s60, %s61
    %p73 = scmp.eq.s32.totalorder %s16, 1
    %p74 = por %p72, %p73
    %p76 = scmp.ne.s32.totalorder %s61, %s75
    %p77 = scmp.eq.s32.totalorder %s16, 0
    %p78 = por %p76, %p77
    %s80 = sadd.s32 %s79, 1
    %p83 = scmp.eq.s32.totalorder %s10, 1
    %p84 = scmp.ne.s32.totalorder %s79, %s81
    %p85 = scmp.eq.s32.totalorder %s10, 0
    %p86 = por %p84, %p85
    %p87 = scmp.ne.s32.totalorder %s79, %s81
    %p88 = scmp.eq.s32.totalorder %s15, 1
    %p89 = por %p87, %p88
    %p90 = scmp.ne.s32.totalorder %s81, %s82
    %p91 = scmp.eq.s32.totalorder %s15, 0
    %p92 = por %p90, %p91
    %p93 = scmp.ne.s32.totalorder %s81, %s82
    %p94 = scmp.eq.s32.totalorder %s16, 1
    %p95 = por %p93, %p94
    %p97 = scmp.ne.s32.totalorder %s82, %s96
    %p98 = scmp.eq.s32.totalorder %s16, 0
    %p99 = por %p97, %p98
    %s100 = ssub.s32 %s17, %s29
    %s101 = ssub.s32 %s18, %s25
    %s102 = sor.u32 %s100, %s101
    %p103 = scmp.eq.s32.totalorder %s102, 0
    %s105 = sadd.s32 %s104, 1
    %s106 = scalar_select %p103, %s104, %s105
    %p109 = pneg %p103
    %p110 = scmp.eq.s32.totalorder %s10, 1
    %p111 = por %p109, %p110
    %p112 = scmp.ne.s32.totalorder %s104, %s107
    %p113 = scmp.eq.s32.totalorder %s10, 0
    %p114 = por %p112, %p113
    %p115 = scmp.ne.s32.totalorder %s104, %s107
    %p116 = scmp.eq.s32.totalorder %s15, 1
    %p117 = por %p115, %p116
    %p118 = scmp.ne.s32.totalorder %s107, %s108
    %p119 = scmp.eq.s32.totalorder %s15, 0
    %p120 = por %p118, %p119
    %p121 = scmp.ne.s32.totalorder %s107, %s108
    %p122 = scmp.eq.s32.totalorder %s16, 1
    %p123 = por %p121, %p122
    %p125 = scmp.ne.s32.totalorder %s108, %s124
    %p126 = scmp.eq.s32.totalorder %s16, 0
    %p127 = por %p125, %p126
    %s128 = ssub.s32 %s17, %s29
    %s129 = ssub.s32 %s18, %s25
    %s130 = sor.u32 %s128, %s129
    %p131 = scmp.eq.s32.totalorder %s130, 0
    %s133 = sadd.s32 %s132, 1
    %s134 = scalar_select %p131, %s132, %s133
    %p137 = pneg %p131
    %p138 = scmp.eq.s32.totalorder %s10, 1
    %p139 = por %p137, %p138
    %p140 = scmp.ne.s32.totalorder %s132, %s135
    %p141 = scmp.eq.s32.totalorder %s10, 0
    %p142 = por %p140, %p141
    %p143 = scmp.ne.s32.totalorder %s132, %s135
    %p144 = scmp.eq.s32.totalorder %s15, 1
    %p145 = por %p143, %p144
    %p146 = scmp.ne.s32.totalorder %s135, %s136
    %p147 = scmp.eq.s32.totalorder %s15, 0
    %p148 = por %p146, %p147
    %p149 = scmp.ne.s32.totalorder %s135, %s136
    %p150 = scmp.eq.s32.totalorder %s16, 1
    %p151 = por %p149, %p150
    %p153 = scmp.ne.s32.totalorder %s136, %s152
    %p154 = scmp.eq.s32.totalorder %s16, 0
    %p155 = por %p153, %p154
    %p156 = scmp.le.s32.totalorder 1, %s10
    %p157 = scmp.lt.s32.totalorder %s10, 3
    %p158 = pnand %p156, %p157
    %p159 = pneg %p158
    // Predicated region
    $region9: #{res_block.15} parent=5 // pred_check
      _
    $region10: #{res_block.15} parent=5 // pred_check_branch
      %161 = sbr.rel (%p158) target = $region12
    $region11: #{res_block.15} parent=5 // pred_region
      %s162 = ssub.s32 %s10, 1
      // Predicated region
      $region13: #{res_block.15} parent=11 // pred_check
        %p163 = pneg %p71
      $region14: #{res_block.15} parent=11 // pred_check_branch
        %165 = sbr.rel (%p163) target = $region16
      $region15: #{res_block.15} parent=11 // pred_region
        _
      $region16: #{res_block.15} parent=11 // pred_fallthru
        _
      // Predicated region
      $region17: #{res_block.15} parent=11 // pred_check
        %p166 = pneg %p92
      $region18: #{res_block.15} parent=11 // pred_check_branch
        %168 = sbr.rel (%p166) target = $region20
      $region19: #{res_block.15} parent=11 // pred_region
        _
      $region20: #{res_block.15} parent=11 // pred_fallthru
        _
    $region12: #{res_block.15} parent=5 // pred_fallthru
      _
    %p169 = scmp.lt.s32.totalorder %s10, 2
    // Predicated region
    $region21: #{res_block.15} parent=5 // pred_check
      %p170 = pneg %p169
    $region22: #{res_block.15} parent=5 // pred_check_branch
      %172 = sbr.rel (%p170) target = $region24
    $region23: #{res_block.15} parent=5 // pred_region
      // Predicated region
      $region25: #{res_block.15} parent=23 // pred_check
        %p173 = pneg %p44
      $region26: #{res_block.15} parent=23 // pred_check_branch
        %175 = sbr.rel (%p173) target = $region28
      $region27: #{res_block.15} parent=23 // pred_region
        %s176 = smul.u32 8, %s18
        %p177 = scmp.lt.s32.totalorder %s17, 1
        %s178 = scalar_select %p177, %s17, 1
        %p179 = scmp.lt.s32.totalorder %s176, 7
        %s180 = scalar_select %p179, %s176, 7
        %s181 = smul.addr %s178, 8
        %s182 = sadd.s32 %s180, %s181
        %s183 = smul.addr %s182, 4
        %s184 = scalar_lea.vmem %s0, %s183
        %s185 = smul.u32 8, %s18
      $region28: #{res_block.15} parent=23 // pred_fallthru
        _
      // Predicated region
      $region29: #{res_block.15} parent=23 // pred_check
        %p186 = pneg %p114
      $region30: #{res_block.15} parent=23 // pred_check_branch
        %188 = sbr.rel (%p186) target = $region32
      $region31: #{res_block.15} parent=23 // pred_region
        %s189 = smul.u32 8, %s18
        %p190 = scmp.lt.s32.totalorder %s17, 1
        %s191 = scalar_select %p190, %s17, 1
        %p192 = scmp.lt.s32.totalorder %s189, 7
        %s193 = scalar_select %p192, %s189, 7
        %s194 = smul.addr %s191, 8
        %s195 = sadd.s32 %s193, %s194
        %s196 = smul.addr %s195, 4
        %s197 = scalar_lea.vmem %s3, %s196
        %s198 = smul.u32 8, %s18
      $region32: #{res_block.15} parent=23 // pred_fallthru
        _
    $region24: #{res_block.15} parent=5 // pred_fallthru
      _
    %p199 = scmp.le.s32.totalorder 1, %s10
    %p200 = scmp.lt.s32.totalorder %s10, 3
    %p201 = pnand %p199, %p200
    %p202 = pneg %p201
    // Predicated region
    $region33: #{res_block.15} parent=5 // pred_check
      _
    $region34: #{res_block.15} parent=5 // pred_check_branch
      %204 = sbr.rel (%p201) target = $region36
    $region35: #{res_block.15} parent=5 // pred_region
      %s205 = ssub.s32 %s10, 1
      %s206 = smul.u32 8, %s20
      %p207 = scmp.lt.s32.totalorder %s19, 1
      %s208 = scalar_select %p207, %s19, 1
      %p209 = scmp.lt.s32.totalorder %s206, 7
      %s210 = scalar_select %p209, %s206, 7
      %s211 = smul.addr %s208, 8
      %s212 = sadd.s32 %s210, %s211
      %s213 = smul.addr %s212, 4
      %s214 = scalar_lea.vmem %s0, %s213
      %p215 = pneg %p50
      %p216 = pneg %p47
      %p217 = pneg %p71
      %p218 = pneg %p68
      %p219 = pneg %p92
      %p220 = pneg %p89
      %s221 = smul.u32 8, %s20
      %p222 = scmp.lt.s32.totalorder %s19, 1
      %s223 = scalar_select %p222, %s19, 1
      %p224 = scmp.lt.s32.totalorder %s221, 7
      %s225 = scalar_select %p224, %s221, 7
      %s226 = smul.addr %s223, 8
      %s227 = sadd.s32 %s225, %s226
      %s228 = smul.addr %s227, 4
      %s229 = scalar_lea.vmem %s3, %s228
      %p230 = pneg %p120
      %p231 = pneg %p117
      %p232 = pneg %p148
      %p233 = pneg %p145
      %s234 = smul.u32 8, %s20
      %p235 = scmp.lt.s32.totalorder %s19, 1
      %s236 = scalar_select %p235, %s19, 1
      %p237 = scmp.lt.s32.totalorder %s234, 7
      %s238 = scalar_select %p237, %s234, 7
      %s239 = smul.addr %s236, 8
      %s240 = sadd.s32 %s238, %s239
      %s241 = smul.addr %s240, 8
      %s242 = scalar_lea.vmem %s4, %s241
      %s243 = smul.u32 8, %s20
      %p244 = scmp.lt.s32.totalorder %s19, 1
      %s245 = scalar_select %p244, %s19, 1
      %p246 = scmp.lt.s32.totalorder %s243, 7
      %s247 = scalar_select %p246, %s243, 7
      %s248 = smul.addr %s245, 8
      %s249 = sadd.s32 %s247, %s248
      %s250 = smul.addr %s249, 4
      %s251 = scalar_lea.vmem %s0, %s250
      %s252 = smul.u32 8, %s20
      %s253 = smul.u32 8, %s20
      %p254 = scmp.lt.s32.totalorder %s19, 1
      %s255 = scalar_select %p254, %s19, 1
      %p256 = scmp.lt.s32.totalorder %s253, 7
      %s257 = scalar_select %p256, %s253, 7
      %s258 = smul.addr %s255, 8
      %s259 = sadd.s32 %s257, %s258
      %s260 = smul.addr %s259, 4
      %s261 = scalar_lea.vmem %s3, %s260
      %s262 = smul.u32 8, %s20
      %s263 = smul.u32 8, %s20
      %p264 = scmp.lt.s32.totalorder %s19, 1
      %s265 = scalar_select %p264, %s19, 1
      %p266 = scmp.lt.s32.totalorder %s263, 7
      %s267 = scalar_select %p266, %s263, 7
      %s268 = smul.addr %s265, 8
      %s269 = sadd.s32 %s267, %s268
      %s270 = smul.addr %s269, 8
      %s271 = scalar_lea.vmem %s4, %s270
      %s272 = smul.u32 8, %s20
      %v273 = vld [vmem:[%s251] sm:$0xf]
      %v274 = vld [vmem:[%s251 + $0x4] sm:$0xf]
      %v275 = vld [vmem:[%s251 + $0x8] sm:$0xf]
      %v276 = vld [vmem:[%s251 + $0xc] sm:$0xf]
      %v277 = vld [vmem:[%s251 + $0x10] sm:$0xf]
      %v278 = vld [vmem:[%s251 + $0x14] sm:$0xf]
      %v279 = vld [vmem:[%s251 + $0x18] sm:$0xf]
      %v280 = vld [vmem:[%s251 + $0x1c] sm:$0xf]
      %v281 = vunpack.c.l.bf16 %v273
      %v282 = vunpack.c.l.bf16 %v274
      %v283 = vunpack.c.l.bf16 %v275
      %v284 = vunpack.c.l.bf16 %v276
      %v285 = vunpack.c.l.bf16 %v277
      %v286 = vunpack.c.l.bf16 %v278
      %v287 = vunpack.c.l.bf16 %v279
      %v288 = vunpack.c.l.bf16 %v280
      %v289 = vld [vmem:[%s1] sm:$0x1]
      %v291 = vlaneseq
      %v292 = vshrl.u32 %v291, 7
      %v293 = vsub.s32 0, %v292
      %v294 = vrot.slane %v289, %v293
      %v296 = vmul.f32 %v281, %v294
      %v297 = vmul.f32 %v282, %v294
      %v298 = vmul.f32 %v283, %v294
      %v299 = vmul.f32 %v284, %v294
      %v300 = vmul.f32 %v285, %v294
      %v301 = vmul.f32 %v286, %v294
      %v302 = vmul.f32 %v287, %v294
      %v303 = vmul.f32 %v288, %v294
      %v304 = vld [vmem:[%s2] sm:$0x1]
      %v306 = vlaneseq
      %v307 = vshrl.u32 %v306, 7
      %v308 = vsub.s32 0, %v307
      %v309 = vrot.slane %v304, %v308
      %v311 = vadd.f32 %v296, %v309
      %v312 = vadd.f32 %v297, %v309
      %v313 = vadd.f32 %v298, %v309
      %v314 = vadd.f32 %v299, %v309
      %v315 = vadd.f32 %v300, %v309
      %v316 = vadd.f32 %v301, %v309
      %v317 = vadd.f32 %v302, %v309
      %v318 = vadd.f32 %v303, %v309
      %v319 = vld [vmem:[%s261] sm:$0xf]
      %v320 = vld [vmem:[%s261 + $0x4] sm:$0xf]
      %v321 = vld [vmem:[%s261 + $0x8] sm:$0xf]
      %v322 = vld [vmem:[%s261 + $0xc] sm:$0xf]
      %v323 = vld [vmem:[%s261 + $0x10] sm:$0xf]
      %v324 = vld [vmem:[%s261 + $0x14] sm:$0xf]
      %v325 = vld [vmem:[%s261 + $0x18] sm:$0xf]
      %v326 = vld [vmem:[%s261 + $0x1c] sm:$0xf]
      %v327 = vunpack.c.l.bf16 %v319
      %v328 = vunpack.c.l.bf16 %v320
      %v329 = vunpack.c.l.bf16 %v321
      %v330 = vunpack.c.l.bf16 %v322
      %v331 = vunpack.c.l.bf16 %v323
      %v332 = vunpack.c.l.bf16 %v324
      %v333 = vunpack.c.l.bf16 %v325
      %v334 = vunpack.c.l.bf16 %v326
      %v335 = vadd.f32 %v311, %v327
      %v336 = vadd.f32 %v312, %v328
      %v337 = vadd.f32 %v313, %v329
      %v338 = vadd.f32 %v314, %v330
      %v339 = vadd.f32 %v315, %v331
      %v340 = vadd.f32 %v316, %v332
      %v341 = vadd.f32 %v317, %v333
      %v342 = vadd.f32 %v318, %v334
      %v343 = vmax.f32 %v335, 0.0
      %v344 = vmax.f32 %v336, 0.0
      %v345 = vmax.f32 %v337, 0.0
      %v346 = vmax.f32 %v338, 0.0
      %v347 = vmax.f32 %v339, 0.0
      %v348 = vmax.f32 %v340, 0.0
      %v349 = vmax.f32 %v341, 0.0
      %v350 = vmax.f32 %v342, 0.0
      %351 = vst [vmem:[%s271] sm:$0xff] %v343
      %352 = vst [vmem:[%s271 + $0x8] sm:$0xff] %v344
      %353 = vst [vmem:[%s271 + $0x10] sm:$0xff] %v345
      %354 = vst [vmem:[%s271 + $0x18] sm:$0xff] %v346
      %355 = vst [vmem:[%s271 + $0x20] sm:$0xff] %v347
      %356 = vst [vmem:[%s271 + $0x28] sm:$0xff] %v348
      %357 = vst [vmem:[%s271 + $0x30] sm:$0xff] %v349
      %358 = vst [vmem:[%s271 + $0x38] sm:$0xff] %v350
      %s359 = smul.u32 8, %s20
      %p360 = scmp.lt.s32.totalorder %s19, 1
      %s361 = scalar_select %p360, %s19, 1
      %p362 = scmp.lt.s32.totalorder %s359, 7
      %s363 = scalar_select %p362, %s359, 7
      %s364 = smul.addr %s361, 8
      %s365 = sadd.s32 %s363, %s364
      %s366 = smul.addr %s365, 8
      %s367 = scalar_lea.vmem %s4, %s366
      // Predicated region
      $region37: #{res_block.15} parent=35 // pred_check
        %p368 = pneg %p145
      $region38: #{res_block.15} parent=35 // pred_check_branch
        %370 = sbr.rel (%p368) target = $region40
      $region39: #{res_block.15} parent=35 // pred_region
        %s371 = smul.u32 8, %s20
      $region40: #{res_block.15} parent=35 // pred_fallthru
        _
    $region36: #{res_block.15} parent=5 // pred_fallthru
      _
    %p372 = scmp.le.s32.totalorder 2, %s10
    // Predicated region
    $region41: #{res_block.15} parent=5 // pred_check
      %p373 = pneg %p372
    $region42: #{res_block.15} parent=5 // pred_check_branch
      %375 = sbr.rel (%p373) target = $region44
    $region43: #{res_block.15} parent=5 // pred_region
      %s376 = ssub.s32 %s10, 2
      // Predicated region
      $region45: #{res_block.15} parent=43 // pred_check
        %p377 = pneg %p151
      $region46: #{res_block.15} parent=43 // pred_check_branch
        %379 = sbr.rel (%p377) target = $region48
      $region47: #{res_block.15} parent=43 // pred_region
        %s380 = smul.u32 8, %s22
        %p381 = scmp.lt.s32.totalorder %s21, 1
        %s382 = scalar_select %p381, %s21, 1
        %p383 = scmp.lt.s32.totalorder %s380, 7
        %s384 = scalar_select %p383, %s380, 7
        %s385 = smul.addr %s382, 8
        %s386 = sadd.s32 %s384, %s385
        %s387 = smul.addr %s386, 8
        %s388 = scalar_lea.vmem %s4, %s387
      $region48: #{res_block.15} parent=43 // pred_fallthru
        _
    $region44: #{res_block.15} parent=5 // pred_fallthru
      _
  $region6: #{res_block.15} parent=0 // loop_footer
    %s14 = sadd.s32 1, %s10
  $region7: #{res_block.15} parent=0 // loop_footer_branch
    %9 = sbr.rel target = $region3
  $region8: #{res_block.15} parent=0 // loop_exit
    _

// kernel: res_block.10
$region0: #{res_block.10}
  #allocation0 [shape = 'u32[]', space=smem, size = 0x4, offset = 0x4, fixed_abs, tag = 'smem constant byte address 0x4 - core index']
  #allocation1 [shape = 'u32[144,128]{1,0:T(1,128)}', space=vmem, size = 0x12000, scoped, tag = 'internal scratch']
  #allocation2 [shape = 'f32[64,128]{1,0:T(8,128)}', space=vmem, size = 0x8000, scoped, tag = 'scratch operand']
  %s0 = inlined_call_operand.vmem [shape: bf16[2,10,10,128], index: 0, kind: input, shape index: {}]
  %s1 = inlined_call_operand.vmem [shape: bf16[9,128,128], index: 1, kind: input, shape index: {}]
  %s2 = inlined_call_operand.vmem [shape: bf16[2,8,8,128], index: 2, kind: output, shape index: {0}]
  %s3 = inlined_call_operand.vmem [shape: f32[2,1,2,128], index: 3, kind: output, shape index: {1}]
  %4 = xla_tuple %s2, %s3
  %s5 = sld [smem:[#allocation0]]
  $region49: #{res_block.10} parent=0
    _
  %s7 = ssub.s32 1, %s5
  %s8 = scalar_select 0, %s7, %s5
  loop: start=0, step=1, limit=4
  $region2: #{res_block.10} parent=0 // loop_pre_header
    _
  $region3: #{res_block.10} parent=0 // loop_header
    %s10 = sphi 0, %s14
    %p11 = scmp.ge.s32.totalorder %s10, 4
    %s17 = sphi 0, %s29
    %s18 = sphi 0, %s25
    %s19 = sphi 0, %s17
    %s20 = sphi 0, %s18
    %s21 = sphi 0, %s19
    %s22 = sphi 0, %s20
    %s32 = sphi 0, %s34
    %s35 = sphi 0, %s32
    %s36 = sphi 0, %s35
    %s52 = sphi 0, %s36
    %s56 = sphi 0, %s56
    %s58 = sphi 0, %s56
    %s59 = sphi 0, %s58
    %s73 = sphi 0, %s59
    %s81 = sphi 0, %s83
    %s84 = sphi 0, %s81
    %s85 = sphi 0, %s84
    %s101 = sphi 0, %s85
    %s109 = sphi 0, %s111
    %s112 = sphi 0, %s109
    %s113 = sphi 0, %s112
    %s129 = sphi 0, %s113
  $region4: #{res_block.10} parent=0 // loop_header_branch
    %13 = sbr.rel (%p11) target = $region8
  $region5: #{res_block.10} parent=0 // loop_body
    %s15 = ssub.s32 %s10, 1
    %s16 = ssub.s32 %s10, 2
    %s23 = sadd.s32 1, %s18
    %p24 = scmp.ge.s32.totalorder %s23, 1
    %s25 = scalar_select %p24, 0, %s23
    %s26 = sadd.s32 1, %s17
    %s27 = scalar_select %p24, %s26, %s17
    %p28 = scmp.ge.s32.totalorder %s27, 2
    %s29 = scalar_select %p28, 0, %s27
    %s30 = ssub.s32 %s17, %s29
    %p31 = scmp.eq.s32.totalorder %s30, 0
    %s33 = sadd.s32 %s32, 1
    %s34 = scalar_select %p31, %s32, %s33
    %p37 = pneg %p31
    %p38 = scmp.eq.s32.totalorder %s10, 1
    %p39 = por %p37, %p38
    %p40 = scmp.ne.s32.totalorder %s32, %s35
    %p41 = scmp.eq.s32.totalorder %s10, 0
    %p42 = por %p40, %p41
    %p43 = scmp.ne.s32.totalorder %s32, %s35
    %p44 = scmp.eq.s32.totalorder %s15, 1
    %p45 = por %p43, %p44
    %p46 = scmp.ne.s32.totalorder %s35, %s36
    %p47 = scmp.eq.s32.totalorder %s15, 0
    %p48 = por %p46, %p47
    %p49 = scmp.ne.s32.totalorder %s35, %s36
    %p50 = scmp.eq.s32.totalorder %s16, 1
    %p51 = por %p49, %p50
    %p53 = scmp.ne.s32.totalorder %s36, %s52
    %p54 = scmp.eq.s32.totalorder %s16, 0
    %p55 = por %p53, %p54
    %s57 = sadd.s32 %s56, 1
    %p60 = scmp.eq.s32.totalorder %s10, 1
    %p61 = scmp.ne.s32.totalorder %s56, %s58
    %p62 = scmp.eq.s32.totalorder %s10, 0
    %p63 = por %p61, %p62
    %p64 = scmp.ne.s32.totalorder %s56, %s58
    %p65 = scmp.eq.s32.totalorder %s15, 1
    %p66 = por %p64, %p65
    %p67 = scmp.ne.s32.totalorder %s58, %s59
    %p68 = scmp.eq.s32.totalorder %s15, 0
    %p69 = por %p67, %p68
    %p70 = scmp.ne.s32.totalorder %s58, %s59
    %p71 = scmp.eq.s32.totalorder %s16, 1
    %p72 = por %p70, %p71
    %p74 = scmp.ne.s32.totalorder %s59, %s73
    %p75 = scmp.eq.s32.totalorder %s16, 0
    %p76 = por %p74, %p75
    %s77 = ssub.s32 %s17, %s29
    %s78 = ssub.s32 %s18, %s25
    %s79 = sor.u32 %s77, %s78
    %p80 = scmp.eq.s32.totalorder %s79, 0
    %s82 = sadd.s32 %s81, 1
    %s83 = scalar_select %p80, %s81, %s82
    %p86 = pneg %p80
    %p87 = scmp.eq.s32.totalorder %s10, 1
    %p88 = por %p86, %p87
    %p89 = scmp.ne.s32.totalorder %s81, %s84
    %p90 = scmp.eq.s32.totalorder %s10, 0
    %p91 = por %p89, %p90
    %p92 = scmp.ne.s32.totalorder %s81, %s84
    %p93 = scmp.eq.s32.totalorder %s15, 1
    %p94 = por %p92, %p93
    %p95 = scmp.ne.s32.totalorder %s84, %s85
    %p96 = scmp.eq.s32.totalorder %s15, 0
    %p97 = por %p95, %p96
    %p98 = scmp.ne.s32.totalorder %s84, %s85
    %p99 = scmp.eq.s32.totalorder %s16, 1
    %p100 = por %p98, %p99
    %p102 = scmp.ne.s32.totalorder %s85, %s101
    %p103 = scmp.eq.s32.totalorder %s16, 0
    %p104 = por %p102, %p103
    %s105 = ssub.s32 %s17, %s29
    %s106 = ssub.s32 %s18, %s25
    %s107 = sor.u32 %s105, %s106
    %p108 = scmp.eq.s32.totalorder %s107, 0
    %s110 = sadd.s32 %s109, 1
    %s111 = scalar_select %p108, %s109, %s110
    %p114 = pneg %p108
    %p115 = scmp.eq.s32.totalorder %s10, 1
    %p116 = por %p114, %p115
    %p117 = scmp.ne.s32.totalorder %s109, %s112
    %p118 = scmp.eq.s32.totalorder %s10, 0
    %p119 = por %p117, %p118
    %p120 = scmp.ne.s32.totalorder %s109, %s112
    %p121 = scmp.eq.s32.totalorder %s15, 1
    %p122 = por %p120, %p121
    %p123 = scmp.ne.s32.totalorder %s112, %s113
    %p124 = scmp.eq.s32.totalorder %s15, 0
    %p125 = por %p123, %p124
    %p126 = scmp.ne.s32.totalorder %s112, %s113
    %p127 = scmp.eq.s32.totalorder %s16, 1
    %p128 = por %p126, %p127
    %p130 = scmp.ne.s32.totalorder %s113, %s129
    %p131 = scmp.eq.s32.totalorder %s16, 0
    %p132 = por %p130, %p131
    %p133 = scmp.le.s32.totalorder 1, %s10
    %p134 = scmp.lt.s32.totalorder %s10, 3
    %p135 = pnand %p133, %p134
    %p136 = pneg %p135
    // Predicated region
    $region9: #{res_block.10} parent=5 // pred_check
      _
    $region10: #{res_block.10} parent=5 // pred_check_branch
      %138 = sbr.rel (%p135) target = $region12
    $region11: #{res_block.10} parent=5 // pred_region
      %s139 = ssub.s32 %s10, 1
      // Predicated region
      $region13: #{res_block.10} parent=11 // pred_check
        %p140 = pneg %p69
      $region14: #{res_block.10} parent=11 // pred_check_branch
        %142 = sbr.rel (%p140) target = $region16
      $region15: #{res_block.10} parent=11 // pred_region
        _
      $region16: #{res_block.10} parent=11 // pred_fallthru
        _
    $region12: #{res_block.10} parent=5 // pred_fallthru
      _
    %p143 = scmp.lt.s32.totalorder %s10, 2
    // Predicated region
    $region17: #{res_block.10} parent=5 // pred_check
      %p144 = pneg %p143
    $region18: #{res_block.10} parent=5 // pred_check_branch
      %146 = sbr.rel (%p144) target = $region20
    $region19: #{res_block.10} parent=5 // pred_region
      // Predicated region
      $region21: #{res_block.10} parent=19 // pred_check
        %p147 = pneg %p42
      $region22: #{res_block.10} parent=19 // pred_check_branch
        %149 = sbr.rel (%p147) target = $region24
      $region23: #{res_block.10} parent=19 // pred_region
        %p150 = scmp.lt.s32.totalorder %s17, 1
        %s151 = scalar_select %p150, %s17, 1
        %s152 = smul.addr %s151, 20
        %s153 = smul.addr %s152, 4
        %s154 = scalar_lea.vmem %s0, %s153
      $region24: #{res_block.10} parent=19 // pred_fallthru
        _
    $region20: #{res_block.10} parent=5 // pred_fallthru
      _
    %p155 = scmp.le.s32.totalorder 1, %s10
    %p156 = scmp.lt.s32.totalorder %s10, 3
    %p157 = pnand %p155, %p156
    %p158 = pneg %p157
    // Predicated region
    $region25: #{res_block.10} parent=5 // pred_check
      _
    $region26: #{res_block.10} parent=5 // pred_check_branch
      %160 = sbr.rel (%p157) target = $region28
    $region27: #{res_block.10} parent=5 // pred_region
      %s161 = ssub.s32 %s10, 1
      %p162 = scmp.lt.s32.totalorder %s19, 1
      %s163 = scalar_select %p162, %s19, 1
      %s164 = smul.addr %s163, 20
      %s165 = smul.addr %s164, 4
      %s166 = scalar_lea.vmem %s0, %s165
      %p167 = pneg %p48
      %p168 = pneg %p45
      %p169 = pneg %p69
      %p170 = pneg %p66
      %p171 = pneg %p97
      %p172 = pneg %p94
      %s173 = smul.u32 8, %s20
      %p174 = scmp.lt.s32.totalorder %s19, 1
      %s175 = scalar_select %p174, %s19, 1
      %p176 = scmp.lt.s32.totalorder %s173, 7
      %s177 = scalar_select %p176, %s173, 7
      %s178 = smul.addr %s175, 8
      %s179 = sadd.s32 %s177, %s178
      %s180 = smul.addr %s179, 4
      %s181 = scalar_lea.vmem %s2, %s180
      %p182 = pneg %p125
      %p183 = pneg %p122
      %p184 = scmp.lt.s32.totalorder %s19, 1
      %s185 = scalar_select %p184, %s19, 1
      %p186 = scmp.lt.s32.totalorder %s20, 0
      %s187 = scalar_select %p186, %s20, 0
      %s188 = sadd.s32 %s187, %s185
      %s189 = smul.addr %s188, 2
      %s190 = scalar_lea.vmem %s3, %s189
      %p191 = scmp.lt.s32.totalorder %s19, 1
      %s192 = scalar_select %p191, %s19, 1
      %s193 = smul.addr %s192, 20
      %s194 = smul.addr %s193, 4
      %s195 = scalar_lea.vmem %s0, %s194
      %s196 = smul.u32 8, %s20
      %p197 = scmp.lt.s32.totalorder %s19, 1
      %s198 = scalar_select %p197, %s19, 1
      %p199 = scmp.lt.s32.totalorder %s196, 7
      %s200 = scalar_select %p199, %s196, 7
      %s201 = smul.addr %s198, 8
      %s202 = sadd.s32 %s200, %s201
      %s203 = smul.addr %s202, 4
      %s204 = scalar_lea.vmem %s2, %s203
      %s205 = smul.u32 8, %s20
      %p206 = scmp.lt.s32.totalorder %s19, 1
      %s207 = scalar_select %p206, %s19, 1
      %p208 = scmp.lt.s32.totalorder %s20, 0
      %s209 = scalar_select %p208, %s20, 0
      %s210 = sadd.s32 %s209, %s207
      %s211 = smul.addr %s210, 2
      %s212 = scalar_lea.vmem %s3, %s211
      %s214 = smul.u32 %s20, 8
      %215 = vst [vmem:[#allocation2] sm:$0xff] 0.0
      %216 = vst [vmem:[#allocation2 + $0x8] sm:$0xff] 0.0
      %217 = vst [vmem:[#allocation2 + $0x10] sm:$0xff] 0.0
      %218 = vst [vmem:[#allocation2 + $0x18] sm:$0xff] 0.0
      %219 = vst [vmem:[#allocation2 + $0x20] sm:$0xff] 0.0
      %220 = vst [vmem:[#allocation2 + $0x28] sm:$0xff] 0.0
      %221 = vst [vmem:[#allocation2 + $0x30] sm:$0xff] 0.0
      %222 = vst [vmem:[#allocation2 + $0x38] sm:$0xff] 0.0
      %s223 = smul.u32 %s214, 2
      %s224 = smul.addr %s223, 4
      %s225 = scalar_lea.vmem %s195, %s224
      %v226 = vld [vmem:[%s225] sm:$0xf]
      %v227 = vld [vmem:[%s225 + $0x4] sm:$0x1]
      %v228 = vld [vmem:[%s225 + $0x8] sm:$0xf]
      %v229 = vld [vmem:[%s225 + $0xc] sm:$0x1]
      %v230 = vld [vmem:[%s225 + $0x10] sm:$0xf]
      %v231 = vld [vmem:[%s225 + $0x14] sm:$0x1]
      %v232 = vld [vmem:[%s225 + $0x18] sm:$0xf]
      %v233 = vld [vmem:[%s225 + $0x1c] sm:$0x1]
      %v234 = vld [vmem:[%s225 + $0x20] sm:$0xf]
      %v235 = vld [vmem:[%s225 + $0x24] sm:$0x1]
      %v236 = vld [vmem:[%s225 + $0x28] sm:$0xf]
      %v237 = vld [vmem:[%s225 + $0x2c] sm:$0x1]
      %v238 = vld [vmem:[%s225 + $0x30] sm:$0xf]
      %v239 = vld [vmem:[%s225 + $0x34] sm:$0x1]
      %v240 = vld [vmem:[%s225 + $0x38] sm:$0xf]
      %v241 = vld [vmem:[%s225 + $0x3c] sm:$0x1]
      %v242 = vld [vmem:[#allocation2] sm:$0xff]
      %v243 = vld [vmem:[#allocation2 + $0x8] sm:$0xff]
      %v244 = vld [vmem:[#allocation2 + $0x10] sm:$0xff]
      %v245 = vld [vmem:[#allocation2 + $0x18] sm:$0xff]
      %v246 = vld [vmem:[#allocation2 + $0x20] sm:$0xff]
      %v247 = vld [vmem:[#allocation2 + $0x28] sm:$0xff]
      %v248 = vld [vmem:[#allocation2 + $0x30] sm:$0xff]
      %v249 = vld [vmem:[#allocation2 + $0x38] sm:$0xff]
      %v250 = vld [vmem:[%s1] sm:$0xf]
      %v251 = vld [vmem:[%s1 + $0x4] sm:$0xf]
      %v252 = vld [vmem:[%s1 + $0x8] sm:$0xf]
      %v253 = vld [vmem:[%s1 + $0xc] sm:$0xf]
      %v254 = vld [vmem:[%s1 + $0x10] sm:$0xf]
      %v255 = vld [vmem:[%s1 + $0x14] sm:$0xf]
      %v256 = vld [vmem:[%s1 + $0x18] sm:$0xf]
      %v257 = vld [vmem:[%s1 + $0x1c] sm:$0xf]
      %v258 = vld [vmem:[%s1 + $0x20] sm:$0xf]
      %v259 = vld [vmem:[%s1 + $0x24] sm:$0xf]
      %v260 = vld [vmem:[%s1 + $0x28] sm:$0xf]
      %v261 = vld [vmem:[%s1 + $0x2c] sm:$0xf]
      %v262 = vld [vmem:[%s1 + $0x30] sm:$0xf]
      %v263 = vld [vmem:[%s1 + $0x34] sm:$0xf]
      %v264 = vld [vmem:[%s1 + $0x38] sm:$0xf]
      %v265 = vld [vmem:[%s1 + $0x3c] sm:$0xf]
      %v274 = vunpack.c.l.b16 %v226
      %v275 = vunpack.c.l.b16 %v228
      %v276 = vunpack.c.l.b16 %v230
      %v277 = vunpack.c.l.b16 %v232
      %v278 = vunpack.c.l.b16 %v234
      %v279 = vunpack.c.l.b16 %v236
      %v280 = vunpack.c.l.b16 %v238
      %v281 = vunpack.c.l.b16 %v240
      %v282 = vpack.c.b16 %v275, %v274
      %v283 = vpack.c.b16 %v277, %v276
      %v284 = vpack.c.b16 %v279, %v278
      %v285 = vpack.c.b16 %v281, %v280
      %v306 = vunpack.c.l.b16 %v250
      %v307 = vunpack.c.l.b16 %v251
      %v308 = vunpack.c.l.b16 %v252
      %v309 = vunpack.c.l.b16 %v253
      %v310 = vunpack.c.l.b16 %v254
      %v311 = vunpack.c.l.b16 %v255
      %v312 = vunpack.c.l.b16 %v256
      %v313 = vunpack.c.l.b16 %v257
      %v314 = vunpack.c.l.b16 %v258
      %v315 = vunpack.c.l.b16 %v259
      %v316 = vunpack.c.l.b16 %v260
      %v317 = vunpack.c.l.b16 %v261
      %v318 = vunpack.c.l.b16 %v262
      %v319 = vunpack.c.l.b16 %v263
      %v320 = vunpack.c.l.b16 %v264
      %v321 = vunpack.c.l.b16 %v265
      %v322 = vpack.c.b16 %v307, %v306
      %v323 = vpack.c.b16 %v309, %v308
      %v324 = vpack.c.b16 %v311, %v310
      %v325 = vpack.c.b16 %v313, %v312
      %v326 = vpack.c.b16 %v315, %v314
      %v327 = vpack.c.b16 %v317, %v316
      %v328 = vpack.c.b16 %v319, %v318
      %v329 = vpack.c.b16 %v321, %v320
      %338 = vmatprep.subr.bf16.mxu0 0
      %339 = vmatpush1.bf16.msra.mxu0 %v322
      %340 = vmatprep.subr.bf16.mxu0 0
      %341 = vmatpush1.bf16.msra.mxu0 %v323
      %342 = vmatprep.subr.bf16.mxu0 0
      %343 = vmatpush1.bf16.msra.mxu0 %v324
      %344 = vmatprep.subr.bf16.mxu0 0
      %345 = vmatpush1.bf16.msra.mxu0 %v325
      %346 = vmatprep.subr.bf16.mxu0 0
      %347 = vmatpush1.bf16.msra.mxu0 %v326
      %348 = vmatprep.subr.bf16.mxu0 0
      %349 = vmatpush1.bf16.msra.mxu0 %v327
      %350 = vmatprep.subr.bf16.mxu0 0
      %351 = vmatpush1.bf16.msra.mxu0 %v328
      %352 = vmatprep.subr.bf16.mxu0 0
      %353 = vmatpush1.bf16.msra.mxu0 %v329
      %354 = vmatprep.subr.bf16.mxu0 0
      %355 = vmatpush1.bf16.msra.mxu0 0
      %356 = vmatprep.subr.bf16.mxu0 0
      %357 = vmatpush1.bf16.msra.mxu0 0
      %358 = vmatprep.subr.bf16.mxu0 0
      %359 = vmatpush1.bf16.msra.mxu0 0
      %360 = vmatprep.subr.bf16.mxu0 0
      %361 = vmatpush1.bf16.msra.mxu0 0
      %362 = vmatprep.subr.bf16.mxu0 0
      %363 = vmatpush1.bf16.msra.mxu0 0
      %364 = vmatprep.subr.bf16.mxu0 0
      %365 = vmatpush1.bf16.msra.mxu0 0
      %366 = vmatprep.subr.bf16.mxu0 0
      %367 = vmatpush1.bf16.msra.mxu0 0
      %368 = vmatprep.subr.bf16.mxu0 0
      %369 = vmatpush1.bf16.msra.mxu0 0
      %370 = vmatprep.mubr.bf16.mxu0 0
      %371 = vmatmul.mubr.bf16.gmra.mrb[0].mxu0 %v282
      %v372 = vpop.f32.mrb[0].mxu0
      %v373 = vadd.f32 0.0, %v372
      %v374 = vpop.f32.mrb[0].mxu0
      %v375 = vpop.f32.mrb[0].mxu0
      %v376 = vadd.f32 0.0, %v375
      %v377 = vpop.f32.mrb[0].mxu0
      %378 = vmatprep.mubr.bf16.mxu0 0
      %379 = vmatmul.mubr.bf16.gmra.mrb[0].mxu0 %v283
      %v380 = vpop.f32.mrb[0].mxu0
      %v381 = vadd.f32 0.0, %v380
      %v382 = vpop.f32.mrb[0].mxu0
      %v383 = vpop.f32.mrb[0].mxu0
      %v384 = vadd.f32 0.0, %v383
      %v385 = vpop.f32.mrb[0].mxu0
      %386 = vmatprep.mubr.bf16.mxu0 0
      %387 = vmatmul.mubr.bf16.gmra.mrb[0].mxu0 %v284
      %v388 = vpop.f32.mrb[0].mxu0
      %v389 = vadd.f32 0.0, %v388
      %v390 = vpop.f32.mrb[0].mxu0
      %v391 = vpop.f32.mrb[0].mxu0
      %v392 = vadd.f32 0.0, %v391
      %v393 = vpop.f32.mrb[0].mxu0
      %394 = vmatprep.mubr.bf16.mxu0 0
      %395 = vmatmul.mubr.bf16.gmra.mrb[0].mxu0 %v285
      %v396 = vpop.f32.mrb[0].mxu0
      %v397 = vadd.f32 0.0, %v396
      %v398 = vpop.f32.mrb[0].mxu0
      %v399 = vpop.f32.mrb[0].mxu0
      %v400 = vadd.f32 0.0, %v399
      %v401 = vpop.f32.mrb[0].mxu0
      %402 = vdwg.mxu0
      %v403 = vadd.f32 %v242, %v373
      %v404 = vadd.f32 %v243, %v376
      %v405 = vadd.f32 %v244, %v381
      %v406 = vadd.f32 %v245, %v384
      %v407 = vadd.f32 %v246, %v389
      %v408 = vadd.f32 %v247, %v392
      %v409 = vadd.f32 %v248, %v397
      %v410 = vadd.f32 %v249, %v400
      %411 = vst [vmem:[#allocation2] sm:$0xff] %v403
      %412 = vst [vmem:[#allocation2 + $0x8] sm:$0xff] %v404
      %413 = vst [vmem:[#allocation2 + $0x10] sm:$0xff] %v405
      %414 = vst [vmem:[#allocation2 + $0x18] sm:$0xff] %v406
      %415 = vst [vmem:[#allocation2 + $0x20] sm:$0xff] %v407
      %416 = vst [vmem:[#allocation2 + $0x28] sm:$0xff] %v408
      %417 = vst [vmem:[#allocation2 + $0x30] sm:$0xff] %v409
      %418 = vst [vmem:[#allocation2 + $0x38] sm:$0xff] %v410
      %vm419 = vsmask.f32 3328
      %vm420 = vsmask.f32 7440
      %vm421 = vmor %vm419, %vm420
      %v423 = vshrl.u32 %v226, 16
      %v425 = vrot.slane %v423, 4
      %v426 = vshll.u32 %v226, 16
      %v428 = vrot.slane %v426, 5
      %v429 = vor.u32 %v425, %v428
      %v430 = vrot.slane %v429, 4
      %v432 = vshll.u32 %v227, 16
      %v434 = vrot.slane %v432, 5
      %v435 = vsel %vm421, %v430, %v434
      %v437 = vshrl.u32 %v228, 16
      %v439 = vrot.slane %v437, 4
      %v440 = vshll.u32 %v228, 16
      %v442 = vrot.slane %v440, 5
      %v443 = vor.u32 %v439, %v442
      %v444 = vrot.slane %v443, 4
      %v446 = vshll.u32 %v229, 16
      %v448 = vrot.slane %v446, 5
      %v449 = vsel %vm421, %v444, %v448
      %v451 = vshrl.u32 %v230, 16
      %v453 = vrot.slane %v451, 4
      %v454 = vshll.u32 %v230, 16
      %v456 = vrot.slane %v454, 5
      %v457 = vor.u32 %v453, %v456
      %v458 = vrot.slane %v457, 4
      %v460 = vshll.u32 %v231, 16
      %v462 = vrot.slane %v460, 5
      %v463 = vsel %vm421, %v458, %v462
      %v465 = vshrl.u32 %v232, 16
      %v467 = vrot.slane %v465, 4
      %v468 = vshll.u32 %v232, 16
      %v470 = vrot.slane %v468, 5
      %v471 = vor.u32 %v467, %v470
      %v472 = vrot.slane %v471, 4
      %v474 = vshll.u32 %v233, 16
      %v476 = vrot.slane %v474, 5
      %v477 = vsel %vm421, %v472, %v476
      %v479 = vshrl.u32 %v234, 16
      %v481 = vrot.slane %v479, 4
      %v482 = vshll.u32 %v234, 16
      %v484 = vrot.slane %v482, 5
      %v485 = vor.u32 %v481, %v484
      %v486 = vrot.slane %v485, 4
      %v488 = vshll.u32 %v235, 16
      %v490 = vrot.slane %v488, 5
      %v491 = vsel %vm421, %v486, %v490
      %v493 = vshrl.u32 %v236, 16
      %v495 = vrot.slane %v493, 4
      %v496 = vshll.u32 %v236, 16
      %v498 = vrot.slane %v496, 5
      %v499 = vor.u32 %v495, %v498
      %v500 = vrot.slane %v499, 4
      %v502 = vshll.u32 %v237, 16
      %v504 = vrot.slane %v502, 5
      %v505 = vsel %vm421, %v500, %v504
      %v507 = vshrl.u32 %v238, 16
      %v509 = vrot.slane %v507, 4
      %v510 = vshll.u32 %v238, 16
      %v512 = vrot.slane %v510, 5
      %v513 = vor.u32 %v509, %v512
      %v514 = vrot.slane %v513, 4
      %v516 = vshll.u32 %v239, 16
      %v518 = vrot.slane %v516, 5
      %v519 = vsel %vm421, %v514, %v518
      %v521 = vshrl.u32 %v240, 16
      %v523 = vrot.slane %v521, 4
      %v524 = vshll.u32 %v240, 16
      %v526 = vrot.slane %v524, 5
      %v527 = vor.u32 %v523, %v526
      %v528 = vrot.slane %v527, 4
      %v530 = vshll.u32 %v241, 16
      %v532 = vrot.slane %v530, 5
      %v533 = vsel %vm421, %v528, %v532
      %v534 = vld [vmem:[#allocation2] sm:$0xff]
      %v535 = vld [vmem:[#allocation2 + $0x8] sm:$0xff]
      %v536 = vld [vmem:[#allocation2 + $0x10] sm:$0xff]
      %v537 = vld [vmem:[#allocation2 + $0x18] sm:$0xff]
      %v538 = vld [vmem:[#allocation2 + $0x20] sm:$0xff]
      %v539 = vld [vmem:[#allocation2 + $0x28] sm:$0xff]
      %v540 = vld [vmem:[#allocation2 + $0x30] sm:$0xff]
      %v541 = vld [vmem:[#allocation2 + $0x38] sm:$0xff]
      %s542 = scalar_lea.vmem %s1, 64
      %v543 = vld [vmem:[%s542] sm:$0xf]
      %v544 = vld [vmem:[%s542 + $0x4] sm:$0xf]
      %v545 = vld [vmem:[%s542 + $0x8] sm:$0xf]
      %v546 = vld [vmem:[%s542 + $0xc] sm:$0xf]
      %v547 = vld [vmem:[%s542 + $0x10] sm:$0xf]
      %v548 = vld [vmem:[%s542 + $0x14] sm:$0xf]
      %v549 = vld [vmem:[%s542 + $0x18] sm:$0xf]
      %v550 = vld [vmem:[%s542 + $0x1c] sm:$0xf]
      %v551 = vld [vmem:[%s542 + $0x20] sm:$0xf]
      %v552 = vld [vmem:[%s542 + $0x24] sm:$0xf]
      %v553 = vld [vmem:[%s542 + $0x28] sm:$0xf]
      %v554 = vld [vmem:[%s542 + $0x2c] sm:$0xf]
      %v555 = vld [vmem:[%s542 + $0x30] sm:$0xf]
      %v556 = vld [vmem:[%s542 + $0x34] sm:$0xf]
      %v557 = vld [vmem:[%s542 + $0x38] sm:$0xf]
      %v558 = vld [vmem:[%s542 + $0x3c] sm:$0xf]
      %v559 = vunpack.c.l.b16 %v435
      %v560 = vunpack.c.l.b16 %v449
      %v561 = vunpack.c.l.b16 %v463
      %v562 = vunpack.c.l.b16 %v477
      %v563 = vunpack.c.l.b16 %v491
      %v564 = vunpack.c.l.b16 %v505
      %v565 = vunpack.c.l.b16 %v519
      %v566 = vunpack.c.l.b16 %v533
      %v567 = vpack.c.b16 %v560, %v559
      %v568 = vpack.c.b16 %v562, %v561
      %v569 = vpack.c.b16 %v564, %v563
      %v570 = vpack.c.b16 %v566, %v565
      %v591 = vunpack.c.l.b16 %v543
      %v592 = vunpack.c.l.b16 %v544
      %v593 = vunpack.c.l.b16 %v545
      %v594 = vunpack.c.l.b16 %v546
      %v595 = vunpack.c.l.b16 %v547
      %v596 = vunpack.c.l.b16 %v548
      %v597 = vunpack.c.l.b16 %v549
      %v598 = vunpack.c.l.b16 %v550
      %v599 = vunpack.c.l.b16 %v551
      %v600 = vunpack.c.l.b16 %v552
      %v601 = vunpack.c.l.b16 %v553
      %v602 = vunpack.c.l.b16 %v554
      %v603 = vunpack.c.l.b16 %v555
      %v604 = vunpack.c.l.b16 %v556
      %v605 = vunpack.c.l.b16 %v557
      %v606 = vunpack.c.l.b16 %v558
      %v607 = vpack.c.b16 %v592, %v591
      %v608 = vpack.c.b16 %v594, %v593
      %v609 = vpack.c.b16 %v596, %v595
      %v610 = vpack.c.b16 %v598, %v597
      %v611 = vpack.c.b16 %v600, %v599
      %v612 = vpack.c.b16 %v602, %v601
      %v613 = vpack.c.b16 %v604, %v603
      %v614 = vpack.c.b16 %v606, %v605
      %623 = vmatprep.subr.bf16.mxu0 0
      %624 = vmatpush1.bf16.msra.mxu0 %v607
      %625 = vmatprep.subr.bf16.mxu0 0
      %626 = vmatpush1.bf16.msra.mxu0 %v608
      %627 = vmatprep.subr.bf16.mxu0 0
      %628 = vmatpush1.bf16.msra.mxu0 %v609
      %629 = vmatprep.subr.bf16.mxu0 0
      %630 = vmatpush1.bf16.msra.mxu0 %v610
      %631 = vmatprep.subr.bf16.mxu0 0
      %632 = vmatpush1.bf16.msra.mxu0 %v611
      %633 = vmatprep.subr.bf16.mxu0 0
      %634 = vmatpush1.bf16.msra.mxu0 %v612
      %635 = vmatprep.subr.bf16.mxu0 0
      %636 = vmatpush1.bf16.msra.mxu0 %v613
      %637 = vmatprep.subr.bf16.mxu0 0
      %638 = vmatpush1.bf16.msra.mxu0 %v614
      %639 = vmatprep.subr.bf16.mxu0 0
      %640 = vmatpush1.bf16.msra.mxu0 0
      %641 = vmatprep.subr.bf16.mxu0 0
      %642 = vmatpush1.bf16.msra.mxu0 0
      %643 = vmatprep.subr.bf16.mxu0 0
      %644 = vmatpush1.bf16.msra.mxu0 0
      %645 = vmatprep.subr.bf16.mxu0 0
      %646 = vmatpush1.bf16.msra.mxu0 0
      %647 = vmatprep.subr.bf16.mxu0 0
      %648 = vmatpush1.bf16.msra.mxu0 0
      %649 = vmatprep.subr.bf16.mxu0 0
      %650 = vmatpush1.bf16.msra.mxu0 0
      %651 = vmatprep.subr.bf16.mxu0 0
      %652 = vmatpush1.bf16.msra.mxu0 0
      %653 = vmatprep.subr.bf16.mxu0 0
      %654 = vmatpush1.bf16.msra.mxu0 0
      %655 = vmatprep.mubr.bf16.mxu0 0
      %656 = vmatmul.mubr.bf16.gmra.mrb[0].mxu0 %v567
      %v657 = vpop.f32.mrb[0].mxu0
      %v658 = vadd.f32 0.0, %v657
      %v659 = vpop.f32.mrb[0].mxu0
      %v660 = vpop.f32.mrb[0].mxu0
      %v661 = vadd.f32 0.0, %v660
      %v662 = vpop.f32.mrb[0].mxu0
      %663 = vmatprep.mubr.bf16.mxu0 0
      %664 = vmatmul.mubr.bf16.gmra.mrb[0].mxu0 %v568
      %v665 = vpop.f32.mrb[0].mxu0
      %v666 = vadd.f32 0.0, %v665
      %v667 = vpop.f32.mrb[0].mxu0
      %v668 = vpop.f32.mrb[0].mxu0
      %v669 = vadd.f32 0.0, %v668
      %v670 = vpop.f32.mrb[0].mxu0
      %671 = vmatprep.mubr.bf16.mxu0 0
      %672 = vmatmul.mubr.bf16.gmra.mrb[0].mxu0 %v569
      %v673 = vpop.f32.mrb[0].mxu0
      %v674 = vadd.f32 0.0, %v673
      %v675 = vpop.f32.mrb[0].mxu0
      %v676 = vpop.f32.mrb[0].mxu0
      %v677 = vadd.f32 0.0, %v676
      %v678 = vpop.f32.mrb[0].mxu0
      %679 = vmatprep.mubr.bf16.mxu0 0
      %680 = vmatmul.mubr.bf16.gmra.mrb[0].mxu0 %v570
      %v681 = vpop.f32.mrb[0].mxu0
      %v682 = vadd.f32 0.0, %v681
      %v683 = vpop.f32.mrb[0].mxu0
      %v684 = vpop.f32.mrb[0].mxu0
      %v685 = vadd.f32 0.0, %v684
      %v686 = vpop.f32.mrb[0].mxu0
      %687 = vdwg.mxu0
      %v688 = vadd.f32 %v534, %v658
      %v689 = vadd.f32 %v535, %v661
      %v690 = vadd.f32 %v536, %v666
      %v691 = vadd.f32 %v537, %v669
      %v692 = vadd.f32 %v538, %v674
      %v693 = vadd.f32 %v539, %v677
      %v694 = vadd.f32 %v540, %v682
      %v695 = vadd.f32 %v541, %v685
      %696 = vst [vmem:[#allocation2] sm:$0xff] %v688
      %697 = vst [vmem:[#allocation2 + $0x8] sm:$0xff] %v689
      %698 = vst [vmem:[#allocation2 + $0x10] sm:$0xff] %v690
      %699 = vst [vmem:[#allocation2 + $0x18] sm:$0xff] %v691
      %700 = vst [vmem:[#allocation2 + $0x20] sm:$0xff] %v692
      %701 = vst [vmem:[#allocation2 + $0x28] sm:$0xff] %v693
      %702 = vst [vmem:[#allocation2 + $0x30] sm:$0xff] %v694
      %703 = vst [vmem:[#allocation2 + $0x38] sm:$0xff] %v695
      %vm712 = vcmask 1042432
      %vm713 = vcmask 1046532
      %vm714 = vmor %vm712, %vm713
      %v715 = vrot.slane %v226, 5
      %v716 = vrot.slane %v715, 4
      %v717 = vrot.slane %v227, 5
      %v718 = vsel %vm714, %v716, %v717
      %v719 = vrot.slane %v228, 5
      %v720 = vrot.slane %v719, 4
      %v721 = vrot.slane %v229, 5
      %v722 = vsel %vm714, %v720, %v721
      %v723 = vrot.slane %v230, 5
      %v724 = vrot.slane %v723, 4
      %v725 = vrot.slane %v231, 5
      %v726 = vsel %vm714, %v724, %v725
      %v727 = vrot.slane %v232, 5
      %v728 = vrot.slane %v727, 4
      %v729 = vrot.slane %v233, 5
      %v730 = vsel %vm714, %v728, %v729
      %v731 = vrot.slane %v234, 5
      %v732 = vrot.slane %v731, 4
      %v733 = vrot.slane %v235, 5
      %v734 = vsel %vm714, %v732, %v733
      %v735 = vrot.slane %v236, 5
      %v736 = vrot.slane %v735, 4
      %v737 = vrot.slane %v237, 5
      %v738 = vsel %vm714, %v736, %v737
      %v739 = vrot.slane %v238, 5
      %v740 = vrot.slane %v739, 4
      %v741 = vrot.slane %v239, 5
      %v742 = vsel %vm714, %v740, %v741
      %v743 = vrot.slane %v240, 5
      %v744 = vrot.slane %v743, 4
      %v745 = vrot.slane %v241, 5
      %v746 = vsel %vm714, %v744, %v745
      %v747 = vld [vmem:[#allocation2] sm:$0xff]
      %v748 = vld [vmem:[#allocation2 + $0x8] sm:$0xff]
      %v749 = vld [vmem:[#allocation2 + $0x10] sm:$0xff]
      %v750 = vld [vmem:[#allocation2 + $0x18] sm:$0xff]
      %v751 = vld [vmem:[#allocation2 + $0x20] sm:$0xff]
      %v752 = vld [vmem:[#allocation2 + $0x28] sm:$0xff]
      %v753 = vld [vmem:[#allocation2 + $0x30] sm:$0xff]
      %v754 = vld [vmem:[#allocation2 + $0x38] sm:$0xff]
      %s755 = scalar_lea.vmem %s1, 128
      %v756 = vld [vmem:[%s755] sm:$0xf]
      %v757 = vld [vmem:[%s755 + $0x4] sm:$0xf]
      %v758 = vld [vmem:[%s755 + $0x8] sm:$0xf]
      %v759 = vld [vmem:[%s755 + $0xc] sm:$0xf]
      %v760 = vld [vmem:[%s755 + $0x10] sm:$0xf]
      %v761 = vld [vmem:[%s755 + $0x14] sm:$0xf]
      %v762 = vld [vmem:[%s755 + $0x18] sm:$0xf]
      %v763 = vld [vmem:[%s755 + $0x1c] sm:$0xf]
      %v764 = vld [vmem:[%s755 + $0x20] sm:$0xf]
      %v765 = vld [vmem:[%s755 + $0x24] sm:$0xf]
      %v766 = vld [vmem:[%s755 + $0x28] sm:$0xf]
      %v767 = vld [vmem:[%s755 + $0x2c] sm:$0xf]
      %v768 = vld [vmem:[%s755 + $0x30] sm:$0xf]
      %v769 = vld [vmem:[%s755 + $0x34] sm:$0xf]
      %v770 = vld [vmem:[%s755 + $0x38] sm:$0xf]
      %v771 = vld [vmem:[%s755 + $0x3c] sm:$0xf]
      %v772 = vunpack.c.l.b16 %v718
      %v773 = vunpack.c.l.b16 %v722
      %v774 = vunpack.c.l.b16 %v726
      %v775 = vunpack.c.l.b16 %v730
      %v776 = vunpack.c.l.b16 %v734
      %v777 = vunpack.c.l.b16 %v738
      %v778 = vunpack.c.l.b16 %v742
      %v779 = vunpack.c.l.b16 %v746
      %v780 = vpack.c.b16 %v773, %v772
      %v781 = vpack.c.b16 %v775, %v774
      %v782 = vpack.c.b16 %v777, %v776
      %v783 = vpack.c.b16 %v779, %v778
      %v804 = vunpack.c.l.b16 %v756
      %v805 = vunpack.c.l.b16 %v757
      %v806 = vunpack.c.l.b16 %v758
      %v807 = vunpack.c.l.b16 %v759
      %v808 = vunpack.c.l.b16 %v760
      %v809 = vunpack.c.l.b16 %v761
      %v810 = vunpack.c.l.b16 %v762
      %v811 = vunpack.c.l.b16 %v763
      %v812 = vunpack.c.l.b16 %v764
      %v813 = vunpack.c.l.b16 %v765
      %v814 = vunpack.c.l.b16 %v766
      %v815 = vunpack.c.l.b16 %v767
      %v816 = vunpack.c.l.b16 %v768
      %v817 = vunpack.c.l.b16 %v769
      %v818 = vunpack.c.l.b16 %v770
      %v819 = vunpack.c.l.b16 %v771
      %v820 = vpack.c.b16 %v805, %v804
      %v821 = vpack.c.b16 %v807, %v806
      %v822 = vpack.c.b16 %v809, %v808
      %v823 = vpack.c.b16 %v811, %v810
      %v824 = vpack.c.b16 %v813, %v812
      %v825 = vpack.c.b16 %v815, %v814
      %v826 = vpack.c.b16 %v817, %v816
      %v827 = vpack.c.b16 %v819, %v818
      %836 = vmatprep.subr.bf16.mxu0 0
      %837 = vmatpush1.bf16.msra.mxu0 %v820
      %838 = vmatprep.subr.bf16.mxu0 0
      %839 = vmatpush1.bf16.msra.mxu0 %v821
      %840 = vmatprep.subr.bf16.mxu0 0
      %841 = vmatpush1.bf16.msra.mxu0 %v822
      %842 = vmatprep.subr.bf16.mxu0 0
      %843 = vmatpush1.bf16.msra.mxu0 %v823
      %844 = vmatprep.subr.bf16.mxu0 0
      %845 = vmatpush1.bf16.msra.mxu0 %v824
      %846 = vmatprep.subr.bf16.mxu0 0
      %847 = vmatpush1.bf16.msra.mxu0 %v825
      %848 = vmatprep.subr.bf16.mxu0 0
      %849 = vmatpush1.bf16.msra.mxu0 %v826
      %850 = vmatprep.subr.bf16.mxu0 0
      %851 = vmatpush1.bf16.msra.mxu0 %v827
      %852 = vmatprep.subr.bf16.mxu0 0
      %853 = vmatpush1.bf16.msra.mxu0 0
      %854 = vmatprep.subr.bf16.mxu0 0
      %855 = vmatpush1.bf16.msra.mxu0 0
      %856 = vmatprep.subr.bf16.mxu0 0
      %857 = vmatpush1.bf16.msra.mxu0 0
      %858 = vmatprep.subr.bf16.mxu0 0
      %859 = vmatpush1.bf16.msra.mxu0 0
      %860 = vmatprep.subr.bf16.mxu0 0
      %861 = vmatpush1.bf16.msra.mxu0 0
      %862 = vmatprep.subr.bf16.mxu0 0
      %863 = vmatpush1.bf16.msra.mxu0 0
      %864 = vmatprep.subr.bf16.mxu0 0
      %865 = vmatpush1.bf16.msra.mxu0 0
      %866 = vmatprep.subr.bf16.mxu0 0
      %867 = vmatpush1.bf16.msra.mxu0 0
      %868 = vmatprep.mubr.bf16.mxu0 0
      %869 = vmatmul.mubr.bf16.gmra.mrb[0].mxu0 %v780
      %v870 = vpop.f32.mrb[0].mxu0
      %v871 = vadd.f32 0.0, %v870
      %v872 = vpop.f32.mrb[0].mxu0
      %v873 = vpop.f32.mrb[0].mxu0
      %v874 = vadd.f32 0.0, %v873
      %v875 = vpop.f32.mrb[0].mxu0
      %876 = vmatprep.mubr.bf16.mxu0 0
      %877 = vmatmul.mubr.bf16.gmra.mrb[0].mxu0 %v781
      %v878 = vpop.f32.mrb[0].mxu0
      %v879 = vadd.f32 0.0, %v878
      %v880 = vpop.f32.mrb[0].mxu0
      %v881 = vpop.f32.mrb[0].mxu0
      %v882 = vadd.f32 0.0, %v881
      %v883 = vpop.f32.mrb[0].mxu0
      %884 = vmatprep.mubr.bf16.mxu0 0
      %885 = vmatmul.mubr.bf16.gmra.mrb[0].mxu0 %v782
      %v886 = vpop.f32.mrb[0].mxu0
      %v887 = vadd.f32 0.0, %v886
      %v888 = vpop.f32.mrb[0].mxu0
      %v889 = vpop.f32.mrb[0].mxu0
      %v890 = vadd.f32 0.0, %v889
      %v891 = vpop.f32.mrb[0].mxu0
      %892 = vmatprep.mubr.bf16.mxu0 0
      %893 = vmatmul.mubr.bf16.gmra.mrb[0].mxu0 %v783
      %v894 = vpop.f32.mrb[0].mxu0
      %v895 = vadd.f32 0.0, %v894
      %v896 = vpop.f32.mrb[0].mxu0
      %v897 = vpop.f32.mrb[0].mxu0
      %v898 = vadd.f32 0.0, %v897
      %v899 = vpop.f32.mrb[0].mxu0
      %900 = vdwg.mxu0
      %v901 = vadd.f32 %v747, %v871
      %v902 = vadd.f32 %v748, %v874
      %v903 = vadd.f32 %v749, %v879
      %v904 = vadd.f32 %v750, %v882
      %v905 = vadd.f32 %v751, %v887
      %v906 = vadd.f32 %v752, %v890
      %v907 = vadd.f32 %v753, %v895
      %v908 = vadd.f32 %v754, %v898
      %909 = vst [vmem:[#allocation2] sm:$0xff] %v901
      %910 = vst [vmem:[#allocation2 + $0x8] sm:$0xff] %v902
      %911 = vst [vmem:[#allocation2 + $0x10] sm:$0xff] %v903
      %912 = vst [vmem:[#allocation2 + $0x18] sm:$0xff] %v904
      %913 = vst [vmem:[#allocation2 + $0x20] sm:$0xff] %v905
      %914 = vst [vmem:[#allocation2 + $0x28] sm:$0xff] %v906
      %915 = vst [vmem:[#allocation2 + $0x30] sm:$0xff] %v907
      %916 = vst [vmem:[#allocation2 + $0x38] sm:$0xff] %v908
      %s917 = sadd.s32 %s214, 1
      %s918 = smul.u32 %s917, 2
      %s919 = smul.addr %s918, 4
      %s920 = scalar_lea.vmem %s195, %s919
      %v921 = vld [vmem:[%s920] sm:$0xf]
      %v922 = vld [vmem:[%s920 + $0x4] sm:$0x1]
      %v923 = vld [vmem:[%s920 + $0x8] sm:$0xf]
      %v924 = vld [vmem:[%s920 + $0xc] sm:$0x1]
      %v925 = vld [vmem:[%s920 + $0x10] sm:$0xf]
      %v926 = vld [vmem:[%s920 + $0x14] sm:$0x1]
      %v927 = vld [vmem:[%s920 + $0x18] sm:$0xf]
      %v928 = vld [vmem:[%s920 + $0x1c] sm:$0x1]
      %v929 = vld [vmem:[%s920 + $0x20] sm:$0xf]
      %v930 = vld [vmem:[%s920 + $0x24] sm:$0x1]
      %v931 = vld [vmem:[%s920 + $0x28] sm:$0xf]
      %v932 = vld [vmem:[%s920 + $0x2c] sm:$0x1]
      %v933 = vld [vmem:[%s920 + $0x30] sm:$0xf]
      %v934 = vld [vmem:[%s920 + $0x34] sm:$0x1]
      %v935 = vld [vmem:[%s920 + $0x38] sm:$0xf]
      %v936 = vld [vmem:[%s920 + $0x3c] sm:$0x1]
      %v937 = vld [vmem:[#allocation2] sm:$0xff]
      %v938 = vld [vmem:[#allocation2 + $0x8] sm:$0xff]
      %v939 = vld [vmem:[#allocation2 + $0x10] sm:$0xff]
      %v940 = vld [vmem:[#allocation2 + $0x18] sm:$0xff]
      %v941 = vld [vmem:[#allocation2 + $0x20] sm:$0xff]
      %v942 = vld [vmem:[#allocation2 + $0x28] sm:$0xff]
      %v943 = vld [vmem:[#allocation2 + $0x30] sm:$0xff]
      %v944 = vld [vmem:[#allocation2 + $0x38] sm:$0xff]
      %s945 = scalar_lea.vmem %s1, 192
      %v946 = vld [vmem:[%s945] sm:$0xf]
      %v947 = vld [vmem:[%s945 + $0x4] sm:$0xf]
      %v948 = vld [vmem:[%s945 + $0x8] sm:$0xf]
      %v949 = vld [vmem:[%s945 + $0xc] sm:$0xf]
      %v950 = vld [vmem:[%s945 + $0x10] sm:$0xf]
      %v951 = vld [vmem:[%s945 + $0x14] sm:$0xf]
      %v952 = vld [vmem:[%s945 + $0x18] sm:$0xf]
      %v953 = vld [vmem:[%s945 + $0x1c] sm:$0xf]
      %v954 = vld [vmem:[%s945 + $0x20] sm:$0xf]
      %v955 = vld [vmem:[%s945 + $0x24] sm:$0xf]
      %v956 = vld [vmem:[%s945 + $0x28] sm:$0xf]
      %v957 = vld [vmem:[%s945 + $0x2c] sm:$0xf]
      %v958 = vld [vmem:[%s945 + $0x30] sm:$0xf]
      %v959 = vld [vmem:[%s945 + $0x34] sm:$0xf]
      %v960 = vld [vmem:[%s945 + $0x38] sm:$0xf]
      %v961 = vld [vmem:[%s945 + $0x3c] sm:$0xf]
      %v970 = vunpack.c.l.b16 %v921
      %v971 = vunpack.c.l.b16 %v923
      %v972 = vunpack.c.l.b16 %v925
      %v973 = vunpack.c.l.b16 %v927
      %v974 = vunpack.c.l.b16 %v929
      %v975 = vunpack.c.l.b16 %v931
      %v976 = vunpack.c.l.b16 %v933
      %v977 = vunpack.c.l.b16 %v935
      %v978 = vpack.c.b16 %v971, %v970
      %v979 = vpack.c.b16 %v973, %v972
      %v980 = vpack.c.b16 %v975, %v974
      %v981 = vpack.c.b16 %v977, %v976
      %v1002 = vunpack.c.l.b16 %v946
      %v1003 = vunpack.c.l.b16 %v947
      %v1004 = vunpack.c.l.b16 %v948
      %v1005 = vunpack.c.l.b16 %v949
      %v1006 = vunpack.c.l.b16 %v950
      %v1007 = vunpack.c.l.b16 %v951
      %v1008 = vunpack.c.l.b16 %v952
      %v1009 = vunpack.c.l.b16 %v953
      %v1010 = vunpack.c.l.b16 %v954
      %v1011 = vunpack.c.l.b16 %v955
      %v1012 = vunpack.c.l.b16 %v956
      %v1013 = vunpack.c.l.b16 %v957
      %v1014 = vunpack.c.l.b16 %v958
      %v1015 = vunpack.c.l.b16 %v959
      %v1016 = vunpack.c.l.b16 %v960
      %v1017 = vunpack.c.l.b16 %v961
      %v1018 = vpack.c.b16 %v1003, %v1002
      %v1019 = vpack.c.b16 %v1005, %v1004
      %v1020 = vpack.c.b16 %v1007, %v1006
      %v1021 = vpack.c.b16 %v1009, %v1008
      %v1022 = vpack.c.b16 %v1011, %v1010
      %v1023 = vpack.c.b16 %v1013, %v1012
      %v1024 = vpack.c.b16 %v1015, %v1014
      %v1025 = vpack.c.b16 %v1017, %v1016
      %1034 = vmatprep.subr.bf16.mxu0 0
      %1035 = vmatpush1.bf16.msra.mxu0 %v1018
      %1036 = vmatprep.subr.bf16.mxu0 0
      %1037 = vmatpush1.bf16.msra.mxu0 %v1019
      %1038 = vmatprep.subr.bf16.mxu0 0
      %1039 = vmatpush1.bf16.msra.mxu0 %v1020
      %1040 = vmatprep.subr.bf16.mxu0 0
      %1041 = vmatpush1.bf16.msra.mxu0 %v1021
      %1042 = vmatprep.subr.bf16.mxu0 0
      %1043 = vmatpush1.bf16.msra.mxu0 %v1022
      %1044 = vmatprep.subr.bf16.mxu0 0
      %1045 = vmatpush1.bf16.msra.mxu0 %v1023
      %1046 = vmatprep.subr.bf16.mxu0 0
      %1047 = vmatpush1.bf16.msra.mxu0 %v1024
      %1048 = vmatprep.subr.bf16.mxu0 0
      %1049 = vmatpush1.bf16.msra.mxu0 %v1025
      %1050 = vmatprep.subr.bf16.mxu0 0
      %1051 = vmatpush1.bf16.msra.mxu0 0
      %1052 = vmatprep.subr.bf16.mxu0 0
      %1053 = vmatpush1.bf16.msra.mxu0 0
      %1054 = vmatprep.subr.bf16.mxu0 0
      %1055 = vmatpush1.bf16.msra.mxu0 0
      %1056 = vmatprep.subr.bf16.mxu0 0
      %1057 = vmatpush1.bf16.msra.mxu0 0
      %1058 = vmatprep.subr.bf16.mxu0 0
      %1059 = vmatpush1.bf16.msra.mxu0 0
      %1060 = vmatprep.subr.bf16.mxu0 0
      %1061 = vmatpush1.bf16.msra.mxu0 0
      %1062 = vmatprep.subr.bf16.mxu0 0
      %1063 = vmatpush1.bf16.msra.mxu0 0
      %1064 = vmatprep.subr.bf16.mxu0 0
      %1065 = vmatpush1.bf16.msra.mxu0 0
      %1066 = vmatprep.mubr.bf16.mxu0 0
      %1067 = vmatmul.mubr.bf16.gmra.mrb[0].mxu0 %v978
      %v1068 = vpop.f32.mrb[0].mxu0
      %v1069 = vadd.f32 0.0, %v1068
      %v1070 = vpop.f32.mrb[0].mxu0
      %v1071 = vpop.f32.mrb[0].mxu0
      %v1072 = vadd.f32 0.0, %v1071
      %v1073 = vpop.f32.mrb[0].mxu0
      %1074 = vmatprep.mubr.bf16.mxu0 0
      %1075 = vmatmul.mubr.bf16.gmra.mrb[0].mxu0 %v979
      %v1076 = vpop.f32.mrb[0].mxu0
      %v1077 = vadd.f32 0.0, %v1076
      %v1078 = vpop.f32.mrb[0].mxu0
      %v1079 = vpop.f32.mrb[0].mxu0
      %v1080 = vadd.f32 0.0, %v1079
      %v1081 = vpop.f32.mrb[0].mxu0
      %1082 = vmatprep.mubr.bf16.mxu0 0
      %1083 = vmatmul.mubr.bf16.gmra.mrb[0].mxu0 %v980
      %v1084 = vpop.f32.mrb[0].mxu0
      %v1085 = vadd.f32 0.0, %v1084
      %v1086 = vpop.f32.mrb[0].mxu0
      %v1087 = vpop.f32.mrb[0].mxu0
      %v1088 = vadd.f32 0.0, %v1087
      %v1089 = vpop.f32.mrb[0].mxu0
      %1090 = vmatprep.mubr.bf16.mxu0 0
      %1091 = vmatmul.mubr.bf16.gmra.mrb[0].mxu0 %v981
      %v1092 = vpop.f32.mrb[0].mxu0
      %v1093 = vadd.f32 0.0, %v1092
      %v1094 = vpop.f32.mrb[0].mxu0
      %v1095 = vpop.f32.mrb[0].mxu0
      %v1096 = vadd.f32 0.0, %v1095
      %v1097 = vpop.f32.mrb[0].mxu0
      %1098 = vdwg.mxu0
      %v1099 = vadd.f32 %v937, %v1069
      %v1100 = vadd.f32 %v938, %v1072
      %v1101 = vadd.f32 %v939, %v1077
      %v1102 = vadd.f32 %v940, %v1080
      %v1103 = vadd.f32 %v941, %v1085
      %v1104 = vadd.f32 %v942, %v1088
      %v1105 = vadd.f32 %v943, %v1093
      %v1106 = vadd.f32 %v944, %v1096
      %1107 = vst [vmem:[#allocation2] sm:$0xff] %v1099
      %1108 = vst [vmem:[#allocation2 + $0x8] sm:$0xff] %v1100
      %1109 = vst [vmem:[#allocation2 + $0x10] sm:$0xff] %v1101
      %1110 = vst [vmem:[#allocation2 + $0x18] sm:$0xff] %v1102
      %1111 = vst [vmem:[#allocation2 + $0x20] sm:$0xff] %v1103
      %1112 = vst [vmem:[#allocation2 + $0x28] sm:$0xff] %v1104
      %1113 = vst [vmem:[#allocation2 + $0x30] sm:$0xff] %v1105
      %1114 = vst [vmem:[#allocation2 + $0x38] sm:$0xff] %v1106
      %v1116 = vshrl.u32 %v921, 16
      %v1118 = vrot.slane %v1116, 4
      %v1119 = vshll.u32 %v921, 16
      %v1121 = vrot.slane %v1119, 5
      %v1122 = vor.u32 %v1118, %v1121
      %v1123 = vrot.slane %v1122, 4
      %v1125 = vshll.u32 %v922, 16
      %v1127 = vrot.slane %v1125, 5
      %v1128 = vsel %vm421, %v1123, %v1127
      %v1130 = vshrl.u32 %v923, 16
      %v1132 = vrot.slane %v1130, 4
      %v1133 = vshll.u32 %v923, 16
      %v1135 = vrot.slane %v1133, 5
      %v1136 = vor.u32 %v1132, %v1135
      %v1137 = vrot.slane %v1136, 4
      %v1139 = vshll.u32 %v924, 16
      %v1141 = vrot.slane %v1139, 5
      %v1142 = vsel %vm421, %v1137, %v1141
      %v1144 = vshrl.u32 %v925, 16
      %v1146 = vrot.slane %v1144, 4
      %v1147 = vshll.u32 %v925, 16
      %v1149 = vrot.slane %v1147, 5
      %v1150 = vor.u32 %v1146, %v1149
      %v1151 = vrot.slane %v1150, 4
      %v1153 = vshll.u32 %v926, 16
      %v1155 = vrot.slane %v1153, 5
      %v1156 = vsel %vm421, %v1151, %v1155
      %v1158 = vshrl.u32 %v927, 16
      %v1160 = vrot.slane %v1158, 4
      %v1161 = vshll.u32 %v927, 16
      %v1163 = vrot.slane %v1161, 5
      %v1164 = vor.u32 %v1160, %v1163
      %v1165 = vrot.slane %v1164, 4
      %v1167 = vshll.u32 %v928, 16
      %v1169 = vrot.slane %v1167, 5
      %v1170 = vsel %vm421, %v1165, %v1169
      %v1172 = vshrl.u32 %v929, 16
      %v1174 = vrot.slane %v1172, 4
      %v1175 = vshll.u32 %v929, 16
      %v1177 = vrot.slane %v1175, 5
      %v1178 = vor.u32 %v1174, %v1177
      %v1179 = vrot.slane %v1178, 4
      %v1181 = vshll.u32 %v930, 16
      %v1183 = vrot.slane %v1181, 5
      %v1184 = vsel %vm421, %v1179, %v1183
      %v1186 = vshrl.u32 %v931, 16
      %v1188 = vrot.slane %v1186, 4
      %v1189 = vshll.u32 %v931, 16
      %v1191 = vrot.slane %v1189, 5
      %v1192 = vor.u32 %v1188, %v1191
      %v1193 = vrot.slane %v1192, 4
      %v1195 = vshll.u32 %v932, 16
      %v1197 = vrot.slane %v1195, 5
      %v1198 = vsel %vm421, %v1193, %v1197
      %v1200 = vshrl.u32 %v933, 16
      %v1202 = vrot.slane %v1200, 4
      %v1203 = vshll.u32 %v933, 16
      %v1205 = vrot.slane %v1203, 5
      %v1206 = vor.u32 %v1202, %v1205
      %v1207 = vrot.slane %v1206, 4
      %v1209 = vshll.u32 %v934, 16
      %v1211 = vrot.slane %v1209, 5
      %v1212 = vsel %vm421, %v1207, %v1211
      %v1214 = vshrl.u32 %v935, 16
      %v1216 = vrot.slane %v1214, 4
      %v1217 = vshll.u32 %v935, 16
      %v1219 = vrot.slane %v1217, 5
      %v1220 = vor.u32 %v1216, %v1219
      %v1221 = vrot.slane %v1220, 4
      %v1223 = vshll.u32 %v936, 16
      %v1225 = vrot.slane %v1223, 5
      %v1226 = vsel %vm421, %v1221, %v1225
      %v1227 = vld [vmem:[#allocation2] sm:$0xff]
      %v1228 = vld [vmem:[#allocation2 + $0x8] sm:$0xff]
      %v1229 = vld [vmem:[#allocation2 + $0x10] sm:$0xff]
      %v1230 = vld [vmem:[#allocation2 + $0x18] sm:$0xff]
      %v1231 = vld [vmem:[#allocation2 + $0x20] sm:$0xff]
      %v1232 = vld [vmem:[#allocation2 + $0x28] sm:$0xff]
      %v1233 = vld [vmem:[#allocation2 + $0x30] sm:$0xff]
      %v1234 = vld [vmem:[#allocation2 + $0x38] sm:$0xff]
      %s1235 = scalar_lea.vmem %s1, 256
      %v1236 = vld [vmem:[%s1235] sm:$0xf]
      %v1237 = vld [vmem:[%s1235 + $0x4] sm:$0xf]
      %v1238 = vld [vmem:[%s1235 + $0x8] sm:$0xf]
      %v1239 = vld [vmem:[%s1235 + $0xc] sm:$0xf]
      %v1240 = vld [vmem:[%s1235 + $0x10] sm:$0xf]
      %v1241 = vld [vmem:[%s1235 + $0x14] sm:$0xf]
      %v1242 = vld [vmem:[%s1235 + $0x18] sm:$0xf]
      %v1243 = vld [vmem:[%s1235 + $0x1c] sm:$0xf]
      %v1244 = vld [vmem:[%s1235 + $0x20] sm:$0xf]
      %v1245 = vld [vmem:[%s1235 + $0x24] sm:$0xf]
      %v1246 = vld [vmem:[%s1235 + $0x28] sm:$0xf]
      %v1247 = vld [vmem:[%s1235 + $0x2c] sm:$0xf]
      %v1248 = vld [vmem:[%s1235 + $0x30] sm:$0xf]
      %v1249 = vld [vmem:[%s1235 + $0x34] sm:$0xf]
      %v1250 = vld [vmem:[%s1235 + $0x38] sm:$0xf]
      %v1251 = vld [vmem:[%s1235 + $0x3c] sm:$0xf]
      %v1252 = vunpack.c.l.b16 %v1128
      %v1253 = vunpack.c.l.b16 %v1142
      %v1254 = vunpack.c.l.b16 %v1156
      %v1255 = vunpack.c.l.b16 %v1170
      %v1256 = vunpack.c.l.b16 %v1184
      %v1257 = vunpack.c.l.b16 %v1198
      %v1258 = vunpack.c.l.b16 %v1212
      %v1259 = vunpack.c.l.b16 %v1226
      %v1260 = vpack.c.b16 %v1253, %v1252
      %v1261 = vpack.c.b16 %v1255, %v1254
      %v1262 = vpack.c.b16 %v1257, %v1256
      %v1263 = vpack.c.b16 %v1259, %v1258
      %v1284 = vunpack.c.l.b16 %v1236
      %v1285 = vunpack.c.l.b16 %v1237
      %v1286 = vunpack.c.l.b16 %v1238
      %v1287 = vunpack.c.l.b16 %v1239
      %v1288 = vunpack.c.l.b16 %v1240
      %v1289 = vunpack.c.l.b16 %v1241
      %v1290 = vunpack.c.l.b16 %v1242
      %v1291 = vunpack.c.l.b16 %v1243
      %v1292 = vunpack.c.l.b16 %v1244
      %v1293 = vunpack.c.l.b16 %v1245
      %v1294 = vunpack.c.l.b16 %v1246
      %v1295 = vunpack.c.l.b16 %v1247
      %v1296 = vunpack.c.l.b16 %v1248
      %v1297 = vunpack.c.l.b16 %v1249
      %v1298 = vunpack.c.l.b16 %v1250
      %v1299 = vunpack.c.l.b16 %v1251
      %v1300 = vpack.c.b16 %v1285, %v1284
      %v1301 = vpack.c.b16 %v1287, %v1286
      %v1302 = vpack.c.b16 %v1289, %v1288
      %v1303 = vpack.c.b16 %v1291, %v1290
      %v1304 = vpack.c.b16 %v1293, %v1292
      %v1305 = vpack.c.b16 %v1295, %v1294
      %v1306 = vpack.c.b16 %v1297, %v1296
      %v1307 = vpack.c.b16 %v1299, %v1298
      %1316 = vmatprep.subr.bf16.mxu0 0
      %1317 = vmatpush1.bf16.msra.mxu0 %v1300
      %1318 = vmatprep.subr.bf16.mxu0 0
      %1319 = vmatpush1.bf16.msra.mxu0 %v1301
      %1320 = vmatprep.subr.bf16.mxu0 0
      %1321 = vmatpush1.bf16.msra.mxu0 %v1302
      %1322 = vmatprep.subr.bf16.mxu0 0
      %1323 = vmatpush1.bf16.msra.mxu0 %v1303
      %1324 = vmatprep.subr.bf16.mxu0 0
      %1325 = vmatpush1.bf16.msra.mxu0 %v1304
      %1326 = vmatprep.subr.bf16.mxu0 0
      %1327 = vmatpush1.bf16.msra.mxu0 %v1305
      %1328 = vmatprep.subr.bf16.mxu0 0
      %1329 = vmatpush1.bf16.msra.mxu0 %v1306
      %1330 = vmatprep.subr.bf16.mxu0 0
      %1331 = vmatpush1.bf16.msra.mxu0 %v1307
      %1332 = vmatprep.subr.bf16.mxu0 0
      %1333 = vmatpush1.bf16.msra.mxu0 0
      %1334 = vmatprep.subr.bf16.mxu0 0
      %1335 = vmatpush1.bf16.msra.mxu0 0
      %1336 = vmatprep.subr.bf16.mxu0 0
      %1337 = vmatpush1.bf16.msra.mxu0 0
      %1338 = vmatprep.subr.bf16.mxu0 0
      %1339 = vmatpush1.bf16.msra.mxu0 0
      %1340 = vmatprep.subr.bf16.mxu0 0
      %1341 = vmatpush1.bf16.msra.mxu0 0
      %1342 = vmatprep.subr.bf16.mxu0 0
      %1343 = vmatpush1.bf16.msra.mxu0 0
      %1344 = vmatprep.subr.bf16.mxu0 0
      %1345 = vmatpush1.bf16.msra.mxu0 0
      %1346 = vmatprep.subr.bf16.mxu0 0
      %1347 = vmatpush1.bf16.msra.mxu0 0
      %1348 = vmatprep.mubr.bf16.mxu0 0
      %1349 = vmatmul.mubr.bf16.gmra.mrb[0].mxu0 %v1260
      %v1350 = vpop.f32.mrb[0].mxu0
      %v1351 = vadd.f32 0.0, %v1350
      %v1352 = vpop.f32.mrb[0].mxu0
      %v1353 = vpop.f32.mrb[0].mxu0
      %v1354 = vadd.f32 0.0, %v1353
      %v1355 = vpop.f32.mrb[0].mxu0
      %1356 = vmatprep.mubr.bf16.mxu0 0
      %1357 = vmatmul.mubr.bf16.gmra.mrb[0].mxu0 %v1261
      %v1358 = vpop.f32.mrb[0].mxu0
      %v1359 = vadd.f32 0.0, %v1358
      %v1360 = vpop.f32.mrb[0].mxu0
      %v1361 = vpop.f32.mrb[0].mxu0
      %v1362 = vadd.f32 0.0, %v1361
      %v1363 = vpop.f32.mrb[0].mxu0
      %1364 = vmatprep.mubr.bf16.mxu0 0
      %1365 = vmatmul.mubr.bf16.gmra.mrb[0].mxu0 %v1262
      %v1366 = vpop.f32.mrb[0].mxu0
      %v1367 = vadd.f32 0.0, %v1366
      %v1368 = vpop.f32.mrb[0].mxu0
      %v1369 = vpop.f32.mrb[0].mxu0
      %v1370 = vadd.f32 0.0, %v1369
      %v1371 = vpop.f32.mrb[0].mxu0
      %1372 = vmatprep.mubr.bf16.mxu0 0
      %1373 = vmatmul.mubr.bf16.gmra.mrb[0].mxu0 %v1263
      %v1374 = vpop.f32.mrb[0].mxu0
      %v1375 = vadd.f32 0.0, %v1374
      %v1376 = vpop.f32.mrb[0].mxu0
      %v1377 = vpop.f32.mrb[0].mxu0
      %v1378 = vadd.f32 0.0, %v1377
      %v1379 = vpop.f32.mrb[0].mxu0
      %1380 = vdwg.mxu0
      %v1381 = vadd.f32 %v1227, %v1351
      %v1382 = vadd.f32 %v1228, %v1354
      %v1383 = vadd.f32 %v1229, %v1359
      %v1384 = vadd.f32 %v1230, %v1362
      %v1385 = vadd.f32 %v1231, %v1367
      %v1386 = vadd.f32 %v1232, %v1370
      %v1387 = vadd.f32 %v1233, %v1375
      %v1388 = vadd.f32 %v1234, %v1378
      %1389 = vst [vmem:[#allocation2] sm:$0xff] %v1381
      %1390 = vst [vmem:[#allocation2 + $0x8] sm:$0xff] %v1382
      %1391 = vst [vmem:[#allocation2 + $0x10] sm:$0xff] %v1383
      %1392 = vst [vmem:[#allocation2 + $0x18] sm:$0xff] %v1384
      %1393 = vst [vmem:[#allocation2 + $0x20] sm:$0xff] %v1385
      %1394 = vst [vmem:[#allocation2 + $0x28] sm:$0xff] %v1386
      %1395 = vst [vmem:[#allocation2 + $0x30] sm:$0xff] %v1387
      %1396 = vst [vmem:[#allocation2 + $0x38] sm:$0xff] %v1388
      %v1405 = vrot.slane %v921, 5
      %v1406 = vrot.slane %v1405, 4
      %v1407 = vrot.slane %v922, 5
      %v1408 = vsel %vm714, %v1406, %v1407
      %v1409 = vrot.slane %v923, 5
      %v1410 = vrot.slane %v1409, 4
      %v1411 = vrot.slane %v924, 5
      %v1412 = vsel %vm714, %v1410, %v1411
      %v1413 = vrot.slane %v925, 5
      %v1414 = vrot.slane %v1413, 4
      %v1415 = vrot.slane %v926, 5
      %v1416 = vsel %vm714, %v1414, %v1415
      %v1417 = vrot.slane %v927, 5
      %v1418 = vrot.slane %v1417, 4
      %v1419 = vrot.slane %v928, 5
      %v1420 = vsel %vm714, %v1418, %v1419
      %v1421 = vrot.slane %v929, 5
      %v1422 = vrot.slane %v1421, 4
      %v1423 = vrot.slane %v930, 5
      %v1424 = vsel %vm714, %v1422, %v1423
      %v1425 = vrot.slane %v931, 5
      %v1426 = vrot.slane %v1425, 4
      %v1427 = vrot.slane %v932, 5
      %v1428 = vsel %vm714, %v1426, %v1427
      %v1429 = vrot.slane %v933, 5
      %v1430 = vrot.slane %v1429, 4
      %v1431 = vrot.slane %v934, 5
      %v1432 = vsel %vm714, %v1430, %v1431
      %v1433 = vrot.slane %v935, 5
      %v1434 = vrot.slane %v1433, 4
      %v1435 = vrot.slane %v936, 5
      %v1436 = vsel %vm714, %v1434, %v1435
      %v1437 = vld [vmem:[#allocation2] sm:$0xff]
      %v1438 = vld [vmem:[#allocation2 + $0x8] sm:$0xff]
      %v1439 = vld [vmem:[#allocation2 + $0x10] sm:$0xff]
      %v1440 = vld [vmem:[#allocation2 + $0x18] sm:$0xff]
      %v1441 = vld [vmem:[#allocation2 + $0x20] sm:$0xff]
      %v1442 = vld [vmem:[#allocation2 + $0x28] sm:$0xff]
      %v1443 = vld [vmem:[#allocation2 + $0x30] sm:$0xff]
      %v1444 = vld [vmem:[#allocation2 + $0x38] sm:$0xff]
      %s1445 = scalar_lea.vmem %s1, 320
      %v1446 = vld [vmem:[%s1445] sm:$0xf]
      %v1447 = vld [vmem:[%s1445 + $0x4] sm:$0xf]
      %v1448 = vld [vmem:[%s1445 + $0x8] sm:$0xf]
      %v1449 = vld [vmem:[%s1445 + $0xc] sm:$0xf]
      %v1450 = vld [vmem:[%s1445 + $0x10] sm:$0xf]
      %v1451 = vld [vmem:[%s1445 + $0x14] sm:$0xf]
      %v1452 = vld [vmem:[%s1445 + $0x18] sm:$0xf]
      %v1453 = vld [vmem:[%s1445 + $0x1c] sm:$0xf]
      %v1454 = vld [vmem:[%s1445 + $0x20] sm:$0xf]
      %v1455 = vld [vmem:[%s1445 + $0x24] sm:$0xf]
      %v1456 = vld [vmem:[%s1445 + $0x28] sm:$0xf]
      %v1457 = vld [vmem:[%s1445 + $0x2c] sm:$0xf]
      %v1458 = vld [vmem:[%s1445 + $0x30] sm:$0xf]
      %v1459 = vld [vmem:[%s1445 + $0x34] sm:$0xf]
      %v1460 = vld [vmem:[%s1445 + $0x38] sm:$0xf]
      %v1461 = vld [vmem:[%s1445 + $0x3c] sm:$0xf]
      %v1462 = vunpack.c.l.b16 %v1408
      %v1463 = vunpack.c.l.b16 %v1412
      %v1464 = vunpack.c.l.b16 %v1416
      %v1465 = vunpack.c.l.b16 %v1420
      %v1466 = vunpack.c.l.b16 %v1424
      %v1467 = vunpack.c.l.b16 %v1428
      %v1468 = vunpack.c.l.b16 %v1432
      %v1469 = vunpack.c.l.b16 %v1436
      %v1470 = vpack.c.b16 %v1463, %v1462
      %v1471 = vpack.c.b16 %v1465, %v1464
      %v1472 = vpack.c.b16 %v1467, %v1466
      %v1473 = vpack.c.b16 %v1469, %v1468
      %v1494 = vunpack.c.l.b16 %v1446
      %v1495 = vunpack.c.l.b16 %v1447
      %v1496 = vunpack.c.l.b16 %v1448
      %v1497 = vunpack.c.l.b16 %v1449
      %v1498 = vunpack.c.l.b16 %v1450
      %v1499 = vunpack.c.l.b16 %v1451
      %v1500 = vunpack.c.l.b16 %v1452
      %v1501 = vunpack.c.l.b16 %v1453
      %v1502 = vunpack.c.l.b16 %v1454
      %v1503 = vunpack.c.l.b16 %v1455
      %v1504 = vunpack.c.l.b16 %v1456
      %v1505 = vunpack.c.l.b16 %v1457
      %v1506 = vunpack.c.l.b16 %v1458
      %v1507 = vunpack.c.l.b16 %v1459
      %v1508 = vunpack.c.l.b16 %v1460
      %v1509 = vunpack.c.l.b16 %v1461
      %v1510 = vpack.c.b16 %v1495, %v1494
      %v1511 = vpack.c.b16 %v1497, %v1496
      %v1512 = vpack.c.b16 %v1499, %v1498
      %v1513 = vpack.c.b16 %v1501, %v1500
      %v1514 = vpack.c.b16 %v1503, %v1502
      %v1515 = vpack.c.b16 %v1505, %v1504
      %v1516 = vpack.c.b16 %v1507, %v1506
      %v1517 = vpack.c.b16 %v1509, %v1508
      %1526 = vmatprep.subr.bf16.mxu0 0
      %1527 = vmatpush1.bf16.msra.mxu0 %v1510
      %1528 = vmatprep.subr.bf16.mxu0 0
      %1529 = vmatpush1.bf16.msra.mxu0 %v1511
      %1530 = vmatprep.subr.bf16.mxu0 0
      %1531 = vmatpush1.bf16.msra.mxu0 %v1512
      %1532 = vmatprep.subr.bf16.mxu0 0
      %1533 = vmatpush1.bf16.msra.mxu0 %v1513
      %1534 = vmatprep.subr.bf16.mxu0 0
      %1535 = vmatpush1.bf16.msra.mxu0 %v1514
      %1536 = vmatprep.subr.bf16.mxu0 0
      %1537 = vmatpush1.bf16.msra.mxu0 %v1515
      %1538 = vmatprep.subr.bf16.mxu0 0
      %1539 = vmatpush1.bf16.msra.mxu0 %v1516
      %1540 = vmatprep.subr.bf16.mxu0 0
      %1541 = vmatpush1.bf16.msra.mxu0 %v1517
      %1542 = vmatprep.subr.bf16.mxu0 0
      %1543 = vmatpush1.bf16.msra.mxu0 0
      %1544 = vmatprep.subr.bf16.mxu0 0
      %1545 = vmatpush1.bf16.msra.mxu0 0
      %1546 = vmatprep.subr.bf16.mxu0 0
      %1547 = vmatpush1.bf16.msra.mxu0 0
      %1548 = vmatprep.subr.bf16.mxu0 0
      %1549 = vmatpush1.bf16.msra.mxu0 0
      %1550 = vmatprep.subr.bf16.mxu0 0
      %1551 = vmatpush1.bf16.msra.mxu0 0
      %1552 = vmatprep.subr.bf16.mxu0 0
      %1553 = vmatpush1.bf16.msra.mxu0 0
      %1554 = vmatprep.subr.bf16.mxu0 0
      %1555 = vmatpush1.bf16.msra.mxu0 0
      %1556 = vmatprep.subr.bf16.mxu0 0
      %1557 = vmatpush1.bf16.msra.mxu0 0
      %1558 = vmatprep.mubr.bf16.mxu0 0
      %1559 = vmatmul.mubr.bf16.gmra.mrb[0].mxu0 %v1470
      %v1560 = vpop.f32.mrb[0].mxu0
      %v1561 = vadd.f32 0.0, %v1560
      %v1562 = vpop.f32.mrb[0].mxu0
      %v1563 = vpop.f32.mrb[0].mxu0
      %v1564 = vadd.f32 0.0, %v1563
      %v1565 = vpop.f32.mrb[0].mxu0
      %1566 = vmatprep.mubr.bf16.mxu0 0
      %1567 = vmatmul.mubr.bf16.gmra.mrb[0].mxu0 %v1471
      %v1568 = vpop.f32.mrb[0].mxu0
      %v1569 = vadd.f32 0.0, %v1568
      %v1570 = vpop.f32.mrb[0].mxu0
      %v1571 = vpop.f32.mrb[0].mxu0
      %v1572 = vadd.f32 0.0, %v1571
      %v1573 = vpop.f32.mrb[0].mxu0
      %1574 = vmatprep.mubr.bf16.mxu0 0
      %1575 = vmatmul.mubr.bf16.gmra.mrb[0].mxu0 %v1472
      %v1576 = vpop.f32.mrb[0].mxu0
      %v1577 = vadd.f32 0.0, %v1576
      %v1578 = vpop.f32.mrb[0].mxu0
      %v1579 = vpop.f32.mrb[0].mxu0
      %v1580 = vadd.f32 0.0, %v1579
      %v1581 = vpop.f32.mrb[0].mxu0
      %1582 = vmatprep.mubr.bf16.mxu0 0
      %1583 = vmatmul.mubr.bf16.gmra.mrb[0].mxu0 %v1473
      %v1584 = vpop.f32.mrb[0].mxu0
      %v1585 = vadd.f32 0.0, %v1584
      %v1586 = vpop.f32.mrb[0].mxu0
      %v1587 = vpop.f32.mrb[0].mxu0
      %v1588 = vadd.f32 0.0, %v1587
      %v1589 = vpop.f32.mrb[0].mxu0
      %1590 = vdwg.mxu0
      %v1591 = vadd.f32 %v1437, %v1561
      %v1592 = vadd.f32 %v1438, %v1564
      %v1593 = vadd.f32 %v1439, %v1569
      %v1594 = vadd.f32 %v1440, %v1572
      %v1595 = vadd.f32 %v1441, %v1577
      %v1596 = vadd.f32 %v1442, %v1580
      %v1597 = vadd.f32 %v1443, %v1585
      %v1598 = vadd.f32 %v1444, %v1588
      %1599 = vst [vmem:[#allocation2] sm:$0xff] %v1591
      %1600 = vst [vmem:[#allocation2 + $0x8] sm:$0xff] %v1592
      %1601 = vst [vmem:[#allocation2 + $0x10] sm:$0xff] %v1593
      %1602 = vst [vmem:[#allocation2 + $0x18] sm:$0xff] %v1594
      %1603 = vst [vmem:[#allocation2 + $0x20] sm:$0xff] %v1595
      %1604 = vst [vmem:[#allocation2 + $0x28] sm:$0xff] %v1596
      %1605 = vst [vmem:[#allocation2 + $0x30] sm:$0xff] %v1597
      %1606 = vst [vmem:[#allocation2 + $0x38] sm:$0xff] %v1598
      %s1607 = sadd.s32 %s214, 2
      %s1608 = smul.u32 %s1607, 2
      %s1609 = smul.addr %s1608, 4
      %s1610 = scalar_lea.vmem %s195, %s1609
      %v1611 = vld [vmem:[%s1610] sm:$0xf]
      %v1612 = vld [vmem:[%s1610 + $0x4] sm:$0x1]
      %v1613 = vld [vmem:[%s1610 + $0x8] sm:$0xf]
      %v1614 = vld [vmem:[%s1610 + $0xc] sm:$0x1]
      %v1615 = vld [vmem:[%s1610 + $0x10] sm:$0xf]
      %v1616 = vld [vmem:[%s1610 + $0x14] sm:$0x1]
      %v1617 = vld [vmem:[%s1610 + $0x18] sm:$0xf]
      %v1618 = vld [vmem:[%s1610 + $0x1c] sm:$0x1]
      %v1619 = vld [vmem:[%s1610 + $0x20] sm:$0xf]
      %v1620 = vld [vmem:[%s1610 + $0x24] sm:$0x1]
      %v1621 = vld [vmem:[%s1610 + $0x28] sm:$0xf]
      %v1622 = vld [vmem:[%s1610 + $0x2c] sm:$0x1]
      %v1623 = vld [vmem:[%s1610 + $0x30] sm:$0xf]
      %v1624 = vld [vmem:[%s1610 + $0x34] sm:$0x1]
      %v1625 = vld [vmem:[%s1610 + $0x38] sm:$0xf]
      %v1626 = vld [vmem:[%s1610 + $0x3c] sm:$0x1]
      %v1627 = vld [vmem:[#allocation2] sm:$0xff]
      %v1628 = vld [vmem:[#allocation2 + $0x8] sm:$0xff]
      %v1629 = vld [vmem:[#allocation2 + $0x10] sm:$0xff]
      %v1630 = vld [vmem:[#allocation2 + $0x18] sm:$0xff]
      %v1631 = vld [vmem:[#allocation2 + $0x20] sm:$0xff]
      %v1632 = vld [vmem:[#allocation2 + $0x28] sm:$0xff]
      %v1633 = vld [vmem:[#allocation2 + $0x30] sm:$0xff]
      %v1634 = vld [vmem:[#allocation2 + $0x38] sm:$0xff]
      %s1635 = scalar_lea.vmem %s1, 384
      %v1636 = vld [vmem:[%s1635] sm:$0xf]
      %v1637 = vld [vmem:[%s1635 + $0x4] sm:$0xf]
      %v1638 = vld [vmem:[%s1635 + $0x8] sm:$0xf]
      %v1639 = vld [vmem:[%s1635 + $0xc] sm:$0xf]
      %v1640 = vld [vmem:[%s1635 + $0x10] sm:$0xf]
      %v1641 = vld [vmem:[%s1635 + $0x14] sm:$0xf]
      %v1642 = vld [vmem:[%s1635 + $0x18] sm:$0xf]
      %v1643 = vld [vmem:[%s1635 + $0x1c] sm:$0xf]
      %v1644 = vld [vmem:[%s1635 + $0x20] sm:$0xf]
      %v1645 = vld [vmem:[%s1635 + $0x24] sm:$0xf]
      %v1646 = vld [vmem:[%s1635 + $0x28] sm:$0xf]
      %v1647 = vld [vmem:[%s1635 + $0x2c] sm:$0xf]
      %v1648 = vld [vmem:[%s1635 + $0x30] sm:$0xf]
      %v1649 = vld [vmem:[%s1635 + $0x34] sm:$0xf]
      %v1650 = vld [vmem:[%s1635 + $0x38] sm:$0xf]
      %v1651 = vld [vmem:[%s1635 + $0x3c] sm:$0xf]
      %v1660 = vunpack.c.l.b16 %v1611
      %v1661 = vunpack.c.l.b16 %v1613
      %v1662 = vunpack.c.l.b16 %v1615
      %v1663 = vunpack.c.l.b16 %v1617
      %v1664 = vunpack.c.l.b16 %v1619
      %v1665 = vunpack.c.l.b16 %v1621
      %v1666 = vunpack.c.l.b16 %v1623
      %v1667 = vunpack.c.l.b16 %v1625
      %v1668 = vpack.c.b16 %v1661, %v1660
      %v1669 = vpack.c.b16 %v1663, %v1662
      %v1670 = vpack.c.b16 %v1665, %v1664
      %v1671 = vpack.c.b16 %v1667, %v1666
      %v1692 = vunpack.c.l.b16 %v1636
      %v1693 = vunpack.c.l.b16 %v1637
      %v1694 = vunpack.c.l.b16 %v1638
      %v1695 = vunpack.c.l.b16 %v1639
      %v1696 = vunpack.c.l.b16 %v1640
      %v1697 = vunpack.c.l.b16 %v1641
      %v1698 = vunpack.c.l.b16 %v1642
      %v1699 = vunpack.c.l.b16 %v1643
      %v1700 = vunpack.c.l.b16 %v1644
      %v1701 = vunpack.c.l.b16 %v1645
      %v1702 = vunpack.c.l.b16 %v1646
      %v1703 = vunpack.c.l.b16 %v1647
      %v1704 = vunpack.c.l.b16 %v1648
      %v1705 = vunpack.c.l.b16 %v1649
      %v1706 = vunpack.c.l.b16 %v1650
      %v1707 = vunpack.c.l.b16 %v1651
      %v1708 = vpack.c.b16 %v1693, %v1692
      %v1709 = vpack.c.b16 %v1695, %v1694
      %v1710 = vpack.c.b16 %v1697, %v1696
      %v1711 = vpack.c.b16 %v1699, %v1698
      %v1712 = vpack.c.b16 %v1701, %v1700
      %v1713 = vpack.c.b16 %v1703, %v1702
      %v1714 = vpack.c.b16 %v1705, %v1704
      %v1715 = vpack.c.b16 %v1707, %v1706
      %1724 = vmatprep.subr.bf16.mxu0 0
      %1725 = vmatpush1.bf16.msra.mxu0 %v1708
      %1726 = vmatprep.subr.bf16.mxu0 0
      %1727 = vmatpush1.bf16.msra.mxu0 %v1709
      %1728 = vmatprep.subr.bf16.mxu0 0
      %1729 = vmatpush1.bf16.msra.mxu0 %v1710
      %1730 = vmatprep.subr.bf16.mxu0 0
      %1731 = vmatpush1.bf16.msra.mxu0 %v1711
      %1732 = vmatprep.subr.bf16.mxu0 0
      %1733 = vmatpush1.bf16.msra.mxu0 %v1712
      %1734 = vmatprep.subr.bf16.mxu0 0
      %1735 = vmatpush1.bf16.msra.mxu0 %v1713
      %1736 = vmatprep.subr.bf16.mxu0 0
      %1737 = vmatpush1.bf16.msra.mxu0 %v1714
      %1738 = vmatprep.subr.bf16.mxu0 0
      %1739 = vmatpush1.bf16.msra.mxu0 %v1715
      %1740 = vmatprep.subr.bf16.mxu0 0
      %1741 = vmatpush1.bf16.msra.mxu0 0
      %1742 = vmatprep.subr.bf16.mxu0 0
      %1743 = vmatpush1.bf16.msra.mxu0 0
      %1744 = vmatprep.subr.bf16.mxu0 0
      %1745 = vmatpush1.bf16.msra.mxu0 0
      %1746 = vmatprep.subr.bf16.mxu0 0
      %1747 = vmatpush1.bf16.msra.mxu0 0
      %1748 = vmatprep.subr.bf16.mxu0 0
      %1749 = vmatpush1.bf16.msra.mxu0 0
      %1750 = vmatprep.subr.bf16.mxu0 0
      %1751 = vmatpush1.bf16.msra.mxu0 0
      %1752 = vmatprep.subr.bf16.mxu0 0
      %1753 = vmatpush1.bf16.msra.mxu0 0
      %1754 = vmatprep.subr.bf16.mxu0 0
      %1755 = vmatpush1.bf16.msra.mxu0 0
      %1756 = vmatprep.mubr.bf16.mxu0 0
      %1757 = vmatmul.mubr.bf16.gmra.mrb[0].mxu0 %v1668
      %v1758 = vpop.f32.mrb[0].mxu0
      %v1759 = vadd.f32 0.0, %v1758
      %v1760 = vpop.f32.mrb[0].mxu0
      %v1761 = vpop.f32.mrb[0].mxu0
      %v1762 = vadd.f32 0.0, %v1761
      %v1763 = vpop.f32.mrb[0].mxu0
      %1764 = vmatprep.mubr.bf16.mxu0 0
      %1765 = vmatmul.mubr.bf16.gmra.mrb[0].mxu0 %v1669
      %v1766 = vpop.f32.mrb[0].mxu0
      %v1767 = vadd.f32 0.0, %v1766
      %v1768 = vpop.f32.mrb[0].mxu0
      %v1769 = vpop.f32.mrb[0].mxu0
      %v1770 = vadd.f32 0.0, %v1769
      %v1771 = vpop.f32.mrb[0].mxu0
      %1772 = vmatprep.mubr.bf16.mxu0 0
      %1773 = vmatmul.mubr.bf16.gmra.mrb[0].mxu0 %v1670
      %v1774 = vpop.f32.mrb[0].mxu0
      %v1775 = vadd.f32 0.0, %v1774
      %v1776 = vpop.f32.mrb[0].mxu0
      %v1777 = vpop.f32.mrb[0].mxu0
      %v1778 = vadd.f32 0.0, %v1777
      %v1779 = vpop.f32.mrb[0].mxu0
      %1780 = vmatprep.mubr.bf16.mxu0 0
      %1781 = vmatmul.mubr.bf16.gmra.mrb[0].mxu0 %v1671
      %v1782 = vpop.f32.mrb[0].mxu0
      %v1783 = vadd.f32 0.0, %v1782
      %v1784 = vpop.f32.mrb[0].mxu0
      %v1785 = vpop.f32.mrb[0].mxu0
      %v1786 = vadd.f32 0.0, %v1785
      %v1787 = vpop.f32.mrb[0].mxu0
      %1788 = vdwg.mxu0
      %v1789 = vadd.f32 %v1627, %v1759
      %v1790 = vadd.f32 %v1628, %v1762
      %v1791 = vadd.f32 %v1629, %v1767
      %v1792 = vadd.f32 %v1630, %v1770
      %v1793 = vadd.f32 %v1631, %v1775
      %v1794 = vadd.f32 %v1632, %v1778
      %v1795 = vadd.f32 %v1633, %v1783
      %v1796 = vadd.f32 %v1634, %v1786
      %1797 = vst [vmem:[#allocation2] sm:$0xff] %v1789
      %1798 = vst [vmem:[#allocation2 + $0x8] sm:$0xff] %v1790
      %1799 = vst [vmem:[#allocation2 + $0x10] sm:$0xff] %v1791
      %1800 = vst [vmem:[#allocation2 + $0x18] sm:$0xff] %v1792
      %1801 = vst [vmem:[#allocation2 + $0x20] sm:$0xff] %v1793
      %1802 = vst [vmem:[#allocation2 + $0x28] sm:$0xff] %v1794
      %1803 = vst [vmem:[#allocation2 + $0x30] sm:$0xff] %v1795
      %1804 = vst [vmem:[#allocation2 + $0x38] sm:$0xff] %v1796
      %v1806 = vshrl.u32 %v1611, 16
      %v1808 = vrot.slane %v1806, 4
      %v1809 = vshll.u32 %v1611, 16
      %v1811 = vrot.slane %v1809, 5
      %v1812 = vor.u32 %v1808, %v1811
      %v1813 = vrot.slane %v1812, 4
      %v1815 = vshll.u32 %v1612, 16
      %v1817 = vrot.slane %v1815, 5
      %v1818 = vsel %vm421, %v1813, %v1817
      %v1820 = vshrl.u32 %v1613, 16
      %v1822 = vrot.slane %v1820, 4
      %v1823 = vshll.u32 %v1613, 16
      %v1825 = vrot.slane %v1823, 5
      %v1826 = vor.u32 %v1822, %v1825
      %v1827 = vrot.slane %v1826, 4
      %v1829 = vshll.u32 %v1614, 16
      %v1831 = vrot.slane %v1829, 5
      %v1832 = vsel %vm421, %v1827, %v1831
      %v1834 = vshrl.u32 %v1615, 16
      %v1836 = vrot.slane %v1834, 4
      %v1837 = vshll.u32 %v1615, 16
      %v1839 = vrot.slane %v1837, 5
      %v1840 = vor.u32 %v1836, %v1839
      %v1841 = vrot.slane %v1840, 4
      %v1843 = vshll.u32 %v1616, 16
      %v1845 = vrot.slane %v1843, 5
      %v1846 = vsel %vm421, %v1841, %v1845
      %v1848 = vshrl.u32 %v1617, 16
      %v1850 = vrot.slane %v1848, 4
      %v1851 = vshll.u32 %v1617, 16
      %v1853 = vrot.slane %v1851, 5
      %v1854 = vor.u32 %v1850, %v1853
      %v1855 = vrot.slane %v1854, 4
      %v1857 = vshll.u32 %v1618, 16
      %v1859 = vrot.slane %v1857, 5
      %v1860 = vsel %vm421, %v1855, %v1859
      %v1862 = vshrl.u32 %v1619, 16
      %v1864 = vrot.slane %v1862, 4
      %v1865 = vshll.u32 %v1619, 16
      %v1867 = vrot.slane %v1865, 5
      %v1868 = vor.u32 %v1864, %v1867
      %v1869 = vrot.slane %v1868, 4
      %v1871 = vshll.u32 %v1620, 16
      %v1873 = vrot.slane %v1871, 5
      %v1874 = vsel %vm421, %v1869, %v1873
      %v1876 = vshrl.u32 %v1621, 16
      %v1878 = vrot.slane %v1876, 4
      %v1879 = vshll.u32 %v1621, 16
      %v1881 = vrot.slane %v1879, 5
      %v1882 = vor.u32 %v1878, %v1881
      %v1883 = vrot.slane %v1882, 4
      %v1885 = vshll.u32 %v1622, 16
      %v1887 = vrot.slane %v1885, 5
      %v1888 = vsel %vm421, %v1883, %v1887
      %v1890 = vshrl.u32 %v1623, 16
      %v1892 = vrot.slane %v1890, 4
      %v1893 = vshll.u32 %v1623, 16
      %v1895 = vrot.slane %v1893, 5
      %v1896 = vor.u32 %v1892, %v1895
      %v1897 = vrot.slane %v1896, 4
      %v1899 = vshll.u32 %v1624, 16
      %v1901 = vrot.slane %v1899, 5
      %v1902 = vsel %vm421, %v1897, %v1901
      %v1904 = vshrl.u32 %v1625, 16
      %v1906 = vrot.slane %v1904, 4
      %v1907 = vshll.u32 %v1625, 16
      %v1909 = vrot.slane %v1907, 5
      %v1910 = vor.u32 %v1906, %v1909
      %v1911 = vrot.slane %v1910, 4
      %v1913 = vshll.u32 %v1626, 16
      %v1915 = vrot.slane %v1913, 5
      %v1916 = vsel %vm421, %v1911, %v1915
      %v1917 = vld [vmem:[#allocation2] sm:$0xff]
      %v1918 = vld [vmem:[#allocation2 + $0x8] sm:$0xff]
      %v1919 = vld [vmem:[#allocation2 + $0x10] sm:$0xff]
      %v1920 = vld [vmem:[#allocation2 + $0x18] sm:$0xff]
      %v1921 = vld [vmem:[#allocation2 + $0x20] sm:$0xff]
      %v1922 = vld [vmem:[#allocation2 + $0x28] sm:$0xff]
      %v1923 = vld [vmem:[#allocation2 + $0x30] sm:$0xff]
      %v1924 = vld [vmem:[#allocation2 + $0x38] sm:$0xff]
      %s1925 = scalar_lea.vmem %s1, 448
      %v1926 = vld [vmem:[%s1925] sm:$0xf]
      %v1927 = vld [vmem:[%s1925 + $0x4] sm:$0xf]
      %v1928 = vld [vmem:[%s1925 + $0x8] sm:$0xf]
      %v1929 = vld [vmem:[%s1925 + $0xc] sm:$0xf]
      %v1930 = vld [vmem:[%s1925 + $0x10] sm:$0xf]
      %v1931 = vld [vmem:[%s1925 + $0x14] sm:$0xf]
      %v1932 = vld [vmem:[%s1925 + $0x18] sm:$0xf]
      %v1933 = vld [vmem:[%s1925 + $0x1c] sm:$0xf]
      %v1934 = vld [vmem:[%s1925 + $0x20] sm:$0xf]
      %v1935 = vld [vmem:[%s1925 + $0x24] sm:$0xf]
      %v1936 = vld [vmem:[%s1925 + $0x28] sm:$0xf]
      %v1937 = vld [vmem:[%s1925 + $0x2c] sm:$0xf]
      %v1938 = vld [vmem:[%s1925 + $0x30] sm:$0xf]
      %v1939 = vld [vmem:[%s1925 + $0x34] sm:$0xf]
      %v1940 = vld [vmem:[%s1925 + $0x38] sm:$0xf]
      %v1941 = vld [vmem:[%s1925 + $0x3c] sm:$0xf]
      %v1942 = vunpack.c.l.b16 %v1818
      %v1943 = vunpack.c.l.b16 %v1832
      %v1944 = vunpack.c.l.b16 %v1846
      %v1945 = vunpack.c.l.b16 %v1860
      %v1946 = vunpack.c.l.b16 %v1874
      %v1947 = vunpack.c.l.b16 %v1888
      %v1948 = vunpack.c.l.b16 %v1902
      %v1949 = vunpack.c.l.b16 %v1916
      %v1950 = vpack.c.b16 %v1943, %v1942
      %v1951 = vpack.c.b16 %v1945, %v1944
      %v1952 = vpack.c.b16 %v1947, %v1946
      %v1953 = vpack.c.b16 %v1949, %v1948
      %v1974 = vunpack.c.l.b16 %v1926
      %v1975 = vunpack.c.l.b16 %v1927
      %v1976 = vunpack.c.l.b16 %v1928
      %v1977 = vunpack.c.l.b16 %v1929
      %v1978 = vunpack.c.l.b16 %v1930
      %v1979 = vunpack.c.l.b16 %v1931
      %v1980 = vunpack.c.l.b16 %v1932
      %v1981 = vunpack.c.l.b16 %v1933
      %v1982 = vunpack.c.l.b16 %v1934
      %v1983 = vunpack.c.l.b16 %v1935
      %v1984 = vunpack.c.l.b16 %v1936
      %v1985 = vunpack.c.l.b16 %v1937
      %v1986 = vunpack.c.l.b16 %v1938
      %v1987 = vunpack.c.l.b16 %v1939
      %v1988 = vunpack.c.l.b16 %v1940
      %v1989 = vunpack.c.l.b16 %v1941
      %v1990 = vpack.c.b16 %v1975, %v1974
      %v1991 = vpack.c.b16 %v1977, %v1976
      %v1992 = vpack.c.b16 %v1979, %v1978
      %v1993 = vpack.c.b16 %v1981, %v1980
      %v1994 = vpack.c.b16 %v1983, %v1982
      %v1995 = vpack.c.b16 %v1985, %v1984
      %v1996 = vpack.c.b16 %v1987, %v1986
      %v1997 = vpack.c.b16 %v1989, %v1988
      %2006 = vmatprep.subr.bf16.mxu0 0
      %2007 = vmatpush1.bf16.msra.mxu0 %v1990
      %2008 = vmatprep.subr.bf16.mxu0 0
      %2009 = vmatpush1.bf16.msra.mxu0 %v1991
      %2010 = vmatprep.subr.bf16.mxu0 0
      %2011 = vmatpush1.bf16.msra.mxu0 %v1992
      %2012 = vmatprep.subr.bf16.mxu0 0
      %2013 = vmatpush1.bf16.msra.mxu0 %v1993
      %2014 = vmatprep.subr.bf16.mxu0 0
      %2015 = vmatpush1.bf16.msra.mxu0 %v1994
      %2016 = vmatprep.subr.bf16.mxu0 0
      %2017 = vmatpush1.bf16.msra.mxu0 %v1995
      %2018 = vmatprep.subr.bf16.mxu0 0
      %2019 = vmatpush1.bf16.msra.mxu0 %v1996
      %2020 = vmatprep.subr.bf16.mxu0 0
      %2021 = vmatpush1.bf16.msra.mxu0 %v1997
      %2022 = vmatprep.subr.bf16.mxu0 0
      %2023 = vmatpush1.bf16.msra.mxu0 0
      %2024 = vmatprep.subr.bf16.mxu0 0
      %2025 = vmatpush1.bf16.msra.mxu0 0
      %2026 = vmatprep.subr.bf16.mxu0 0
      %2027 = vmatpush1.bf16.msra.mxu0 0
      %2028 = vmatprep.subr.bf16.mxu0 0
      %2029 = vmatpush1.bf16.msra.mxu0 0
      %2030 = vmatprep.subr.bf16.mxu0 0
      %2031 = vmatpush1.bf16.msra.mxu0 0
      %2032 = vmatprep.subr.bf16.mxu0 0
      %2033 = vmatpush1.bf16.msra.mxu0 0
      %2034 = vmatprep.subr.bf16.mxu0 0
      %2035 = vmatpush1.bf16.msra.mxu0 0
      %2036 = vmatprep.subr.bf16.mxu0 0
      %2037 = vmatpush1.bf16.msra.mxu0 0
      %2038 = vmatprep.mubr.bf16.mxu0 0
      %2039 = vmatmul.mubr.bf16.gmra.mrb[0].mxu0 %v1950
      %v2040 = vpop.f32.mrb[0].mxu0
      %v2041 = vadd.f32 0.0, %v2040
      %v2042 = vpop.f32.mrb[0].mxu0
      %v2043 = vpop.f32.mrb[0].mxu0
      %v2044 = vadd.f32 0.0, %v2043
      %v2045 = vpop.f32.mrb[0].mxu0
      %2046 = vmatprep.mubr.bf16.mxu0 0
      %2047 = vmatmul.mubr.bf16.gmra.mrb[0].mxu0 %v1951
      %v2048 = vpop.f32.mrb[0].mxu0
      %v2049 = vadd.f32 0.0, %v2048
      %v2050 = vpop.f32.mrb[0].mxu0
      %v2051 = vpop.f32.mrb[0].mxu0
      %v2052 = vadd.f32 0.0, %v2051
      %v2053 = vpop.f32.mrb[0].mxu0
      %2054 = vmatprep.mubr.bf16.mxu0 0
      %2055 = vmatmul.mubr.bf16.gmra.mrb[0].mxu0 %v1952
      %v2056 = vpop.f32.mrb[0].mxu0
      %v2057 = vadd.f32 0.0, %v2056
      %v2058 = vpop.f32.mrb[0].mxu0
      %v2059 = vpop.f32.mrb[0].mxu0
      %v2060 = vadd.f32 0.0, %v2059
      %v2061 = vpop.f32.mrb[0].mxu0
      %2062 = vmatprep.mubr.bf16.mxu0 0
      %2063 = vmatmul.mubr.bf16.gmra.mrb[0].mxu0 %v1953
      %v2064 = vpop.f32.mrb[0].mxu0
      %v2065 = vadd.f32 0.0, %v2064
      %v2066 = vpop.f32.mrb[0].mxu0
      %v2067 = vpop.f32.mrb[0].mxu0
      %v2068 = vadd.f32 0.0, %v2067
      %v2069 = vpop.f32.mrb[0].mxu0
      %2070 = vdwg.mxu0
      %v2071 = vadd.f32 %v1917, %v2041
      %v2072 = vadd.f32 %v1918, %v2044
      %v2073 = vadd.f32 %v1919, %v2049
      %v2074 = vadd.f32 %v1920, %v2052
      %v2075 = vadd.f32 %v1921, %v2057
      %v2076 = vadd.f32 %v1922, %v2060
      %v2077 = vadd.f32 %v1923, %v2065
      %v2078 = vadd.f32 %v1924, %v2068
      %2079 = vst [vmem:[#allocation2] sm:$0xff] %v2071
      %2080 = vst [vmem:[#allocation2 + $0x8] sm:$0xff] %v2072
      %2081 = vst [vmem:[#allocation2 + $0x10] sm:$0xff] %v2073
      %2082 = vst [vmem:[#allocation2 + $0x18] sm:$0xff] %v2074
      %2083 = vst [vmem:[#allocation2 + $0x20] sm:$0xff] %v2075
      %2084 = vst [vmem:[#allocation2 + $0x28] sm:$0xff] %v2076
      %2085 = vst [vmem:[#allocation2 + $0x30] sm:$0xff] %v2077
      %2086 = vst [vmem:[#allocation2 + $0x38] sm:$0xff] %v2078
      %v2095 = vrot.slane %v1611, 5
      %v2096 = vrot.slane %v2095, 4
      %v2097 = vrot.slane %v1612, 5
      %v2098 = vsel %vm714, %v2096, %v2097
      %v2099 = vrot.slane %v1613, 5
      %v2100 = vrot.slane %v2099, 4
      %v2101 = vrot.slane %v1614, 5
      %v2102 = vsel %vm714, %v2100, %v2101
      %v2103 = vrot.slane %v1615, 5
      %v2104 = vrot.slane %v2103, 4
      %v2105 = vrot.slane %v1616, 5
      %v2106 = vsel %vm714, %v2104, %v2105
      %v2107 = vrot.slane %v1617, 5
      %v2108 = vrot.slane %v2107, 4
      %v2109 = vrot.slane %v1618, 5
      %v2110 = vsel %vm714, %v2108, %v2109
      %v2111 = vrot.slane %v1619, 5
      %v2112 = vrot.slane %v2111, 4
      %v2113 = vrot.slane %v1620, 5
      %v2114 = vsel %vm714, %v2112, %v2113
      %v2115 = vrot.slane %v1621, 5
      %v2116 = vrot.slane %v2115, 4
      %v2117 = vrot.slane %v1622, 5
      %v2118 = vsel %vm714, %v2116, %v2117
      %v2119 = vrot.slane %v1623, 5
      %v2120 = vrot.slane %v2119, 4
      %v2121 = vrot.slane %v1624, 5
      %v2122 = vsel %vm714, %v2120, %v2121
      %v2123 = vrot.slane %v1625, 5
      %v2124 = vrot.slane %v2123, 4
      %v2125 = vrot.slane %v1626, 5
      %v2126 = vsel %vm714, %v2124, %v2125
      %v2127 = vld [vmem:[#allocation2] sm:$0xff]
      %v2128 = vld [vmem:[#allocation2 + $0x8] sm:$0xff]
      %v2129 = vld [vmem:[#allocation2 + $0x10] sm:$0xff]
      %v2130 = vld [vmem:[#allocation2 + $0x18] sm:$0xff]
      %v2131 = vld [vmem:[#allocation2 + $0x20] sm:$0xff]
      %v2132 = vld [vmem:[#allocation2 + $0x28] sm:$0xff]
      %v2133 = vld [vmem:[#allocation2 + $0x30] sm:$0xff]
      %v2134 = vld [vmem:[#allocation2 + $0x38] sm:$0xff]
      %s2135 = scalar_lea.vmem %s1, 512
      %v2136 = vld [vmem:[%s2135] sm:$0xf]
      %v2137 = vld [vmem:[%s2135 + $0x4] sm:$0xf]
      %v2138 = vld [vmem:[%s2135 + $0x8] sm:$0xf]
      %v2139 = vld [vmem:[%s2135 + $0xc] sm:$0xf]
      %v2140 = vld [vmem:[%s2135 + $0x10] sm:$0xf]
      %v2141 = vld [vmem:[%s2135 + $0x14] sm:$0xf]
      %v2142 = vld [vmem:[%s2135 + $0x18] sm:$0xf]
      %v2143 = vld [vmem:[%s2135 + $0x1c] sm:$0xf]
      %v2144 = vld [vmem:[%s2135 + $0x20] sm:$0xf]
      %v2145 = vld [vmem:[%s2135 + $0x24] sm:$0xf]
      %v2146 = vld [vmem:[%s2135 + $0x28] sm:$0xf]
      %v2147 = vld [vmem:[%s2135 + $0x2c] sm:$0xf]
      %v2148 = vld [vmem:[%s2135 + $0x30] sm:$0xf]
      %v2149 = vld [vmem:[%s2135 + $0x34] sm:$0xf]
      %v2150 = vld [vmem:[%s2135 + $0x38] sm:$0xf]
      %v2151 = vld [vmem:[%s2135 + $0x3c] sm:$0xf]
      %v2152 = vunpack.c.l.b16 %v2098
      %v2153 = vunpack.c.l.b16 %v2102
      %v2154 = vunpack.c.l.b16 %v2106
      %v2155 = vunpack.c.l.b16 %v2110
      %v2156 = vunpack.c.l.b16 %v2114
      %v2157 = vunpack.c.l.b16 %v2118
      %v2158 = vunpack.c.l.b16 %v2122
      %v2159 = vunpack.c.l.b16 %v2126
      %v2160 = vpack.c.b16 %v2153, %v2152
      %v2161 = vpack.c.b16 %v2155, %v2154
      %v2162 = vpack.c.b16 %v2157, %v2156
      %v2163 = vpack.c.b16 %v2159, %v2158
      %v2184 = vunpack.c.l.b16 %v2136
      %v2185 = vunpack.c.l.b16 %v2137
      %v2186 = vunpack.c.l.b16 %v2138
      %v2187 = vunpack.c.l.b16 %v2139
      %v2188 = vunpack.c.l.b16 %v2140
      %v2189 = vunpack.c.l.b16 %v2141
      %v2190 = vunpack.c.l.b16 %v2142
      %v2191 = vunpack.c.l.b16 %v2143
      %v2192 = vunpack.c.l.b16 %v2144
      %v2193 = vunpack.c.l.b16 %v2145
      %v2194 = vunpack.c.l.b16 %v2146
      %v2195 = vunpack.c.l.b16 %v2147
      %v2196 = vunpack.c.l.b16 %v2148
      %v2197 = vunpack.c.l.b16 %v2149
      %v2198 = vunpack.c.l.b16 %v2150
      %v2199 = vunpack.c.l.b16 %v2151
      %v2200 = vpack.c.b16 %v2185, %v2184
      %v2201 = vpack.c.b16 %v2187, %v2186
      %v2202 = vpack.c.b16 %v2189, %v2188
      %v2203 = vpack.c.b16 %v2191, %v2190
      %v2204 = vpack.c.b16 %v2193, %v2192
      %v2205 = vpack.c.b16 %v2195, %v2194
      %v2206 = vpack.c.b16 %v2197, %v2196
      %v2207 = vpack.c.b16 %v2199, %v2198
      %2216 = vmatprep.subr.bf16.mxu0 0
      %2217 = vmatpush1.bf16.msra.mxu0 %v2200
      %2218 = vmatprep.subr.bf16.mxu0 0
      %2219 = vmatpush1.bf16.msra.mxu0 %v2201
      %2220 = vmatprep.subr.bf16.mxu0 0
      %2221 = vmatpush1.bf16.msra.mxu0 %v2202
      %2222 = vmatprep.subr.bf16.mxu0 0
      %2223 = vmatpush1.bf16.msra.mxu0 %v2203
      %2224 = vmatprep.subr.bf16.mxu0 0
      %2225 = vmatpush1.bf16.msra.mxu0 %v2204
      %2226 = vmatprep.subr.bf16.mxu0 0
      %2227 = vmatpush1.bf16.msra.mxu0 %v2205
      %2228 = vmatprep.subr.bf16.mxu0 0
      %2229 = vmatpush1.bf16.msra.mxu0 %v2206
      %2230 = vmatprep.subr.bf16.mxu0 0
      %2231 = vmatpush1.bf16.msra.mxu0 %v2207
      %2232 = vmatprep.subr.bf16.mxu0 0
      %2233 = vmatpush1.bf16.msra.mxu0 0
      %2234 = vmatprep.subr.bf16.mxu0 0
      %2235 = vmatpush1.bf16.msra.mxu0 0
      %2236 = vmatprep.subr.bf16.mxu0 0
      %2237 = vmatpush1.bf16.msra.mxu0 0
      %2238 = vmatprep.subr.bf16.mxu0 0
      %2239 = vmatpush1.bf16.msra.mxu0 0
      %2240 = vmatprep.subr.bf16.mxu0 0
      %2241 = vmatpush1.bf16.msra.mxu0 0
      %2242 = vmatprep.subr.bf16.mxu0 0
      %2243 = vmatpush1.bf16.msra.mxu0 0
      %2244 = vmatprep.subr.bf16.mxu0 0
      %2245 = vmatpush1.bf16.msra.mxu0 0
      %2246 = vmatprep.subr.bf16.mxu0 0
      %2247 = vmatpush1.bf16.msra.mxu0 0
      %2248 = vmatprep.mubr.bf16.mxu0 0
      %2249 = vmatmul.mubr.bf16.gmra.mrb[0].mxu0 %v2160
      %v2250 = vpop.f32.mrb[0].mxu0
      %v2251 = vadd.f32 0.0, %v2250
      %v2252 = vpop.f32.mrb[0].mxu0
      %v2253 = vpop.f32.mrb[0].mxu0
      %v2254 = vadd.f32 0.0, %v2253
      %v2255 = vpop.f32.mrb[0].mxu0
      %2256 = vmatprep.mubr.bf16.mxu0 0
      %2257 = vmatmul.mubr.bf16.gmra.mrb[0].mxu0 %v2161
      %v2258 = vpop.f32.mrb[0].mxu0
      %v2259 = vadd.f32 0.0, %v2258
      %v2260 = vpop.f32.mrb[0].mxu0
      %v2261 = vpop.f32.mrb[0].mxu0
      %v2262 = vadd.f32 0.0, %v2261
      %v2263 = vpop.f32.mrb[0].mxu0
      %2264 = vmatprep.mubr.bf16.mxu0 0
      %2265 = vmatmul.mubr.bf16.gmra.mrb[0].mxu0 %v2162
      %v2266 = vpop.f32.mrb[0].mxu0
      %v2267 = vadd.f32 0.0, %v2266
      %v2268 = vpop.f32.mrb[0].mxu0
      %v2269 = vpop.f32.mrb[0].mxu0
      %v2270 = vadd.f32 0.0, %v2269
      %v2271 = vpop.f32.mrb[0].mxu0
      %2272 = vmatprep.mubr.bf16.mxu0 0
      %2273 = vmatmul.mubr.bf16.gmra.mrb[0].mxu0 %v2163
      %v2274 = vpop.f32.mrb[0].mxu0
      %v2275 = vadd.f32 0.0, %v2274
      %v2276 = vpop.f32.mrb[0].mxu0
      %v2277 = vpop.f32.mrb[0].mxu0
      %v2278 = vadd.f32 0.0, %v2277
      %v2279 = vpop.f32.mrb[0].mxu0
      %2280 = vdwg.mxu0
      %v2281 = vadd.f32 %v2127, %v2251
      %v2282 = vadd.f32 %v2128, %v2254
      %v2283 = vadd.f32 %v2129, %v2259
      %v2284 = vadd.f32 %v2130, %v2262
      %v2285 = vadd.f32 %v2131, %v2267
      %v2286 = vadd.f32 %v2132, %v2270
      %v2287 = vadd.f32 %v2133, %v2275
      %v2288 = vadd.f32 %v2134, %v2278
      %2289 = vst [vmem:[#allocation2] sm:$0xff] %v2281
      %2290 = vst [vmem:[#allocation2 + $0x8] sm:$0xff] %v2282
      %2291 = vst [vmem:[#allocation2 + $0x10] sm:$0xff] %v2283
      %2292 = vst [vmem:[#allocation2 + $0x18] sm:$0xff] %v2284
      %2293 = vst [vmem:[#allocation2 + $0x20] sm:$0xff] %v2285
      %2294 = vst [vmem:[#allocation2 + $0x28] sm:$0xff] %v2286
      %2295 = vst [vmem:[#allocation2 + $0x30] sm:$0xff] %v2287
      %2296 = vst [vmem:[#allocation2 + $0x38] sm:$0xff] %v2288
      %v2297 = vld [vmem:[#allocation2] sm:$0xff]
      %v2298 = vld [vmem:[#allocation2 + $0x8] sm:$0xff]
      %v2299 = vld [vmem:[#allocation2 + $0x10] sm:$0xff]
      %v2300 = vld [vmem:[#allocation2 + $0x18] sm:$0xff]
      %v2301 = vld [vmem:[#allocation2 + $0x20] sm:$0xff]
      %v2302 = vld [vmem:[#allocation2 + $0x28] sm:$0xff]
      %v2303 = vld [vmem:[#allocation2 + $0x30] sm:$0xff]
      %v2304 = vld [vmem:[#allocation2 + $0x38] sm:$0xff]
      %v2305 = vpack.c.bf16 %v2297, %v2297
      %v2306 = vpack.c.bf16 %v2298, %v2298
      %v2307 = vpack.c.bf16 %v2299, %v2299
      %v2308 = vpack.c.bf16 %v2300, %v2300
      %v2309 = vpack.c.bf16 %v2301, %v2301
      %v2310 = vpack.c.bf16 %v2302, %v2302
      %v2311 = vpack.c.bf16 %v2303, %v2303
      %v2312 = vpack.c.bf16 %v2304, %v2304
      %2313 = vst [vmem:[%s204] sm:$0xf] %v2305
      %2314 = vst [vmem:[%s204 + $0x4] sm:$0xf] %v2306
      %2315 = vst [vmem:[%s204 + $0x8] sm:$0xf] %v2307
      %2316 = vst [vmem:[%s204 + $0xc] sm:$0xf] %v2308
      %2317 = vst [vmem:[%s204 + $0x10] sm:$0xf] %v2309
      %2318 = vst [vmem:[%s204 + $0x14] sm:$0xf] %v2310
      %2319 = vst [vmem:[%s204 + $0x18] sm:$0xf] %v2311
      %2320 = vst [vmem:[%s204 + $0x1c] sm:$0xf] %v2312
      %v2321 = vadd.f32 %v2297, %v2298
      %v2322 = vadd.f32 %v2321, %v2299
      %v2323 = vadd.f32 %v2322, %v2300
      %v2324 = vadd.f32 %v2323, %v2301
      %v2325 = vadd.f32 %v2324, %v2302
      %v2326 = vadd.f32 %v2325, %v2303
      %v2327 = vadd.f32 %v2326, %v2304
      %v2328 = vrot.slane %v2327, 4
      %v2329 = vadd.f32 %v2327, %v2328
      %v2330 = vrot.slane %v2329, 2
      %v2331 = vadd.f32 %v2329, %v2330
      %v2332 = vrot.slane %v2331, 1
      %v2333 = vadd.f32 %v2331, %v2332
      %v2334 = vmul.f32 %v2297, %v2297
      %v2335 = vmul.f32 %v2298, %v2298
      %v2336 = vmul.f32 %v2299, %v2299
      %v2337 = vmul.f32 %v2300, %v2300
      %v2338 = vmul.f32 %v2301, %v2301
      %v2339 = vmul.f32 %v2302, %v2302
      %v2340 = vmul.f32 %v2303, %v2303
      %v2341 = vmul.f32 %v2304, %v2304
      %v2342 = vadd.f32 %v2334, %v2335
      %v2343 = vadd.f32 %v2342, %v2336
      %v2344 = vadd.f32 %v2343, %v2337
      %v2345 = vadd.f32 %v2344, %v2338
      %v2346 = vadd.f32 %v2345, %v2339
      %v2347 = vadd.f32 %v2346, %v2340
      %v2348 = vadd.f32 %v2347, %v2341
      %v2349 = vrot.slane %v2348, 4
      %v2350 = vadd.f32 %v2348, %v2349
      %v2351 = vrot.slane %v2350, 2
      %v2352 = vadd.f32 %v2350, %v2351
      %v2353 = vrot.slane %v2352, 1
      %v2354 = vadd.f32 %v2352, %v2353
      %vm2355 = vcmask 1040384
      %v2356 = vsel %vm2355, %v2333, %v2354
      %2357 = vst [vmem:[%s212] sm:$0x3] %v2356
      %s2358 = smul.u32 8, %s20
      %p2359 = scmp.lt.s32.totalorder %s19, 1
      %s2360 = scalar_select %p2359, %s19, 1
      %p2361 = scmp.lt.s32.totalorder %s2358, 7
      %s2362 = scalar_select %p2361, %s2358, 7
      %s2363 = smul.addr %s2360, 8
      %s2364 = sadd.s32 %s2362, %s2363
      %s2365 = smul.addr %s2364, 4
      %s2366 = scalar_lea.vmem %s2, %s2365
      %p2367 = scmp.lt.s32.totalorder %s19, 1
      %s2368 = scalar_select %p2367, %s19, 1
      %p2369 = scmp.lt.s32.totalorder %s20, 0
      %s2370 = scalar_select %p2369, %s20, 0
      %s2371 = sadd.s32 %s2370, %s2368
      %s2372 = smul.addr %s2371, 2
      %s2373 = scalar_lea.vmem %s3, %s2372
      // Predicated region
      $region29: #{res_block.10} parent=27 // pred_check
        %p2374 = pneg %p94
      $region30: #{res_block.10} parent=27 // pred_check_branch
        %2376 = sbr.rel (%p2374) target = $region32
      $region31: #{res_block.10} parent=27 // pred_region
        %s2377 = smul.u32 8, %s20
      $region32: #{res_block.10} parent=27 // pred_fallthru
        _
      // Predicated region
      $region33: #{res_block.10} parent=27 // pred_check
        %p2378 = pneg %p122
      $region34: #{res_block.10} parent=27 // pred_check_branch
        %2380 = sbr.rel (%p2378) target = $region36
      $region35: #{res_block.10} parent=27 // pred_region
        _
      $region36: #{res_block.10} parent=27 // pred_fallthru
        _
    $region28: #{res_block.10} parent=5 // pred_fallthru
      _
    %p2381 = scmp.le.s32.totalorder 2, %s10
    // Predicated region
    $region37: #{res_block.10} parent=5 // pred_check
      %p2382 = pneg %p2381
    $region38: #{res_block.10} parent=5 // pred_check_branch
      %2384 = sbr.rel (%p2382) target = $region40
    $region39: #{res_block.10} parent=5 // pred_region
      %s2385 = ssub.s32 %s10, 2
      // Predicated region
      $region41: #{res_block.10} parent=39 // pred_check
        %p2386 = pneg %p100
      $region42: #{res_block.10} parent=39 // pred_check_branch
        %2388 = sbr.rel (%p2386) target = $region44
      $region43: #{res_block.10} parent=39 // pred_region
        %s2389 = smul.u32 8, %s22
        %p2390 = scmp.lt.s32.totalorder %s21, 1
        %s2391 = scalar_select %p2390, %s21, 1
        %p2392 = scmp.lt.s32.totalorder %s2389, 7
        %s2393 = scalar_select %p2392, %s2389, 7
        %s2394 = smul.addr %s2391, 8
        %s2395 = sadd.s32 %s2393, %s2394
        %s2396 = smul.addr %s2395, 4
        %s2397 = scalar_lea.vmem %s2, %s2396
      $region44: #{res_block.10} parent=39 // pred_fallthru
        _
      // Predicated region
      $region45: #{res_block.10} parent=39 // pred_check
        %p2398 = pneg %p128
      $region46: #{res_block.10} parent=39 // pred_check_branch
        %2400 = sbr.rel (%p2398) target = $region48
      $region47: #{res_block.10} parent=39 // pred_region
        %p2401 = scmp.lt.s32.totalorder %s21, 1
        %s2402 = scalar_select %p2401, %s21, 1
        %p2403 = scmp.lt.s32.totalorder %s22, 0
        %s2404 = scalar_select %p2403, %s22, 0
        %s2405 = sadd.s32 %s2404, %s2402
        %s2406 = smul.addr %s2405, 2
        %s2407 = scalar_lea.vmem %s3, %s2406
      $region48: #{res_block.10} parent=39 // pred_fallthru
        _
    $region40: #{res_block.10} parent=5 // pred_fallthru
      _
  $region6: #{res_block.10} parent=0 // loop_footer
    %s14 = sadd.s32 1, %s10
  $region7: #{res_block.10} parent=0 // loop_footer_branch
    %9 = sbr.rel target = $region3
  $region8: #{res_block.10} parent=0 // loop_exit
    _

</llo_original>
